<compile_context>
chip_gen: v5e
topology: v5e:2x2
jax: 0.10.0
libtpu: 0.0.40
codegen_flags: <defaults>
</compile_context>

<pallas_src>
import jax
import jax.numpy as jnp
from jax import lax
from jax.experimental import pallas as pl
from jax.experimental.pallas import tpu as pltpu


def _make_resblock3d_kernel(D, H, W, cpad, cout, pad):
    """Kernel closure for fixed spatial / (padded) channel sizes."""
    DHW = D * H * W
    HW = H * W
    # The lane halo must cover the largest tap offset |dd|*H*W + |dh|*W + |dw|.
    assert pad >= HW + W + 1, "halo too small for a 3x3x3 tap"

    pow2 = (W & (W - 1) == 0) and (H & (H - 1) == 0)
    log_w = W.bit_length() - 1
    log_hw = HW.bit_length() - 1

    def kernel(x_ref, w1_ref, b1_ref, w2_ref, wsc_ref, bout_ref, out_ref,
               xh_ref, im_ref):
        f32 = jnp.float32

        # (d, h, w) index of every flattened spatial position, materialised at
        # (cpad, DHW) so the tap masks below need no sublane broadcast.
        lane = lax.broadcasted_iota(jnp.int32, (cpad, DHW), 1)
        if pow2:
            w_idx = lane & (W - 1)
            h_idx = (lane >> log_w) & (H - 1)
            d_idx = lane >> log_hw
        else:
            w_idx = lane % W
            h_idx = (lane // W) % H
            d_idx = lane // HW

        # Zero the two lane halos once; the middle window is always overwritten.
        # The halo only guarantees slices stay in-bounds -- every out-of-range
        # neighbour contribution is zeroed by the d/h/w masks below.
        xh_ref[:, :pad] = jnp.zeros((cpad, pad), f32)
        xh_ref[:, pad + DHW:] = jnp.zeros((cpad, pad), f32)

        def im2col(a):
            """Stage the 27 shifted+masked taps of `a` into im_ref (27*cpad, DHW)."""
            rows = a.shape[0]
            xh_ref[:rows, pad:pad + DHW] = a
            # Rows >= `rows` keep earlier (finite) contents; their weight columns
            # are exactly zero, so they contribute nothing to the matmul.
            t = 0
            for dd in (-1, 0, 1):
                for dh in (-1, 0, 1):
                    for dw in (-1, 0, 1):
                        s = dd * HW + dh * W + dw
                        piece = xh_ref[:, pad + s: pad + s + DHW]  # static lane shift
                        conds = []
                        if dd == -1:
                            conds.append(d_idx >= 1)
                        if dd == 1:
                            conds.append(d_idx <= D - 2)
                        if dh == -1:
                            conds.append(h_idx >= 1)
                        if dh == 1:
                            conds.append(h_idx <= H - 2)
                        if dw == -1:
                            conds.append(w_idx >= 1)
                        if dw == 1:
                            conds.append(w_idx <= W - 2)
                        if conds:
                            m = conds[0]
                            for c in conds[1:]:
                                m = jnp.logical_and(m, c)
                            piece = jnp.where(m, piece, 0.0)
                        # 8-sublane-aligned store: row offset t*cpad, size cpad.
                        im_ref[t * cpad:(t + 1) * cpad, :] = piece
                        t += 1

        x = x_ref[0].astype(f32)                              # (cpad, DHW)

        # ---- conv1 (BN1 scale folded into w1) + bn1 bias + ReLU: one MXU matmul
        im2col(x)
        h1 = jnp.dot(w1_ref[...], im_ref[...], preferred_element_type=f32)
        h1 = jnp.maximum(h1 + b1_ref[...], 0.0)               # (cout, DHW)

        # ---- conv2 (BN2 scale folded into w2): one MXU matmul
        im2col(h1)
        h2 = jnp.dot(w2_ref[...], im_ref[...], preferred_element_type=f32)

        # ---- 1x1x1 shortcut (shortcut-BN scale folded into wsc): tiny MXU matmul
        sc = jnp.dot(wsc_ref[...], x, preferred_element_type=f32)

        # ---- residual add + merged (bn2 + shortcut-bn) bias + ReLU; lane-dense store
        out_ref[0] = jnp.maximum(h2 + sc + bout_ref[...], 0.0).astype(out_ref.dtype)

    return kernel


def resblock3d_pallas(x_ncdhw, w1, s1, b1, w2, s2, b2, wsc=None, ssc=None, bsc=None):
    """ResBlock3D forward (eval-mode BN folded into scale/bias, stride=1).

    x_ncdhw : (N, Cin, D, H, W)      -- PyTorch NCDHW layout
    w1      : (Cout, Cin, 3, 3, 3)   -- PyTorch conv weight layout
    w2      : (Cout, Cout, 3, 3, 3)
    wsc     : (Cout, Cin, 1, 1, 1) or None (identity shortcut, requires Cin == Cout)
    s*, b*  : folded per-channel BatchNorm scale / bias, shape (Cout,)
    returns : (N, Cout, D, H, W)
    """
    N, Cin, D, H, W = x_ncdhw.shape
    Cout = w1.shape[0]
    DHW = D * H * W

    # Channels padded to a sublane multiple so every im2col tap block is 8-aligned.
    CPAD = ((max(Cin, Cout) + 7) // 8) * 8

    # Fold BN scales into conv weights; merge the two post-conv2 biases.
    w1f = w1 * s1[:, None, None, None, None]
    w2f = w2 * s2[:, None, None, None, None]
    if wsc is None:
        assert Cin == Cout, "identity shortcut requires Cin == Cout"
        wsc_mat = jnp.eye(Cout, dtype=jnp.float32)
        b_out = b2
    else:
        wsc_mat = (wsc * ssc[:, None, None, None, None]).reshape(Cout, Cin)
        b_out = b2 + bsc

    def pack_taps(wf, cin_actual):
        # (Cout, cin, 3,3,3) -> (Cout, 27*CPAD), column index = tap*CPAD + ci,
        # tap = kd*9 + kh*3 + kw (matches the kernel's (dd, dh, dw) loop order).
        w_t = jnp.transpose(wf, (2, 3, 4, 0, 1)).reshape(27, Cout, cin_actual)
        w_t = jnp.pad(w_t, ((0, 0), (0, 0), (0, CPAD - cin_actual)))
        return jnp.transpose(w_t, (1, 0, 2)).reshape(Cout, 27 * CPAD).astype(jnp.float32)

    w1k = pack_taps(w1f, Cin)
    w2k = pack_taps(w2f, Cout)
    wsck = jnp.pad(wsc_mat.astype(jnp.float32), ((0, 0), (0, CPAD - wsc_mat.shape[1])))
    b1k = b1.reshape(Cout, 1).astype(jnp.float32)
    boutk = b_out.reshape(Cout, 1).astype(jnp.float32)

    # Spatial dims flattened onto the lane axis; channels padded to CPAD with zeros.
    x_flat = x_ncdhw.reshape(N, Cin, DHW)
    if CPAD > Cin:
        x_flat = jnp.pad(x_flat, ((0, 0), (0, CPAD - Cin), (0, 0)))

    # Lane halo: 128-aligned (clean middle store) and >= max tap offset H*W + W + 1.
    PAD = pl.cdiv(H * W + W + 1, 128) * 128

    kernel = _make_resblock3d_kernel(D, H, W, CPAD, Cout, PAD)

    out_flat = pl.pallas_call(
        kernel,
        out_shape=jax.ShapeDtypeStruct((N, Cout, DHW), x_ncdhw.dtype),
        grid=(N,),
        in_specs=[
            pl.BlockSpec((1, CPAD, DHW), lambda n: (n, 0, 0)),
            pl.BlockSpec((Cout, 27 * CPAD), lambda n: (0, 0)),
            pl.BlockSpec((Cout, 1), lambda n: (0, 0)),
            pl.BlockSpec((Cout, 27 * CPAD), lambda n: (0, 0)),
            pl.BlockSpec((Cout, CPAD), lambda n: (0, 0)),
            pl.BlockSpec((Cout, 1), lambda n: (0, 0)),
        ],
        out_specs=pl.BlockSpec((1, Cout, DHW), lambda n: (n, 0, 0)),
        scratch_shapes=[
            pltpu.VMEM((CPAD, PAD + DHW + PAD), jnp.float32),   # haloed activation
            pltpu.VMEM((27 * CPAD, DHW), jnp.float32),          # im2col stack
        ],
        compiler_params=pltpu.CompilerParams(
            dimension_semantics=("parallel",)),   # batch shards across v7x's 2 TCs
    )(x_flat, w1k, b1k, w2k, wsck, boutk)

    return out_flat.reshape(N, Cout, D, H, W)


# ------------------------- pure-JAX reference -------------------------
def _conv3d_ncdhw(x, w, pad):
    return lax.conv_general_dilated(
        x, w, window_strides=(1, 1, 1), padding=((pad, pad),) * 3,
        dimension_numbers=("NCDHW", "OIDHW", "NCDHW"),
        precision=lax.Precision.HIGHEST)


def resblock3d_ref(x, w1, s1, b1, w2, s2, b2, wsc, ssc, bsc):
    def bn(h, s, b):
        return h * s.reshape(1, -1, 1, 1, 1) + b.reshape(1, -1, 1, 1, 1)

    h = jax.nn.relu(bn(_conv3d_ncdhw(x, w1, 1), s1, b1))
    h = bn(_conv3d_ncdhw(h, w2, 1), s2, b2)
    sc = bn(_conv3d_ncdhw(x, wsc, 0), ssc, bsc)
    return jax.nn.relu(h + sc)


def _fold_bn(gamma, beta, mean, var, eps=1e-5):
    scale = gamma / jnp.sqrt(var + eps)
    bias = beta - mean * scale
    return scale, bias


if __name__ == "__main__":
    # ResBlock3D(in_channels=4, out_channels=8, stride=1) on a (2, 4, 8, 8, 8) input.
    N, Cin, Cout, D, H, W = 2, 4, 8, 8, 8, 8

    key = jax.random.PRNGKey(0)
    ks = jax.random.split(key, 16)

    x = jax.random.normal(ks[0], (N, Cin, D, H, W), jnp.float32)          # NCDHW
    w1 = jax.random.normal(ks[1], (Cout, Cin, 3, 3, 3), jnp.float32) * 0.1
    w2 = jax.random.normal(ks[2], (Cout, Cout, 3, 3, 3), jnp.float32) * 0.1
    wsc = jax.random.normal(ks[3], (Cout, Cin, 1, 1, 1), jnp.float32) * 0.1

    def bn_params(kg, kb, km, kv, c):
        gamma = 1.0 + 0.1 * jax.random.normal(kg, (c,), jnp.float32)
        beta = 0.1 * jax.random.normal(kb, (c,), jnp.float32)
        mean = 0.1 * jax.random.normal(km, (c,), jnp.float32)
        var = jax.random.uniform(kv, (c,), jnp.float32, 0.5, 1.5)
        return _fold_bn(gamma, beta, mean, var)

    s1, b1 = bn_params(ks[4], ks[5], ks[6], ks[7], Cout)
    s2, b2 = bn_params(ks[8], ks[9], ks[10], ks[11], Cout)
    ssc, bsc = bn_params(ks[12], ks[13], ks[14], ks[15], Cout)

    out = resblock3d_pallas(x, w1, s1, b1, w2, s2, b2, wsc, ssc, bsc)
    out = jax.block_until_ready(out)

    ref = resblock3d_ref(x, w1, s1, b1, w2, s2, b2, wsc, ssc, bsc)
    assert out.shape == (N, Cout, D, H, W)
    err = float(jnp.max(jnp.abs(out - ref)))
    assert jnp.allclose(out, ref, atol=5e-3, rtol=5e-3), f"max abs err {err}"
    print("KERNEL_OK")
</pallas_src>

<mosaic_0001>
module attributes {stable_mosaic.version = 11 : i64} {
  func.func @kernel(%arg0: i32, %arg1: memref<1x8x512xf32, #tpu.memory_space<vmem>>, %arg2: memref<8x216xf32, #tpu.memory_space<vmem>>, %arg3: memref<8x1xf32, #tpu.memory_space<vmem>>, %arg4: memref<8x216xf32, #tpu.memory_space<vmem>>, %arg5: memref<8x8xf32, #tpu.memory_space<vmem>>, %arg6: memref<8x1xf32, #tpu.memory_space<vmem>>, %arg7: memref<1x8x512xf32, #tpu.memory_space<vmem>>, %arg8: memref<8x768xf32, #tpu.memory_space<vmem>>, %arg9: memref<216x512xf32, #tpu.memory_space<vmem>>) attributes {dimension_semantics = [#tpu.dimension_semantics<parallel>], iteration_bounds = array<i64: 2>, scalar_prefetch = 0 : i64, scratch_operands = 2 : i64, tpu.core_type = #tpu.core_type<tc>, window_params = [{transform_indices = @transform_0, window_bounds = array<i64: 1, 8, 512>}, {pipeline_mode = #tpu.pipeline_mode<synchronous>, transform_indices = @transform_1, window_bounds = array<i64: 8, 216>}, {pipeline_mode = #tpu.pipeline_mode<synchronous>, transform_indices = @transform_2, window_bounds = array<i64: 8, 1>}, {pipeline_mode = #tpu.pipeline_mode<synchronous>, transform_indices = @transform_3, window_bounds = array<i64: 8, 216>}, {pipeline_mode = #tpu.pipeline_mode<synchronous>, transform_indices = @transform_4, window_bounds = array<i64: 8, 8>}, {pipeline_mode = #tpu.pipeline_mode<synchronous>, transform_indices = @transform_5, window_bounds = array<i64: 8, 1>}, {transform_indices = @transform_6, window_bounds = array<i64: 1, 8, 512>}]} {
    %0 = tpu.iota {dimensions = array<i32: 1>} : vector<8x512xi32>
    %c7_i32 = arith.constant 7 : i32
    %1 = vector.broadcast %c7_i32 : i32 to vector<8x512xi32>
    %2 = arith.andi %0, %1 : vector<8x512xi32>
    %c3_i32 = arith.constant 3 : i32
    %3 = vector.broadcast %c3_i32 : i32 to vector<8x512xi32>
    %4 = arith.shrsi %0, %3 : vector<8x512xi32>
    %c7_i32_0 = arith.constant 7 : i32
    %5 = vector.broadcast %c7_i32_0 : i32 to vector<8x512xi32>
    %6 = arith.andi %4, %5 : vector<8x512xi32>
    %c6_i32 = arith.constant 6 : i32
    %7 = vector.broadcast %c6_i32 : i32 to vector<8x512xi32>
    %8 = arith.shrsi %0, %7 : vector<8x512xi32>
    %cst = arith.constant 0.000000e+00 : f32
    %9 = vector.broadcast %cst : f32 to vector<8x128xf32>
    %c0 = arith.constant 0 : index
    %c0_1 = arith.constant 0 : index
    %10 = vector.load %arg8[%c0, %c0_1] : memref<8x768xf32, #tpu.memory_space<vmem>>, vector<8x128xf32>
    tpu.vector_store %arg8[%c0, %c0_1], %9 {strides = array<i32>} : memref<8x768xf32, #tpu.memory_space<vmem>>, vector<8x128xf32>,
    %cst_2 = arith.constant 0.000000e+00 : f32
    %11 = vector.broadcast %cst_2 : f32 to vector<8x128xf32>
    %c0_3 = arith.constant 0 : index
    %c640 = arith.constant 640 : index
    %12 = vector.load %arg8[%c0_3, %c640] : memref<8x768xf32, #tpu.memory_space<vmem>>, vector<8x128xf32>
    tpu.vector_store %arg8[%c0_3, %c640], %11 {strides = array<i32>} : memref<8x768xf32, #tpu.memory_space<vmem>>, vector<8x128xf32>,
    %c0_4 = arith.constant 0 : index
    %c0_5 = arith.constant 0 : index
    %c0_6 = arith.constant 0 : index
    %13 = vector.load %arg1[%c0_4, %c0_5, %c0_6] : memref<1x8x512xf32, #tpu.memory_space<vmem>>, vector<1x8x512xf32>
    %14 = vector.shape_cast %13 : vector<1x8x512xf32> to vector<8x512xf32>
    %c0_7 = arith.constant 0 : index
    %c128 = arith.constant 128 : index
    %15 = vector.load %arg8[%c0_7, %c128] : memref<8x768xf32, #tpu.memory_space<vmem>>, vector<8x512xf32>
    tpu.vector_store %arg8[%c0_7, %c128], %14 {strides = array<i32>} : memref<8x768xf32, #tpu.memory_space<vmem>>, vector<8x512xf32>,
    %c0_8 = arith.constant 0 : index
    %c55 = arith.constant 55 : index
    %16 = vector.load %arg8[%c0_8, %c55] : memref<8x768xf32, #tpu.memory_space<vmem>>, vector<8x512xf32>
    %c1_i32 = arith.constant 1 : i32
    %17 = vector.broadcast %c1_i32 : i32 to vector<8x512xi32>
    %18 = arith.cmpi sge, %8, %17 : vector<8x512xi32>
    %c1_i32_9 = arith.constant 1 : i32
    %19 = vector.broadcast %c1_i32_9 : i32 to vector<8x512xi32>
    %20 = arith.cmpi sge, %6, %19 : vector<8x512xi32>
    %c1_i32_10 = arith.constant 1 : i32
    %21 = vector.broadcast %c1_i32_10 : i32 to vector<8x512xi32>
    %22 = arith.cmpi sge, %2, %21 : vector<8x512xi32>
    %23 = arith.andi %18, %20 : vector<8x512xi1>
    %24 = arith.andi %23, %22 : vector<8x512xi1>
    %cst_11 = arith.constant 0.000000e+00 : f32
    %25 = vector.broadcast %cst_11 : f32 to vector<8x512xf32>
    %26 = arith.select %24, %16, %25 : vector<8x512xi1>, vector<8x512xf32>
    %c0_12 = arith.constant 0 : index
    %c0_13 = arith.constant 0 : index
    %27 = vector.load %arg9[%c0_12, %c0_13] : memref<216x512xf32, #tpu.memory_space<vmem>>, vector<8x512xf32>
    tpu.vector_store %arg9[%c0_12, %c0_13], %26 {strides = array<i32>} : memref<216x512xf32, #tpu.memory_space<vmem>>, vector<8x512xf32>,
    %c0_14 = arith.constant 0 : index
    %c56 = arith.constant 56 : index
    %28 = vector.load %arg8[%c0_14, %c56] : memref<8x768xf32, #tpu.memory_space<vmem>>, vector<8x512xf32>
    %c1_i32_15 = arith.constant 1 : i32
    %29 = vector.broadcast %c1_i32_15 : i32 to vector<8x512xi32>
    %30 = arith.cmpi sge, %8, %29 : vector<8x512xi32>
    %c1_i32_16 = arith.constant 1 : i32
    %31 = vector.broadcast %c1_i32_16 : i32 to vector<8x512xi32>
    %32 = arith.cmpi sge, %6, %31 : vector<8x512xi32>
    %33 = arith.andi %30, %32 : vector<8x512xi1>
    %cst_17 = arith.constant 0.000000e+00 : f32
    %34 = vector.broadcast %cst_17 : f32 to vector<8x512xf32>
    %35 = arith.select %33, %28, %34 : vector<8x512xi1>, vector<8x512xf32>
    %c8 = arith.constant 8 : index
    %c0_18 = arith.constant 0 : index
    %36 = vector.load %arg9[%c8, %c0_18] : memref<216x512xf32, #tpu.memory_space<vmem>>, vector<8x512xf32>
    tpu.vector_store %arg9[%c8, %c0_18], %35 {strides = array<i32>} : memref<216x512xf32, #tpu.memory_space<vmem>>, vector<8x512xf32>,
    %c0_19 = arith.constant 0 : index
    %c57 = arith.constant 57 : index
    %37 = vector.load %arg8[%c0_19, %c57] : memref<8x768xf32, #tpu.memory_space<vmem>>, vector<8x512xf32>
    %c1_i32_20 = arith.constant 1 : i32
    %38 = vector.broadcast %c1_i32_20 : i32 to vector<8x512xi32>
    %39 = arith.cmpi sge, %8, %38 : vector<8x512xi32>
    %c1_i32_21 = arith.constant 1 : i32
    %40 = vector.broadcast %c1_i32_21 : i32 to vector<8x512xi32>
    %41 = arith.cmpi sge, %6, %40 : vector<8x512xi32>
    %c6_i32_22 = arith.constant 6 : i32
    %42 = vector.broadcast %c6_i32_22 : i32 to vector<8x512xi32>
    %43 = arith.cmpi sle, %2, %42 : vector<8x512xi32>
    %44 = arith.andi %39, %41 : vector<8x512xi1>
    %45 = arith.andi %44, %43 : vector<8x512xi1>
    %cst_23 = arith.constant 0.000000e+00 : f32
    %46 = vector.broadcast %cst_23 : f32 to vector<8x512xf32>
    %47 = arith.select %45, %37, %46 : vector<8x512xi1>, vector<8x512xf32>
    %c16 = arith.constant 16 : index
    %c0_24 = arith.constant 0 : index
    %48 = vector.load %arg9[%c16, %c0_24] : memref<216x512xf32, #tpu.memory_space<vmem>>, vector<8x512xf32>
    tpu.vector_store %arg9[%c16, %c0_24], %47 {strides = array<i32>} : memref<216x512xf32, #tpu.memory_space<vmem>>, vector<8x512xf32>,
    %c0_25 = arith.constant 0 : index
    %c63 = arith.constant 63 : index
    %49 = vector.load %arg8[%c0_25, %c63] : memref<8x768xf32, #tpu.memory_space<vmem>>, vector<8x512xf32>
    %c1_i32_26 = arith.constant 1 : i32
    %50 = vector.broadcast %c1_i32_26 : i32 to vector<8x512xi32>
    %51 = arith.cmpi sge, %8, %50 : vector<8x512xi32>
    %c1_i32_27 = arith.constant 1 : i32
    %52 = vector.broadcast %c1_i32_27 : i32 to vector<8x512xi32>
    %53 = arith.cmpi sge, %2, %52 : vector<8x512xi32>
    %54 = arith.andi %51, %53 : vector<8x512xi1>
    %cst_28 = arith.constant 0.000000e+00 : f32
    %55 = vector.broadcast %cst_28 : f32 to vector<8x512xf32>
    %56 = arith.select %54, %49, %55 : vector<8x512xi1>, vector<8x512xf32>
    %c24 = arith.constant 24 : index
    %c0_29 = arith.constant 0 : index
    %57 = vector.load %arg9[%c24, %c0_29] : memref<216x512xf32, #tpu.memory_space<vmem>>, vector<8x512xf32>
    tpu.vector_store %arg9[%c24, %c0_29], %56 {strides = array<i32>} : memref<216x512xf32, #tpu.memory_space<vmem>>, vector<8x512xf32>,
    %c0_30 = arith.constant 0 : index
    %c64 = arith.constant 64 : index
    %58 = vector.load %arg8[%c0_30, %c64] : memref<8x768xf32, #tpu.memory_space<vmem>>, vector<8x512xf32>
    %c1_i32_31 = arith.constant 1 : i32
    %59 = vector.broadcast %c1_i32_31 : i32 to vector<8x512xi32>
    %60 = arith.cmpi sge, %8, %59 : vector<8x512xi32>
    %cst_32 = arith.constant 0.000000e+00 : f32
    %61 = vector.broadcast %cst_32 : f32 to vector<8x512xf32>
    %62 = arith.select %60, %58, %61 : vector<8x512xi1>, vector<8x512xf32>
    %c32 = arith.constant 32 : index
    %c0_33 = arith.constant 0 : index
    %63 = vector.load %arg9[%c32, %c0_33] : memref<216x512xf32, #tpu.memory_space<vmem>>, vector<8x512xf32>
    tpu.vector_store %arg9[%c32, %c0_33], %62 {strides = array<i32>} : memref<216x512xf32, #tpu.memory_space<vmem>>, vector<8x512xf32>,
    %c0_34 = arith.constant 0 : index
    %c65 = arith.constant 65 : index
    %64 = vector.load %arg8[%c0_34, %c65] : memref<8x768xf32, #tpu.memory_space<vmem>>, vector<8x512xf32>
    %c1_i32_35 = arith.constant 1 : i32
    %65 = vector.broadcast %c1_i32_35 : i32 to vector<8x512xi32>
    %66 = arith.cmpi sge, %8, %65 : vector<8x512xi32>
    %c6_i32_36 = arith.constant 6 : i32
    %67 = vector.broadcast %c6_i32_36 : i32 to vector<8x512xi32>
    %68 = arith.cmpi sle, %2, %67 : vector<8x512xi32>
    %69 = arith.andi %66, %68 : vector<8x512xi1>
    %cst_37 = arith.constant 0.000000e+00 : f32
    %70 = vector.broadcast %cst_37 : f32 to vector<8x512xf32>
    %71 = arith.select %69, %64, %70 : vector<8x512xi1>, vector<8x512xf32>
    %c40 = arith.constant 40 : index
    %c0_38 = arith.constant 0 : index
    %72 = vector.load %arg9[%c40, %c0_38] : memref<216x512xf32, #tpu.memory_space<vmem>>, vector<8x512xf32>
    tpu.vector_store %arg9[%c40, %c0_38], %71 {strides = array<i32>} : memref<216x512xf32, #tpu.memory_space<vmem>>, vector<8x512xf32>,
    %c0_39 = arith.constant 0 : index
    %c71 = arith.constant 71 : index
    %73 = vector.load %arg8[%c0_39, %c71] : memref<8x768xf32, #tpu.memory_space<vmem>>, vector<8x512xf32>
    %c1_i32_40 = arith.constant 1 : i32
    %74 = vector.broadcast %c1_i32_40 : i32 to vector<8x512xi32>
    %75 = arith.cmpi sge, %8, %74 : vector<8x512xi32>
    %c6_i32_41 = arith.constant 6 : i32
    %76 = vector.broadcast %c6_i32_41 : i32 to vector<8x512xi32>
    %77 = arith.cmpi sle, %6, %76 : vector<8x512xi32>
    %c1_i32_42 = arith.constant 1 : i32
    %78 = vector.broadcast %c1_i32_42 : i32 to vector<8x512xi32>
    %79 = arith.cmpi sge, %2, %78 : vector<8x512xi32>
    %80 = arith.andi %75, %77 : vector<8x512xi1>
    %81 = arith.andi %80, %79 : vector<8x512xi1>
    %cst_43 = arith.constant 0.000000e+00 : f32
    %82 = vector.broadcast %cst_43 : f32 to vector<8x512xf32>
    %83 = arith.select %81, %73, %82 : vector<8x512xi1>, vector<8x512xf32>
    %c48 = arith.constant 48 : index
    %c0_44 = arith.constant 0 : index
    %84 = vector.load %arg9[%c48, %c0_44] : memref<216x512xf32, #tpu.memory_space<vmem>>, vector<8x512xf32>
    tpu.vector_store %arg9[%c48, %c0_44], %83 {strides = array<i32>} : memref<216x512xf32, #tpu.memory_space<vmem>>, vector<8x512xf32>,
    %c0_45 = arith.constant 0 : index
    %c72 = arith.constant 72 : index
    %85 = vector.load %arg8[%c0_45, %c72] : memref<8x768xf32, #tpu.memory_space<vmem>>, vector<8x512xf32>
    %c1_i32_46 = arith.constant 1 : i32
    %86 = vector.broadcast %c1_i32_46 : i32 to vector<8x512xi32>
    %87 = arith.cmpi sge, %8, %86 : vector<8x512xi32>
    %c6_i32_47 = arith.constant 6 : i32
    %88 = vector.broadcast %c6_i32_47 : i32 to vector<8x512xi32>
    %89 = arith.cmpi sle, %6, %88 : vector<8x512xi32>
    %90 = arith.andi %87, %89 : vector<8x512xi1>
    %cst_48 = arith.constant 0.000000e+00 : f32
    %91 = vector.broadcast %cst_48 : f32 to vector<8x512xf32>
    %92 = arith.select %90, %85, %91 : vector<8x512xi1>, vector<8x512xf32>
    %c56_49 = arith.constant 56 : index
    %c0_50 = arith.constant 0 : index
    %93 = vector.load %arg9[%c56_49, %c0_50] : memref<216x512xf32, #tpu.memory_space<vmem>>, vector<8x512xf32>
    tpu.vector_store %arg9[%c56_49, %c0_50], %92 {strides = array<i32>} : memref<216x512xf32, #tpu.memory_space<vmem>>, vector<8x512xf32>,
    %c0_51 = arith.constant 0 : index
    %c73 = arith.constant 73 : index
    %94 = vector.load %arg8[%c0_51, %c73] : memref<8x768xf32, #tpu.memory_space<vmem>>, vector<8x512xf32>
    %c1_i32_52 = arith.constant 1 : i32
    %95 = vector.broadcast %c1_i32_52 : i32 to vector<8x512xi32>
    %96 = arith.cmpi sge, %8, %95 : vector<8x512xi32>
    %c6_i32_53 = arith.constant 6 : i32
    %97 = vector.broadcast %c6_i32_53 : i32 to vector<8x512xi32>
    %98 = arith.cmpi sle, %6, %97 : vector<8x512xi32>
    %c6_i32_54 = arith.constant 6 : i32
    %99 = vector.broadcast %c6_i32_54 : i32 to vector<8x512xi32>
    %100 = arith.cmpi sle, %2, %99 : vector<8x512xi32>
    %101 = arith.andi %96, %98 : vector<8x512xi1>
    %102 = arith.andi %101, %100 : vector<8x512xi1>
    %cst_55 = arith.constant 0.000000e+00 : f32
    %103 = vector.broadcast %cst_55 : f32 to vector<8x512xf32>
    %104 = arith.select %102, %94, %103 : vector<8x512xi1>, vector<8x512xf32>
    %c64_56 = arith.constant 64 : index
    %c0_57 = arith.constant 0 : index
    %105 = vector.load %arg9[%c64_56, %c0_57] : memref<216x512xf32, #tpu.memory_space<vmem>>, vector<8x512xf32>
    tpu.vector_store %arg9[%c64_56, %c0_57], %104 {strides = array<i32>} : memref<216x512xf32, #tpu.memory_space<vmem>>, vector<8x512xf32>,
    %c0_58 = arith.constant 0 : index
    %c119 = arith.constant 119 : index
    %106 = vector.load %arg8[%c0_58, %c119] : memref<8x768xf32, #tpu.memory_space<vmem>>, vector<8x512xf32>
    %c1_i32_59 = arith.constant 1 : i32
    %107 = vector.broadcast %c1_i32_59 : i32 to vector<8x512xi32>
    %108 = arith.cmpi sge, %6, %107 : vector<8x512xi32>
    %c1_i32_60 = arith.constant 1 : i32
    %109 = vector.broadcast %c1_i32_60 : i32 to vector<8x512xi32>
    %110 = arith.cmpi sge, %2, %109 : vector<8x512xi32>
    %111 = arith.andi %108, %110 : vector<8x512xi1>
    %cst_61 = arith.constant 0.000000e+00 : f32
    %112 = vector.broadcast %cst_61 : f32 to vector<8x512xf32>
    %113 = arith.select %111, %106, %112 : vector<8x512xi1>, vector<8x512xf32>
    %c72_62 = arith.constant 72 : index
    %c0_63 = arith.constant 0 : index
    %114 = vector.load %arg9[%c72_62, %c0_63] : memref<216x512xf32, #tpu.memory_space<vmem>>, vector<8x512xf32>
    tpu.vector_store %arg9[%c72_62, %c0_63], %113 {strides = array<i32>} : memref<216x512xf32, #tpu.memory_space<vmem>>, vector<8x512xf32>,
    %c0_64 = arith.constant 0 : index
    %c120 = arith.constant 120 : index
    %115 = vector.load %arg8[%c0_64, %c120] : memref<8x768xf32, #tpu.memory_space<vmem>>, vector<8x512xf32>
    %c1_i32_65 = arith.constant 1 : i32
    %116 = vector.broadcast %c1_i32_65 : i32 to vector<8x512xi32>
    %117 = arith.cmpi sge, %6, %116 : vector<8x512xi32>
    %cst_66 = arith.constant 0.000000e+00 : f32
    %118 = vector.broadcast %cst_66 : f32 to vector<8x512xf32>
    %119 = arith.select %117, %115, %118 : vector<8x512xi1>, vector<8x512xf32>
    %c80 = arith.constant 80 : index
    %c0_67 = arith.constant 0 : index
    %120 = vector.load %arg9[%c80, %c0_67] : memref<216x512xf32, #tpu.memory_space<vmem>>, vector<8x512xf32>
    tpu.vector_store %arg9[%c80, %c0_67], %119 {strides = array<i32>} : memref<216x512xf32, #tpu.memory_space<vmem>>, vector<8x512xf32>,
    %c0_68 = arith.constant 0 : index
    %c121 = arith.constant 121 : index
    %121 = vector.load %arg8[%c0_68, %c121] : memref<8x768xf32, #tpu.memory_space<vmem>>, vector<8x512xf32>
    %c1_i32_69 = arith.constant 1 : i32
    %122 = vector.broadcast %c1_i32_69 : i32 to vector<8x512xi32>
    %123 = arith.cmpi sge, %6, %122 : vector<8x512xi32>
    %c6_i32_70 = arith.constant 6 : i32
    %124 = vector.broadcast %c6_i32_70 : i32 to vector<8x512xi32>
    %125 = arith.cmpi sle, %2, %124 : vector<8x512xi32>
    %126 = arith.andi %123, %125 : vector<8x512xi1>
    %cst_71 = arith.constant 0.000000e+00 : f32
    %127 = vector.broadcast %cst_71 : f32 to vector<8x512xf32>
    %128 = arith.select %126, %121, %127 : vector<8x512xi1>, vector<8x512xf32>
    %c88 = arith.constant 88 : index
    %c0_72 = arith.constant 0 : index
    %129 = vector.load %arg9[%c88, %c0_72] : memref<216x512xf32, #tpu.memory_space<vmem>>, vector<8x512xf32>
    tpu.vector_store %arg9[%c88, %c0_72], %128 {strides = array<i32>} : memref<216x512xf32, #tpu.memory_space<vmem>>, vector<8x512xf32>,
    %c0_73 = arith.constant 0 : index
    %c127 = arith.constant 127 : index
    %130 = vector.load %arg8[%c0_73, %c127] : memref<8x768xf32, #tpu.memory_space<vmem>>, vector<8x512xf32>
    %c1_i32_74 = arith.constant 1 : i32
    %131 = vector.broadcast %c1_i32_74 : i32 to vector<8x512xi32>
    %132 = arith.cmpi sge, %2, %131 : vector<8x512xi32>
    %cst_75 = arith.constant 0.000000e+00 : f32
    %133 = vector.broadcast %cst_75 : f32 to vector<8x512xf32>
    %134 = arith.select %132, %130, %133 : vector<8x512xi1>, vector<8x512xf32>
    %c96 = arith.constant 96 : index
    %c0_76 = arith.constant 0 : index
    %135 = vector.load %arg9[%c96, %c0_76] : memref<216x512xf32, #tpu.memory_space<vmem>>, vector<8x512xf32>
    tpu.vector_store %arg9[%c96, %c0_76], %134 {strides = array<i32>} : memref<216x512xf32, #tpu.memory_space<vmem>>, vector<8x512xf32>,
    %c0_77 = arith.constant 0 : index
    %c128_78 = arith.constant 128 : index
    %136 = vector.load %arg8[%c0_77, %c128_78] : memref<8x768xf32, #tpu.memory_space<vmem>>, vector<8x512xf32>
    %c104 = arith.constant 104 : index
    %c0_79 = arith.constant 0 : index
    %137 = vector.load %arg9[%c104, %c0_79] : memref<216x512xf32, #tpu.memory_space<vmem>>, vector<8x512xf32>
    tpu.vector_store %arg9[%c104, %c0_79], %136 {strides = array<i32>} : memref<216x512xf32, #tpu.memory_space<vmem>>, vector<8x512xf32>,
    %c0_80 = arith.constant 0 : index
    %c129 = arith.constant 129 : index
    %138 = vector.load %arg8[%c0_80, %c129] : memref<8x768xf32, #tpu.memory_space<vmem>>, vector<8x512xf32>
    %c6_i32_81 = arith.constant 6 : i32
    %139 = vector.broadcast %c6_i32_81 : i32 to vector<8x512xi32>
    %140 = arith.cmpi sle, %2, %139 : vector<8x512xi32>
    %cst_82 = arith.constant 0.000000e+00 : f32
    %141 = vector.broadcast %cst_82 : f32 to vector<8x512xf32>
    %142 = arith.select %140, %138, %141 : vector<8x512xi1>, vector<8x512xf32>
    %c112 = arith.constant 112 : index
    %c0_83 = arith.constant 0 : index
    %143 = vector.load %arg9[%c112, %c0_83] : memref<216x512xf32, #tpu.memory_space<vmem>>, vector<8x512xf32>
    tpu.vector_store %arg9[%c112, %c0_83], %142 {strides = array<i32>} : memref<216x512xf32, #tpu.memory_space<vmem>>, vector<8x512xf32>,
    %c0_84 = arith.constant 0 : index
    %c135 = arith.constant 135 : index
    %144 = vector.load %arg8[%c0_84, %c135] : memref<8x768xf32, #tpu.memory_space<vmem>>, vector<8x512xf32>
    %c6_i32_85 = arith.constant 6 : i32
    %145 = vector.broadcast %c6_i32_85 : i32 to vector<8x512xi32>
    %146 = arith.cmpi sle, %6, %145 : vector<8x512xi32>
    %c1_i32_86 = arith.constant 1 : i32
    %147 = vector.broadcast %c1_i32_86 : i32 to vector<8x512xi32>
    %148 = arith.cmpi sge, %2, %147 : vector<8x512xi32>
    %149 = arith.andi %146, %148 : vector<8x512xi1>
    %cst_87 = arith.constant 0.000000e+00 : f32
    %150 = vector.broadcast %cst_87 : f32 to vector<8x512xf32>
    %151 = arith.select %149, %144, %150 : vector<8x512xi1>, vector<8x512xf32>
    %c120_88 = arith.constant 120 : index
    %c0_89 = arith.constant 0 : index
    %152 = vector.load %arg9[%c120_88, %c0_89] : memref<216x512xf32, #tpu.memory_space<vmem>>, vector<8x512xf32>
    tpu.vector_store %arg9[%c120_88, %c0_89], %151 {strides = array<i32>} : memref<216x512xf32, #tpu.memory_space<vmem>>, vector<8x512xf32>,
    %c0_90 = arith.constant 0 : index
    %c136 = arith.constant 136 : index
    %153 = vector.load %arg8[%c0_90, %c136] : memref<8x768xf32, #tpu.memory_space<vmem>>, vector<8x512xf32>
    %c6_i32_91 = arith.constant 6 : i32
    %154 = vector.broadcast %c6_i32_91 : i32 to vector<8x512xi32>
    %155 = arith.cmpi sle, %6, %154 : vector<8x512xi32>
    %cst_92 = arith.constant 0.000000e+00 : f32
    %156 = vector.broadcast %cst_92 : f32 to vector<8x512xf32>
    %157 = arith.select %155, %153, %156 : vector<8x512xi1>, vector<8x512xf32>
    %c128_93 = arith.constant 128 : index
    %c0_94 = arith.constant 0 : index
    %158 = vector.load %arg9[%c128_93, %c0_94] : memref<216x512xf32, #tpu.memory_space<vmem>>, vector<8x512xf32>
    tpu.vector_store %arg9[%c128_93, %c0_94], %157 {strides = array<i32>} : memref<216x512xf32, #tpu.memory_space<vmem>>, vector<8x512xf32>,
    %c0_95 = arith.constant 0 : index
    %c137 = arith.constant 137 : index
    %159 = vector.load %arg8[%c0_95, %c137] : memref<8x768xf32, #tpu.memory_space<vmem>>, vector<8x512xf32>
    %c6_i32_96 = arith.constant 6 : i32
    %160 = vector.broadcast %c6_i32_96 : i32 to vector<8x512xi32>
    %161 = arith.cmpi sle, %6, %160 : vector<8x512xi32>
    %c6_i32_97 = arith.constant 6 : i32
    %162 = vector.broadcast %c6_i32_97 : i32 to vector<8x512xi32>
    %163 = arith.cmpi sle, %2, %162 : vector<8x512xi32>
    %164 = arith.andi %161, %163 : vector<8x512xi1>
    %cst_98 = arith.constant 0.000000e+00 : f32
    %165 = vector.broadcast %cst_98 : f32 to vector<8x512xf32>
    %166 = arith.select %164, %159, %165 : vector<8x512xi1>, vector<8x512xf32>
    %c136_99 = arith.constant 136 : index
    %c0_100 = arith.constant 0 : index
    %167 = vector.load %arg9[%c136_99, %c0_100] : memref<216x512xf32, #tpu.memory_space<vmem>>, vector<8x512xf32>
    tpu.vector_store %arg9[%c136_99, %c0_100], %166 {strides = array<i32>} : memref<216x512xf32, #tpu.memory_space<vmem>>, vector<8x512xf32>,
    %c0_101 = arith.constant 0 : index
    %c183 = arith.constant 183 : index
    %168 = vector.load %arg8[%c0_101, %c183] : memref<8x768xf32, #tpu.memory_space<vmem>>, vector<8x512xf32>
    %c6_i32_102 = arith.constant 6 : i32
    %169 = vector.broadcast %c6_i32_102 : i32 to vector<8x512xi32>
    %170 = arith.cmpi sle, %8, %169 : vector<8x512xi32>
    %c1_i32_103 = arith.constant 1 : i32
    %171 = vector.broadcast %c1_i32_103 : i32 to vector<8x512xi32>
    %172 = arith.cmpi sge, %6, %171 : vector<8x512xi32>
    %c1_i32_104 = arith.constant 1 : i32
    %173 = vector.broadcast %c1_i32_104 : i32 to vector<8x512xi32>
    %174 = arith.cmpi sge, %2, %173 : vector<8x512xi32>
    %175 = arith.andi %170, %172 : vector<8x512xi1>
    %176 = arith.andi %175, %174 : vector<8x512xi1>
    %cst_105 = arith.constant 0.000000e+00 : f32
    %177 = vector.broadcast %cst_105 : f32 to vector<8x512xf32>
    %178 = arith.select %176, %168, %177 : vector<8x512xi1>, vector<8x512xf32>
    %c144 = arith.constant 144 : index
    %c0_106 = arith.constant 0 : index
    %179 = vector.load %arg9[%c144, %c0_106] : memref<216x512xf32, #tpu.memory_space<vmem>>, vector<8x512xf32>
    tpu.vector_store %arg9[%c144, %c0_106], %178 {strides = array<i32>} : memref<216x512xf32, #tpu.memory_space<vmem>>, vector<8x512xf32>,
    %c0_107 = arith.constant 0 : index
    %c184 = arith.constant 184 : index
    %180 = vector.load %arg8[%c0_107, %c184] : memref<8x768xf32, #tpu.memory_space<vmem>>, vector<8x512xf32>
    %c6_i32_108 = arith.constant 6 : i32
    %181 = vector.broadcast %c6_i32_108 : i32 to vector<8x512xi32>
    %182 = arith.cmpi sle, %8, %181 : vector<8x512xi32>
    %c1_i32_109 = arith.constant 1 : i32
    %183 = vector.broadcast %c1_i32_109 : i32 to vector<8x512xi32>
    %184 = arith.cmpi sge, %6, %183 : vector<8x512xi32>
    %185 = arith.andi %182, %184 : vector<8x512xi1>
    %cst_110 = arith.constant 0.000000e+00 : f32
    %186 = vector.broadcast %cst_110 : f32 to vector<8x512xf32>
    %187 = arith.select %185, %180, %186 : vector<8x512xi1>, vector<8x512xf32>
    %c152 = arith.constant 152 : index
    %c0_111 = arith.constant 0 : index
    %188 = vector.load %arg9[%c152, %c0_111] : memref<216x512xf32, #tpu.memory_space<vmem>>, vector<8x512xf32>
    tpu.vector_store %arg9[%c152, %c0_111], %187 {strides = array<i32>} : memref<216x512xf32, #tpu.memory_space<vmem>>, vector<8x512xf32>,
    %c0_112 = arith.constant 0 : index
    %c185 = arith.constant 185 : index
    %189 = vector.load %arg8[%c0_112, %c185] : memref<8x768xf32, #tpu.memory_space<vmem>>, vector<8x512xf32>
    %c6_i32_113 = arith.constant 6 : i32
    %190 = vector.broadcast %c6_i32_113 : i32 to vector<8x512xi32>
    %191 = arith.cmpi sle, %8, %190 : vector<8x512xi32>
    %c1_i32_114 = arith.constant 1 : i32
    %192 = vector.broadcast %c1_i32_114 : i32 to vector<8x512xi32>
    %193 = arith.cmpi sge, %6, %192 : vector<8x512xi32>
    %c6_i32_115 = arith.constant 6 : i32
    %194 = vector.broadcast %c6_i32_115 : i32 to vector<8x512xi32>
    %195 = arith.cmpi sle, %2, %194 : vector<8x512xi32>
    %196 = arith.andi %191, %193 : vector<8x512xi1>
    %197 = arith.andi %196, %195 : vector<8x512xi1>
    %cst_116 = arith.constant 0.000000e+00 : f32
    %198 = vector.broadcast %cst_116 : f32 to vector<8x512xf32>
    %199 = arith.select %197, %189, %198 : vector<8x512xi1>, vector<8x512xf32>
    %c160 = arith.constant 160 : index
    %c0_117 = arith.constant 0 : index
    %200 = vector.load %arg9[%c160, %c0_117] : memref<216x512xf32, #tpu.memory_space<vmem>>, vector<8x512xf32>
    tpu.vector_store %arg9[%c160, %c0_117], %199 {strides = array<i32>} : memref<216x512xf32, #tpu.memory_space<vmem>>, vector<8x512xf32>,
    %c0_118 = arith.constant 0 : index
    %c191 = arith.constant 191 : index
    %201 = vector.load %arg8[%c0_118, %c191] : memref<8x768xf32, #tpu.memory_space<vmem>>, vector<8x512xf32>
    %c6_i32_119 = arith.constant 6 : i32
    %202 = vector.broadcast %c6_i32_119 : i32 to vector<8x512xi32>
    %203 = arith.cmpi sle, %8, %202 : vector<8x512xi32>
    %c1_i32_120 = arith.constant 1 : i32
    %204 = vector.broadcast %c1_i32_120 : i32 to vector<8x512xi32>
    %205 = arith.cmpi sge, %2, %204 : vector<8x512xi32>
    %206 = arith.andi %203, %205 : vector<8x512xi1>
    %cst_121 = arith.constant 0.000000e+00 : f32
    %207 = vector.broadcast %cst_121 : f32 to vector<8x512xf32>
    %208 = arith.select %206, %201, %207 : vector<8x512xi1>, vector<8x512xf32>
    %c168 = arith.constant 168 : index
    %c0_122 = arith.constant 0 : index
    %209 = vector.load %arg9[%c168, %c0_122] : memref<216x512xf32, #tpu.memory_space<vmem>>, vector<8x512xf32>
    tpu.vector_store %arg9[%c168, %c0_122], %208 {strides = array<i32>} : memref<216x512xf32, #tpu.memory_space<vmem>>, vector<8x512xf32>,
    %c0_123 = arith.constant 0 : index
    %c192 = arith.constant 192 : index
    %210 = vector.load %arg8[%c0_123, %c192] : memref<8x768xf32, #tpu.memory_space<vmem>>, vector<8x512xf32>
    %c6_i32_124 = arith.constant 6 : i32
    %211 = vector.broadcast %c6_i32_124 : i32 to vector<8x512xi32>
    %212 = arith.cmpi sle, %8, %211 : vector<8x512xi32>
    %cst_125 = arith.constant 0.000000e+00 : f32
    %213 = vector.broadcast %cst_125 : f32 to vector<8x512xf32>
    %214 = arith.select %212, %210, %213 : vector<8x512xi1>, vector<8x512xf32>
    %c176 = arith.constant 176 : index
    %c0_126 = arith.constant 0 : index
    %215 = vector.load %arg9[%c176, %c0_126] : memref<216x512xf32, #tpu.memory_space<vmem>>, vector<8x512xf32>
    tpu.vector_store %arg9[%c176, %c0_126], %214 {strides = array<i32>} : memref<216x512xf32, #tpu.memory_space<vmem>>, vector<8x512xf32>,
    %c0_127 = arith.constant 0 : index
    %c193 = arith.constant 193 : index
    %216 = vector.load %arg8[%c0_127, %c193] : memref<8x768xf32, #tpu.memory_space<vmem>>, vector<8x512xf32>
    %c6_i32_128 = arith.constant 6 : i32
    %217 = vector.broadcast %c6_i32_128 : i32 to vector<8x512xi32>
    %218 = arith.cmpi sle, %8, %217 : vector<8x512xi32>
    %c6_i32_129 = arith.constant 6 : i32
    %219 = vector.broadcast %c6_i32_129 : i32 to vector<8x512xi32>
    %220 = arith.cmpi sle, %2, %219 : vector<8x512xi32>
    %221 = arith.andi %218, %220 : vector<8x512xi1>
    %cst_130 = arith.constant 0.000000e+00 : f32
    %222 = vector.broadcast %cst_130 : f32 to vector<8x512xf32>
    %223 = arith.select %221, %216, %222 : vector<8x512xi1>, vector<8x512xf32>
    %c184_131 = arith.constant 184 : index
    %c0_132 = arith.constant 0 : index
    %224 = vector.load %arg9[%c184_131, %c0_132] : memref<216x512xf32, #tpu.memory_space<vmem>>, vector<8x512xf32>
    tpu.vector_store %arg9[%c184_131, %c0_132], %223 {strides = array<i32>} : memref<216x512xf32, #tpu.memory_space<vmem>>, vector<8x512xf32>,
    %c0_133 = arith.constant 0 : index
    %c199 = arith.constant 199 : index
    %225 = vector.load %arg8[%c0_133, %c199] : memref<8x768xf32, #tpu.memory_space<vmem>>, vector<8x512xf32>
    %c6_i32_134 = arith.constant 6 : i32
    %226 = vector.broadcast %c6_i32_134 : i32 to vector<8x512xi32>
    %227 = arith.cmpi sle, %8, %226 : vector<8x512xi32>
    %c6_i32_135 = arith.constant 6 : i32
    %228 = vector.broadcast %c6_i32_135 : i32 to vector<8x512xi32>
    %229 = arith.cmpi sle, %6, %228 : vector<8x512xi32>
    %c1_i32_136 = arith.constant 1 : i32
    %230 = vector.broadcast %c1_i32_136 : i32 to vector<8x512xi32>
    %231 = arith.cmpi sge, %2, %230 : vector<8x512xi32>
    %232 = arith.andi %227, %229 : vector<8x512xi1>
    %233 = arith.andi %232, %231 : vector<8x512xi1>
    %cst_137 = arith.constant 0.000000e+00 : f32
    %234 = vector.broadcast %cst_137 : f32 to vector<8x512xf32>
    %235 = arith.select %233, %225, %234 : vector<8x512xi1>, vector<8x512xf32>
    %c192_138 = arith.constant 192 : index
    %c0_139 = arith.constant 0 : index
    %236 = vector.load %arg9[%c192_138, %c0_139] : memref<216x512xf32, #tpu.memory_space<vmem>>, vector<8x512xf32>
    tpu.vector_store %arg9[%c192_138, %c0_139], %235 {strides = array<i32>} : memref<216x512xf32, #tpu.memory_space<vmem>>, vector<8x512xf32>,
    %c0_140 = arith.constant 0 : index
    %c200 = arith.constant 200 : index
    %237 = vector.load %arg8[%c0_140, %c200] : memref<8x768xf32, #tpu.memory_space<vmem>>, vector<8x512xf32>
    %c6_i32_141 = arith.constant 6 : i32
    %238 = vector.broadcast %c6_i32_141 : i32 to vector<8x512xi32>
    %239 = arith.cmpi sle, %8, %238 : vector<8x512xi32>
    %c6_i32_142 = arith.constant 6 : i32
    %240 = vector.broadcast %c6_i32_142 : i32 to vector<8x512xi32>
    %241 = arith.cmpi sle, %6, %240 : vector<8x512xi32>
    %242 = arith.andi %239, %241 : vector<8x512xi1>
    %cst_143 = arith.constant 0.000000e+00 : f32
    %243 = vector.broadcast %cst_143 : f32 to vector<8x512xf32>
    %244 = arith.select %242, %237, %243 : vector<8x512xi1>, vector<8x512xf32>
    %c200_144 = arith.constant 200 : index
    %c0_145 = arith.constant 0 : index
    %245 = vector.load %arg9[%c200_144, %c0_145] : memref<216x512xf32, #tpu.memory_space<vmem>>, vector<8x512xf32>
    tpu.vector_store %arg9[%c200_144, %c0_145], %244 {strides = array<i32>} : memref<216x512xf32, #tpu.memory_space<vmem>>, vector<8x512xf32>,
    %c0_146 = arith.constant 0 : index
    %c201 = arith.constant 201 : index
    %246 = vector.load %arg8[%c0_146, %c201] : memref<8x768xf32, #tpu.memory_space<vmem>>, vector<8x512xf32>
    %c6_i32_147 = arith.constant 6 : i32
    %247 = vector.broadcast %c6_i32_147 : i32 to vector<8x512xi32>
    %248 = arith.cmpi sle, %8, %247 : vector<8x512xi32>
    %c6_i32_148 = arith.constant 6 : i32
    %249 = vector.broadcast %c6_i32_148 : i32 to vector<8x512xi32>
    %250 = arith.cmpi sle, %6, %249 : vector<8x512xi32>
    %c6_i32_149 = arith.constant 6 : i32
    %251 = vector.broadcast %c6_i32_149 : i32 to vector<8x512xi32>
    %252 = arith.cmpi sle, %2, %251 : vector<8x512xi32>
    %253 = arith.andi %248, %250 : vector<8x512xi1>
    %254 = arith.andi %253, %252 : vector<8x512xi1>
    %cst_150 = arith.constant 0.000000e+00 : f32
    %255 = vector.broadcast %cst_150 : f32 to vector<8x512xf32>
    %256 = arith.select %254, %246, %255 : vector<8x512xi1>, vector<8x512xf32>
    %c208 = arith.constant 208 : index
    %c0_151 = arith.constant 0 : index
    %257 = vector.load %arg9[%c208, %c0_151] : memref<216x512xf32, #tpu.memory_space<vmem>>, vector<8x512xf32>
    tpu.vector_store %arg9[%c208, %c0_151], %256 {strides = array<i32>} : memref<216x512xf32, #tpu.memory_space<vmem>>, vector<8x512xf32>,
    %c0_152 = arith.constant 0 : index
    %c0_153 = arith.constant 0 : index
    %258 = vector.load %arg2[%c0_152, %c0_153] : memref<8x216xf32, #tpu.memory_space<vmem>>, vector<8x216xf32>
    %c0_154 = arith.constant 0 : index
    %c0_155 = arith.constant 0 : index
    %259 = vector.load %arg9[%c0_154, %c0_155] : memref<216x512xf32, #tpu.memory_space<vmem>>, vector<216x512xf32>
    %cst_156 = arith.constant dense<0.000000e+00> : vector<8x512xf32>
    %260 = tpu.matmul %258, %259, %cst_156 {dimension_numbers = #tpu.dot_dimension_numbers<[1], [0], [0], [1], [0, 0, 1, 1], [], []>} : vector<8x216xf32>, vector<216x512xf32>, vector<8x512xf32> -> vector<8x512xf32>
    %c0_157 = arith.constant 0 : index
    %c0_158 = arith.constant 0 : index
    %261 = vector.load %arg3[%c0_157, %c0_158] : memref<8x1xf32, #tpu.memory_space<vmem>>, vector<8x1xf32>
    %262 = vector.broadcast %261 : vector<8x1xf32> to vector<8x512xf32>
    %263 = arith.addf %260, %262 : vector<8x512xf32>
    %cst_159 = arith.constant 0.000000e+00 : f32
    %264 = vector.broadcast %cst_159 : f32 to vector<8x512xf32>
    %265 = arith.maximumf %263, %264 : vector<8x512xf32>
    %c0_160 = arith.constant 0 : index
    %c128_161 = arith.constant 128 : index
    %266 = vector.load %arg8[%c0_160, %c128_161] : memref<8x768xf32, #tpu.memory_space<vmem>>, vector<8x512xf32>
    tpu.vector_store %arg8[%c0_160, %c128_161], %265 {strides = array<i32>} : memref<8x768xf32, #tpu.memory_space<vmem>>, vector<8x512xf32>,
    %c0_162 = arith.constant 0 : index
    %c55_163 = arith.constant 55 : index
    %267 = vector.load %arg8[%c0_162, %c55_163] : memref<8x768xf32, #tpu.memory_space<vmem>>, vector<8x512xf32>
    %c1_i32_164 = arith.constant 1 : i32
    %268 = vector.broadcast %c1_i32_164 : i32 to vector<8x512xi32>
    %269 = arith.cmpi sge, %8, %268 : vector<8x512xi32>
    %c1_i32_165 = arith.constant 1 : i32
    %270 = vector.broadcast %c1_i32_165 : i32 to vector<8x512xi32>
    %271 = arith.cmpi sge, %6, %270 : vector<8x512xi32>
    %c1_i32_166 = arith.constant 1 : i32
    %272 = vector.broadcast %c1_i32_166 : i32 to vector<8x512xi32>
    %273 = arith.cmpi sge, %2, %272 : vector<8x512xi32>
    %274 = arith.andi %269, %271 : vector<8x512xi1>
    %275 = arith.andi %274, %273 : vector<8x512xi1>
    %cst_167 = arith.constant 0.000000e+00 : f32
    %276 = vector.broadcast %cst_167 : f32 to vector<8x512xf32>
    %277 = arith.select %275, %267, %276 : vector<8x512xi1>, vector<8x512xf32>
    %c0_168 = arith.constant 0 : index
    %c0_169 = arith.constant 0 : index
    %278 = vector.load %arg9[%c0_168, %c0_169] : memref<216x512xf32, #tpu.memory_space<vmem>>, vector<8x512xf32>
    tpu.vector_store %arg9[%c0_168, %c0_169], %277 {strides = array<i32>} : memref<216x512xf32, #tpu.memory_space<vmem>>, vector<8x512xf32>,
    %c0_170 = arith.constant 0 : index
    %c56_171 = arith.constant 56 : index
    %279 = vector.load %arg8[%c0_170, %c56_171] : memref<8x768xf32, #tpu.memory_space<vmem>>, vector<8x512xf32>
    %c1_i32_172 = arith.constant 1 : i32
    %280 = vector.broadcast %c1_i32_172 : i32 to vector<8x512xi32>
    %281 = arith.cmpi sge, %8, %280 : vector<8x512xi32>
    %c1_i32_173 = arith.constant 1 : i32
    %282 = vector.broadcast %c1_i32_173 : i32 to vector<8x512xi32>
    %283 = arith.cmpi sge, %6, %282 : vector<8x512xi32>
    %284 = arith.andi %281, %283 : vector<8x512xi1>
    %cst_174 = arith.constant 0.000000e+00 : f32
    %285 = vector.broadcast %cst_174 : f32 to vector<8x512xf32>
    %286 = arith.select %284, %279, %285 : vector<8x512xi1>, vector<8x512xf32>
    %c8_175 = arith.constant 8 : index
    %c0_176 = arith.constant 0 : index
    %287 = vector.load %arg9[%c8_175, %c0_176] : memref<216x512xf32, #tpu.memory_space<vmem>>, vector<8x512xf32>
    tpu.vector_store %arg9[%c8_175, %c0_176], %286 {strides = array<i32>} : memref<216x512xf32, #tpu.memory_space<vmem>>, vector<8x512xf32>,
    %c0_177 = arith.constant 0 : index
    %c57_178 = arith.constant 57 : index
    %288 = vector.load %arg8[%c0_177, %c57_178] : memref<8x768xf32, #tpu.memory_space<vmem>>, vector<8x512xf32>
    %c1_i32_179 = arith.constant 1 : i32
    %289 = vector.broadcast %c1_i32_179 : i32 to vector<8x512xi32>
    %290 = arith.cmpi sge, %8, %289 : vector<8x512xi32>
    %c1_i32_180 = arith.constant 1 : i32
    %291 = vector.broadcast %c1_i32_180 : i32 to vector<8x512xi32>
    %292 = arith.cmpi sge, %6, %291 : vector<8x512xi32>
    %c6_i32_181 = arith.constant 6 : i32
    %293 = vector.broadcast %c6_i32_181 : i32 to vector<8x512xi32>
    %294 = arith.cmpi sle, %2, %293 : vector<8x512xi32>
    %295 = arith.andi %290, %292 : vector<8x512xi1>
    %296 = arith.andi %295, %294 : vector<8x512xi1>
    %cst_182 = arith.constant 0.000000e+00 : f32
    %297 = vector.broadcast %cst_182 : f32 to vector<8x512xf32>
    %298 = arith.select %296, %288, %297 : vector<8x512xi1>, vector<8x512xf32>
    %c16_183 = arith.constant 16 : index
    %c0_184 = arith.constant 0 : index
    %299 = vector.load %arg9[%c16_183, %c0_184] : memref<216x512xf32, #tpu.memory_space<vmem>>, vector<8x512xf32>
    tpu.vector_store %arg9[%c16_183, %c0_184], %298 {strides = array<i32>} : memref<216x512xf32, #tpu.memory_space<vmem>>, vector<8x512xf32>,
    %c0_185 = arith.constant 0 : index
    %c63_186 = arith.constant 63 : index
    %300 = vector.load %arg8[%c0_185, %c63_186] : memref<8x768xf32, #tpu.memory_space<vmem>>, vector<8x512xf32>
    %c1_i32_187 = arith.constant 1 : i32
    %301 = vector.broadcast %c1_i32_187 : i32 to vector<8x512xi32>
    %302 = arith.cmpi sge, %8, %301 : vector<8x512xi32>
    %c1_i32_188 = arith.constant 1 : i32
    %303 = vector.broadcast %c1_i32_188 : i32 to vector<8x512xi32>
    %304 = arith.cmpi sge, %2, %303 : vector<8x512xi32>
    %305 = arith.andi %302, %304 : vector<8x512xi1>
    %cst_189 = arith.constant 0.000000e+00 : f32
    %306 = vector.broadcast %cst_189 : f32 to vector<8x512xf32>
    %307 = arith.select %305, %300, %306 : vector<8x512xi1>, vector<8x512xf32>
    %c24_190 = arith.constant 24 : index
    %c0_191 = arith.constant 0 : index
    %308 = vector.load %arg9[%c24_190, %c0_191] : memref<216x512xf32, #tpu.memory_space<vmem>>, vector<8x512xf32>
    tpu.vector_store %arg9[%c24_190, %c0_191], %307 {strides = array<i32>} : memref<216x512xf32, #tpu.memory_space<vmem>>, vector<8x512xf32>,
    %c0_192 = arith.constant 0 : index
    %c64_193 = arith.constant 64 : index
    %309 = vector.load %arg8[%c0_192, %c64_193] : memref<8x768xf32, #tpu.memory_space<vmem>>, vector<8x512xf32>
    %c1_i32_194 = arith.constant 1 : i32
    %310 = vector.broadcast %c1_i32_194 : i32 to vector<8x512xi32>
    %311 = arith.cmpi sge, %8, %310 : vector<8x512xi32>
    %cst_195 = arith.constant 0.000000e+00 : f32
    %312 = vector.broadcast %cst_195 : f32 to vector<8x512xf32>
    %313 = arith.select %311, %309, %312 : vector<8x512xi1>, vector<8x512xf32>
    %c32_196 = arith.constant 32 : index
    %c0_197 = arith.constant 0 : index
    %314 = vector.load %arg9[%c32_196, %c0_197] : memref<216x512xf32, #tpu.memory_space<vmem>>, vector<8x512xf32>
    tpu.vector_store %arg9[%c32_196, %c0_197], %313 {strides = array<i32>} : memref<216x512xf32, #tpu.memory_space<vmem>>, vector<8x512xf32>,
    %c0_198 = arith.constant 0 : index
    %c65_199 = arith.constant 65 : index
    %315 = vector.load %arg8[%c0_198, %c65_199] : memref<8x768xf32, #tpu.memory_space<vmem>>, vector<8x512xf32>
    %c1_i32_200 = arith.constant 1 : i32
    %316 = vector.broadcast %c1_i32_200 : i32 to vector<8x512xi32>
    %317 = arith.cmpi sge, %8, %316 : vector<8x512xi32>
    %c6_i32_201 = arith.constant 6 : i32
    %318 = vector.broadcast %c6_i32_201 : i32 to vector<8x512xi32>
    %319 = arith.cmpi sle, %2, %318 : vector<8x512xi32>
    %320 = arith.andi %317, %319 : vector<8x512xi1>
    %cst_202 = arith.constant 0.000000e+00 : f32
    %321 = vector.broadcast %cst_202 : f32 to vector<8x512xf32>
    %322 = arith.select %320, %315, %321 : vector<8x512xi1>, vector<8x512xf32>
    %c40_203 = arith.constant 40 : index
    %c0_204 = arith.constant 0 : index
    %323 = vector.load %arg9[%c40_203, %c0_204] : memref<216x512xf32, #tpu.memory_space<vmem>>, vector<8x512xf32>
    tpu.vector_store %arg9[%c40_203, %c0_204], %322 {strides = array<i32>} : memref<216x512xf32, #tpu.memory_space<vmem>>, vector<8x512xf32>,
    %c0_205 = arith.constant 0 : index
    %c71_206 = arith.constant 71 : index
    %324 = vector.load %arg8[%c0_205, %c71_206] : memref<8x768xf32, #tpu.memory_space<vmem>>, vector<8x512xf32>
    %c1_i32_207 = arith.constant 1 : i32
    %325 = vector.broadcast %c1_i32_207 : i32 to vector<8x512xi32>
    %326 = arith.cmpi sge, %8, %325 : vector<8x512xi32>
    %c6_i32_208 = arith.constant 6 : i32
    %327 = vector.broadcast %c6_i32_208 : i32 to vector<8x512xi32>
    %328 = arith.cmpi sle, %6, %327 : vector<8x512xi32>
    %c1_i32_209 = arith.constant 1 : i32
    %329 = vector.broadcast %c1_i32_209 : i32 to vector<8x512xi32>
    %330 = arith.cmpi sge, %2, %329 : vector<8x512xi32>
    %331 = arith.andi %326, %328 : vector<8x512xi1>
    %332 = arith.andi %331, %330 : vector<8x512xi1>
    %cst_210 = arith.constant 0.000000e+00 : f32
    %333 = vector.broadcast %cst_210 : f32 to vector<8x512xf32>
    %334 = arith.select %332, %324, %333 : vector<8x512xi1>, vector<8x512xf32>
    %c48_211 = arith.constant 48 : index
    %c0_212 = arith.constant 0 : index
    %335 = vector.load %arg9[%c48_211, %c0_212] : memref<216x512xf32, #tpu.memory_space<vmem>>, vector<8x512xf32>
    tpu.vector_store %arg9[%c48_211, %c0_212], %334 {strides = array<i32>} : memref<216x512xf32, #tpu.memory_space<vmem>>, vector<8x512xf32>,
    %c0_213 = arith.constant 0 : index
    %c72_214 = arith.constant 72 : index
    %336 = vector.load %arg8[%c0_213, %c72_214] : memref<8x768xf32, #tpu.memory_space<vmem>>, vector<8x512xf32>
    %c1_i32_215 = arith.constant 1 : i32
    %337 = vector.broadcast %c1_i32_215 : i32 to vector<8x512xi32>
    %338 = arith.cmpi sge, %8, %337 : vector<8x512xi32>
    %c6_i32_216 = arith.constant 6 : i32
    %339 = vector.broadcast %c6_i32_216 : i32 to vector<8x512xi32>
    %340 = arith.cmpi sle, %6, %339 : vector<8x512xi32>
    %341 = arith.andi %338, %340 : vector<8x512xi1>
    %cst_217 = arith.constant 0.000000e+00 : f32
    %342 = vector.broadcast %cst_217 : f32 to vector<8x512xf32>
    %343 = arith.select %341, %336, %342 : vector<8x512xi1>, vector<8x512xf32>
    %c56_218 = arith.constant 56 : index
    %c0_219 = arith.constant 0 : index
    %344 = vector.load %arg9[%c56_218, %c0_219] : memref<216x512xf32, #tpu.memory_space<vmem>>, vector<8x512xf32>
    tpu.vector_store %arg9[%c56_218, %c0_219], %343 {strides = array<i32>} : memref<216x512xf32, #tpu.memory_space<vmem>>, vector<8x512xf32>,
    %c0_220 = arith.constant 0 : index
    %c73_221 = arith.constant 73 : index
    %345 = vector.load %arg8[%c0_220, %c73_221] : memref<8x768xf32, #tpu.memory_space<vmem>>, vector<8x512xf32>
    %c1_i32_222 = arith.constant 1 : i32
    %346 = vector.broadcast %c1_i32_222 : i32 to vector<8x512xi32>
    %347 = arith.cmpi sge, %8, %346 : vector<8x512xi32>
    %c6_i32_223 = arith.constant 6 : i32
    %348 = vector.broadcast %c6_i32_223 : i32 to vector<8x512xi32>
    %349 = arith.cmpi sle, %6, %348 : vector<8x512xi32>
    %c6_i32_224 = arith.constant 6 : i32
    %350 = vector.broadcast %c6_i32_224 : i32 to vector<8x512xi32>
    %351 = arith.cmpi sle, %2, %350 : vector<8x512xi32>
    %352 = arith.andi %347, %349 : vector<8x512xi1>
    %353 = arith.andi %352, %351 : vector<8x512xi1>
    %cst_225 = arith.constant 0.000000e+00 : f32
    %354 = vector.broadcast %cst_225 : f32 to vector<8x512xf32>
    %355 = arith.select %353, %345, %354 : vector<8x512xi1>, vector<8x512xf32>
    %c64_226 = arith.constant 64 : index
    %c0_227 = arith.constant 0 : index
    %356 = vector.load %arg9[%c64_226, %c0_227] : memref<216x512xf32, #tpu.memory_space<vmem>>, vector<8x512xf32>
    tpu.vector_store %arg9[%c64_226, %c0_227], %355 {strides = array<i32>} : memref<216x512xf32, #tpu.memory_space<vmem>>, vector<8x512xf32>,
    %c0_228 = arith.constant 0 : index
    %c119_229 = arith.constant 119 : index
    %357 = vector.load %arg8[%c0_228, %c119_229] : memref<8x768xf32, #tpu.memory_space<vmem>>, vector<8x512xf32>
    %c1_i32_230 = arith.constant 1 : i32
    %358 = vector.broadcast %c1_i32_230 : i32 to vector<8x512xi32>
    %359 = arith.cmpi sge, %6, %358 : vector<8x512xi32>
    %c1_i32_231 = arith.constant 1 : i32
    %360 = vector.broadcast %c1_i32_231 : i32 to vector<8x512xi32>
    %361 = arith.cmpi sge, %2, %360 : vector<8x512xi32>
    %362 = arith.andi %359, %361 : vector<8x512xi1>
    %cst_232 = arith.constant 0.000000e+00 : f32
    %363 = vector.broadcast %cst_232 : f32 to vector<8x512xf32>
    %364 = arith.select %362, %357, %363 : vector<8x512xi1>, vector<8x512xf32>
    %c72_233 = arith.constant 72 : index
    %c0_234 = arith.constant 0 : index
    %365 = vector.load %arg9[%c72_233, %c0_234] : memref<216x512xf32, #tpu.memory_space<vmem>>, vector<8x512xf32>
    tpu.vector_store %arg9[%c72_233, %c0_234], %364 {strides = array<i32>} : memref<216x512xf32, #tpu.memory_space<vmem>>, vector<8x512xf32>,
    %c0_235 = arith.constant 0 : index
    %c120_236 = arith.constant 120 : index
    %366 = vector.load %arg8[%c0_235, %c120_236] : memref<8x768xf32, #tpu.memory_space<vmem>>, vector<8x512xf32>
    %c1_i32_237 = arith.constant 1 : i32
    %367 = vector.broadcast %c1_i32_237 : i32 to vector<8x512xi32>
    %368 = arith.cmpi sge, %6, %367 : vector<8x512xi32>
    %cst_238 = arith.constant 0.000000e+00 : f32
    %369 = vector.broadcast %cst_238 : f32 to vector<8x512xf32>
    %370 = arith.select %368, %366, %369 : vector<8x512xi1>, vector<8x512xf32>
    %c80_239 = arith.constant 80 : index
    %c0_240 = arith.constant 0 : index
    %371 = vector.load %arg9[%c80_239, %c0_240] : memref<216x512xf32, #tpu.memory_space<vmem>>, vector<8x512xf32>
    tpu.vector_store %arg9[%c80_239, %c0_240], %370 {strides = array<i32>} : memref<216x512xf32, #tpu.memory_space<vmem>>, vector<8x512xf32>,
    %c0_241 = arith.constant 0 : index
    %c121_242 = arith.constant 121 : index
    %372 = vector.load %arg8[%c0_241, %c121_242] : memref<8x768xf32, #tpu.memory_space<vmem>>, vector<8x512xf32>
    %c1_i32_243 = arith.constant 1 : i32
    %373 = vector.broadcast %c1_i32_243 : i32 to vector<8x512xi32>
    %374 = arith.cmpi sge, %6, %373 : vector<8x512xi32>
    %c6_i32_244 = arith.constant 6 : i32
    %375 = vector.broadcast %c6_i32_244 : i32 to vector<8x512xi32>
    %376 = arith.cmpi sle, %2, %375 : vector<8x512xi32>
    %377 = arith.andi %374, %376 : vector<8x512xi1>
    %cst_245 = arith.constant 0.000000e+00 : f32
    %378 = vector.broadcast %cst_245 : f32 to vector<8x512xf32>
    %379 = arith.select %377, %372, %378 : vector<8x512xi1>, vector<8x512xf32>
    %c88_246 = arith.constant 88 : index
    %c0_247 = arith.constant 0 : index
    %380 = vector.load %arg9[%c88_246, %c0_247] : memref<216x512xf32, #tpu.memory_space<vmem>>, vector<8x512xf32>
    tpu.vector_store %arg9[%c88_246, %c0_247], %379 {strides = array<i32>} : memref<216x512xf32, #tpu.memory_space<vmem>>, vector<8x512xf32>,
    %c0_248 = arith.constant 0 : index
    %c127_249 = arith.constant 127 : index
    %381 = vector.load %arg8[%c0_248, %c127_249] : memref<8x768xf32, #tpu.memory_space<vmem>>, vector<8x512xf32>
    %c1_i32_250 = arith.constant 1 : i32
    %382 = vector.broadcast %c1_i32_250 : i32 to vector<8x512xi32>
    %383 = arith.cmpi sge, %2, %382 : vector<8x512xi32>
    %cst_251 = arith.constant 0.000000e+00 : f32
    %384 = vector.broadcast %cst_251 : f32 to vector<8x512xf32>
    %385 = arith.select %383, %381, %384 : vector<8x512xi1>, vector<8x512xf32>
    %c96_252 = arith.constant 96 : index
    %c0_253 = arith.constant 0 : index
    %386 = vector.load %arg9[%c96_252, %c0_253] : memref<216x512xf32, #tpu.memory_space<vmem>>, vector<8x512xf32>
    tpu.vector_store %arg9[%c96_252, %c0_253], %385 {strides = array<i32>} : memref<216x512xf32, #tpu.memory_space<vmem>>, vector<8x512xf32>,
    %c0_254 = arith.constant 0 : index
    %c128_255 = arith.constant 128 : index
    %387 = vector.load %arg8[%c0_254, %c128_255] : memref<8x768xf32, #tpu.memory_space<vmem>>, vector<8x512xf32>
    %c104_256 = arith.constant 104 : index
    %c0_257 = arith.constant 0 : index
    %388 = vector.load %arg9[%c104_256, %c0_257] : memref<216x512xf32, #tpu.memory_space<vmem>>, vector<8x512xf32>
    tpu.vector_store %arg9[%c104_256, %c0_257], %387 {strides = array<i32>} : memref<216x512xf32, #tpu.memory_space<vmem>>, vector<8x512xf32>,
    %c0_258 = arith.constant 0 : index
    %c129_259 = arith.constant 129 : index
    %389 = vector.load %arg8[%c0_258, %c129_259] : memref<8x768xf32, #tpu.memory_space<vmem>>, vector<8x512xf32>
    %c6_i32_260 = arith.constant 6 : i32
    %390 = vector.broadcast %c6_i32_260 : i32 to vector<8x512xi32>
    %391 = arith.cmpi sle, %2, %390 : vector<8x512xi32>
    %cst_261 = arith.constant 0.000000e+00 : f32
    %392 = vector.broadcast %cst_261 : f32 to vector<8x512xf32>
    %393 = arith.select %391, %389, %392 : vector<8x512xi1>, vector<8x512xf32>
    %c112_262 = arith.constant 112 : index
    %c0_263 = arith.constant 0 : index
    %394 = vector.load %arg9[%c112_262, %c0_263] : memref<216x512xf32, #tpu.memory_space<vmem>>, vector<8x512xf32>
    tpu.vector_store %arg9[%c112_262, %c0_263], %393 {strides = array<i32>} : memref<216x512xf32, #tpu.memory_space<vmem>>, vector<8x512xf32>,
    %c0_264 = arith.constant 0 : index
    %c135_265 = arith.constant 135 : index
    %395 = vector.load %arg8[%c0_264, %c135_265] : memref<8x768xf32, #tpu.memory_space<vmem>>, vector<8x512xf32>
    %c6_i32_266 = arith.constant 6 : i32
    %396 = vector.broadcast %c6_i32_266 : i32 to vector<8x512xi32>
    %397 = arith.cmpi sle, %6, %396 : vector<8x512xi32>
    %c1_i32_267 = arith.constant 1 : i32
    %398 = vector.broadcast %c1_i32_267 : i32 to vector<8x512xi32>
    %399 = arith.cmpi sge, %2, %398 : vector<8x512xi32>
    %400 = arith.andi %397, %399 : vector<8x512xi1>
    %cst_268 = arith.constant 0.000000e+00 : f32
    %401 = vector.broadcast %cst_268 : f32 to vector<8x512xf32>
    %402 = arith.select %400, %395, %401 : vector<8x512xi1>, vector<8x512xf32>
    %c120_269 = arith.constant 120 : index
    %c0_270 = arith.constant 0 : index
    %403 = vector.load %arg9[%c120_269, %c0_270] : memref<216x512xf32, #tpu.memory_space<vmem>>, vector<8x512xf32>
    tpu.vector_store %arg9[%c120_269, %c0_270], %402 {strides = array<i32>} : memref<216x512xf32, #tpu.memory_space<vmem>>, vector<8x512xf32>,
    %c0_271 = arith.constant 0 : index
    %c136_272 = arith.constant 136 : index
    %404 = vector.load %arg8[%c0_271, %c136_272] : memref<8x768xf32, #tpu.memory_space<vmem>>, vector<8x512xf32>
    %c6_i32_273 = arith.constant 6 : i32
    %405 = vector.broadcast %c6_i32_273 : i32 to vector<8x512xi32>
    %406 = arith.cmpi sle, %6, %405 : vector<8x512xi32>
    %cst_274 = arith.constant 0.000000e+00 : f32
    %407 = vector.broadcast %cst_274 : f32 to vector<8x512xf32>
    %408 = arith.select %406, %404, %407 : vector<8x512xi1>, vector<8x512xf32>
    %c128_275 = arith.constant 128 : index
    %c0_276 = arith.constant 0 : index
    %409 = vector.load %arg9[%c128_275, %c0_276] : memref<216x512xf32, #tpu.memory_space<vmem>>, vector<8x512xf32>
    tpu.vector_store %arg9[%c128_275, %c0_276], %408 {strides = array<i32>} : memref<216x512xf32, #tpu.memory_space<vmem>>, vector<8x512xf32>,
    %c0_277 = arith.constant 0 : index
    %c137_278 = arith.constant 137 : index
    %410 = vector.load %arg8[%c0_277, %c137_278] : memref<8x768xf32, #tpu.memory_space<vmem>>, vector<8x512xf32>
    %c6_i32_279 = arith.constant 6 : i32
    %411 = vector.broadcast %c6_i32_279 : i32 to vector<8x512xi32>
    %412 = arith.cmpi sle, %6, %411 : vector<8x512xi32>
    %c6_i32_280 = arith.constant 6 : i32
    %413 = vector.broadcast %c6_i32_280 : i32 to vector<8x512xi32>
    %414 = arith.cmpi sle, %2, %413 : vector<8x512xi32>
    %415 = arith.andi %412, %414 : vector<8x512xi1>
    %cst_281 = arith.constant 0.000000e+00 : f32
    %416 = vector.broadcast %cst_281 : f32 to vector<8x512xf32>
    %417 = arith.select %415, %410, %416 : vector<8x512xi1>, vector<8x512xf32>
    %c136_282 = arith.constant 136 : index
    %c0_283 = arith.constant 0 : index
    %418 = vector.load %arg9[%c136_282, %c0_283] : memref<216x512xf32, #tpu.memory_space<vmem>>, vector<8x512xf32>
    tpu.vector_store %arg9[%c136_282, %c0_283], %417 {strides = array<i32>} : memref<216x512xf32, #tpu.memory_space<vmem>>, vector<8x512xf32>,
    %c0_284 = arith.constant 0 : index
    %c183_285 = arith.constant 183 : index
    %419 = vector.load %arg8[%c0_284, %c183_285] : memref<8x768xf32, #tpu.memory_space<vmem>>, vector<8x512xf32>
    %c6_i32_286 = arith.constant 6 : i32
    %420 = vector.broadcast %c6_i32_286 : i32 to vector<8x512xi32>
    %421 = arith.cmpi sle, %8, %420 : vector<8x512xi32>
    %c1_i32_287 = arith.constant 1 : i32
    %422 = vector.broadcast %c1_i32_287 : i32 to vector<8x512xi32>
    %423 = arith.cmpi sge, %6, %422 : vector<8x512xi32>
    %c1_i32_288 = arith.constant 1 : i32
    %424 = vector.broadcast %c1_i32_288 : i32 to vector<8x512xi32>
    %425 = arith.cmpi sge, %2, %424 : vector<8x512xi32>
    %426 = arith.andi %421, %423 : vector<8x512xi1>
    %427 = arith.andi %426, %425 : vector<8x512xi1>
    %cst_289 = arith.constant 0.000000e+00 : f32
    %428 = vector.broadcast %cst_289 : f32 to vector<8x512xf32>
    %429 = arith.select %427, %419, %428 : vector<8x512xi1>, vector<8x512xf32>
    %c144_290 = arith.constant 144 : index
    %c0_291 = arith.constant 0 : index
    %430 = vector.load %arg9[%c144_290, %c0_291] : memref<216x512xf32, #tpu.memory_space<vmem>>, vector<8x512xf32>
    tpu.vector_store %arg9[%c144_290, %c0_291], %429 {strides = array<i32>} : memref<216x512xf32, #tpu.memory_space<vmem>>, vector<8x512xf32>,
    %c0_292 = arith.constant 0 : index
    %c184_293 = arith.constant 184 : index
    %431 = vector.load %arg8[%c0_292, %c184_293] : memref<8x768xf32, #tpu.memory_space<vmem>>, vector<8x512xf32>
    %c6_i32_294 = arith.constant 6 : i32
    %432 = vector.broadcast %c6_i32_294 : i32 to vector<8x512xi32>
    %433 = arith.cmpi sle, %8, %432 : vector<8x512xi32>
    %c1_i32_295 = arith.constant 1 : i32
    %434 = vector.broadcast %c1_i32_295 : i32 to vector<8x512xi32>
    %435 = arith.cmpi sge, %6, %434 : vector<8x512xi32>
    %436 = arith.andi %433, %435 : vector<8x512xi1>
    %cst_296 = arith.constant 0.000000e+00 : f32
    %437 = vector.broadcast %cst_296 : f32 to vector<8x512xf32>
    %438 = arith.select %436, %431, %437 : vector<8x512xi1>, vector<8x512xf32>
    %c152_297 = arith.constant 152 : index
    %c0_298 = arith.constant 0 : index
    %439 = vector.load %arg9[%c152_297, %c0_298] : memref<216x512xf32, #tpu.memory_space<vmem>>, vector<8x512xf32>
    tpu.vector_store %arg9[%c152_297, %c0_298], %438 {strides = array<i32>} : memref<216x512xf32, #tpu.memory_space<vmem>>, vector<8x512xf32>,
    %c0_299 = arith.constant 0 : index
    %c185_300 = arith.constant 185 : index
    %440 = vector.load %arg8[%c0_299, %c185_300] : memref<8x768xf32, #tpu.memory_space<vmem>>, vector<8x512xf32>
    %c6_i32_301 = arith.constant 6 : i32
    %441 = vector.broadcast %c6_i32_301 : i32 to vector<8x512xi32>
    %442 = arith.cmpi sle, %8, %441 : vector<8x512xi32>
    %c1_i32_302 = arith.constant 1 : i32
    %443 = vector.broadcast %c1_i32_302 : i32 to vector<8x512xi32>
    %444 = arith.cmpi sge, %6, %443 : vector<8x512xi32>
    %c6_i32_303 = arith.constant 6 : i32
    %445 = vector.broadcast %c6_i32_303 : i32 to vector<8x512xi32>
    %446 = arith.cmpi sle, %2, %445 : vector<8x512xi32>
    %447 = arith.andi %442, %444 : vector<8x512xi1>
    %448 = arith.andi %447, %446 : vector<8x512xi1>
    %cst_304 = arith.constant 0.000000e+00 : f32
    %449 = vector.broadcast %cst_304 : f32 to vector<8x512xf32>
    %450 = arith.select %448, %440, %449 : vector<8x512xi1>, vector<8x512xf32>
    %c160_305 = arith.constant 160 : index
    %c0_306 = arith.constant 0 : index
    %451 = vector.load %arg9[%c160_305, %c0_306] : memref<216x512xf32, #tpu.memory_space<vmem>>, vector<8x512xf32>
    tpu.vector_store %arg9[%c160_305, %c0_306], %450 {strides = array<i32>} : memref<216x512xf32, #tpu.memory_space<vmem>>, vector<8x512xf32>,
    %c0_307 = arith.constant 0 : index
    %c191_308 = arith.constant 191 : index
    %452 = vector.load %arg8[%c0_307, %c191_308] : memref<8x768xf32, #tpu.memory_space<vmem>>, vector<8x512xf32>
    %c6_i32_309 = arith.constant 6 : i32
    %453 = vector.broadcast %c6_i32_309 : i32 to vector<8x512xi32>
    %454 = arith.cmpi sle, %8, %453 : vector<8x512xi32>
    %c1_i32_310 = arith.constant 1 : i32
    %455 = vector.broadcast %c1_i32_310 : i32 to vector<8x512xi32>
    %456 = arith.cmpi sge, %2, %455 : vector<8x512xi32>
    %457 = arith.andi %454, %456 : vector<8x512xi1>
    %cst_311 = arith.constant 0.000000e+00 : f32
    %458 = vector.broadcast %cst_311 : f32 to vector<8x512xf32>
    %459 = arith.select %457, %452, %458 : vector<8x512xi1>, vector<8x512xf32>
    %c168_312 = arith.constant 168 : index
    %c0_313 = arith.constant 0 : index
    %460 = vector.load %arg9[%c168_312, %c0_313] : memref<216x512xf32, #tpu.memory_space<vmem>>, vector<8x512xf32>
    tpu.vector_store %arg9[%c168_312, %c0_313], %459 {strides = array<i32>} : memref<216x512xf32, #tpu.memory_space<vmem>>, vector<8x512xf32>,
    %c0_314 = arith.constant 0 : index
    %c192_315 = arith.constant 192 : index
    %461 = vector.load %arg8[%c0_314, %c192_315] : memref<8x768xf32, #tpu.memory_space<vmem>>, vector<8x512xf32>
    %c6_i32_316 = arith.constant 6 : i32
    %462 = vector.broadcast %c6_i32_316 : i32 to vector<8x512xi32>
    %463 = arith.cmpi sle, %8, %462 : vector<8x512xi32>
    %cst_317 = arith.constant 0.000000e+00 : f32
    %464 = vector.broadcast %cst_317 : f32 to vector<8x512xf32>
    %465 = arith.select %463, %461, %464 : vector<8x512xi1>, vector<8x512xf32>
    %c176_318 = arith.constant 176 : index
    %c0_319 = arith.constant 0 : index
    %466 = vector.load %arg9[%c176_318, %c0_319] : memref<216x512xf32, #tpu.memory_space<vmem>>, vector<8x512xf32>
    tpu.vector_store %arg9[%c176_318, %c0_319], %465 {strides = array<i32>} : memref<216x512xf32, #tpu.memory_space<vmem>>, vector<8x512xf32>,
    %c0_320 = arith.constant 0 : index
    %c193_321 = arith.constant 193 : index
    %467 = vector.load %arg8[%c0_320, %c193_321] : memref<8x768xf32, #tpu.memory_space<vmem>>, vector<8x512xf32>
    %c6_i32_322 = arith.constant 6 : i32
    %468 = vector.broadcast %c6_i32_322 : i32 to vector<8x512xi32>
    %469 = arith.cmpi sle, %8, %468 : vector<8x512xi32>
    %c6_i32_323 = arith.constant 6 : i32
    %470 = vector.broadcast %c6_i32_323 : i32 to vector<8x512xi32>
    %471 = arith.cmpi sle, %2, %470 : vector<8x512xi32>
    %472 = arith.andi %469, %471 : vector<8x512xi1>
    %cst_324 = arith.constant 0.000000e+00 : f32
    %473 = vector.broadcast %cst_324 : f32 to vector<8x512xf32>
    %474 = arith.select %472, %467, %473 : vector<8x512xi1>, vector<8x512xf32>
    %c184_325 = arith.constant 184 : index
    %c0_326 = arith.constant 0 : index
    %475 = vector.load %arg9[%c184_325, %c0_326] : memref<216x512xf32, #tpu.memory_space<vmem>>, vector<8x512xf32>
    tpu.vector_store %arg9[%c184_325, %c0_326], %474 {strides = array<i32>} : memref<216x512xf32, #tpu.memory_space<vmem>>, vector<8x512xf32>,
    %c0_327 = arith.constant 0 : index
    %c199_328 = arith.constant 199 : index
    %476 = vector.load %arg8[%c0_327, %c199_328] : memref<8x768xf32, #tpu.memory_space<vmem>>, vector<8x512xf32>
    %c6_i32_329 = arith.constant 6 : i32
    %477 = vector.broadcast %c6_i32_329 : i32 to vector<8x512xi32>
    %478 = arith.cmpi sle, %8, %477 : vector<8x512xi32>
    %c6_i32_330 = arith.constant 6 : i32
    %479 = vector.broadcast %c6_i32_330 : i32 to vector<8x512xi32>
    %480 = arith.cmpi sle, %6, %479 : vector<8x512xi32>
    %c1_i32_331 = arith.constant 1 : i32
    %481 = vector.broadcast %c1_i32_331 : i32 to vector<8x512xi32>
    %482 = arith.cmpi sge, %2, %481 : vector<8x512xi32>
    %483 = arith.andi %478, %480 : vector<8x512xi1>
    %484 = arith.andi %483, %482 : vector<8x512xi1>
    %cst_332 = arith.constant 0.000000e+00 : f32
    %485 = vector.broadcast %cst_332 : f32 to vector<8x512xf32>
    %486 = arith.select %484, %476, %485 : vector<8x512xi1>, vector<8x512xf32>
    %c192_333 = arith.constant 192 : index
    %c0_334 = arith.constant 0 : index
    %487 = vector.load %arg9[%c192_333, %c0_334] : memref<216x512xf32, #tpu.memory_space<vmem>>, vector<8x512xf32>
    tpu.vector_store %arg9[%c192_333, %c0_334], %486 {strides = array<i32>} : memref<216x512xf32, #tpu.memory_space<vmem>>, vector<8x512xf32>,
    %c0_335 = arith.constant 0 : index
    %c200_336 = arith.constant 200 : index
    %488 = vector.load %arg8[%c0_335, %c200_336] : memref<8x768xf32, #tpu.memory_space<vmem>>, vector<8x512xf32>
    %c6_i32_337 = arith.constant 6 : i32
    %489 = vector.broadcast %c6_i32_337 : i32 to vector<8x512xi32>
    %490 = arith.cmpi sle, %8, %489 : vector<8x512xi32>
    %c6_i32_338 = arith.constant 6 : i32
    %491 = vector.broadcast %c6_i32_338 : i32 to vector<8x512xi32>
    %492 = arith.cmpi sle, %6, %491 : vector<8x512xi32>
    %493 = arith.andi %490, %492 : vector<8x512xi1>
    %cst_339 = arith.constant 0.000000e+00 : f32
    %494 = vector.broadcast %cst_339 : f32 to vector<8x512xf32>
    %495 = arith.select %493, %488, %494 : vector<8x512xi1>, vector<8x512xf32>
    %c200_340 = arith.constant 200 : index
    %c0_341 = arith.constant 0 : index
    %496 = vector.load %arg9[%c200_340, %c0_341] : memref<216x512xf32, #tpu.memory_space<vmem>>, vector<8x512xf32>
    tpu.vector_store %arg9[%c200_340, %c0_341], %495 {strides = array<i32>} : memref<216x512xf32, #tpu.memory_space<vmem>>, vector<8x512xf32>,
    %c0_342 = arith.constant 0 : index
    %c201_343 = arith.constant 201 : index
    %497 = vector.load %arg8[%c0_342, %c201_343] : memref<8x768xf32, #tpu.memory_space<vmem>>, vector<8x512xf32>
    %c6_i32_344 = arith.constant 6 : i32
    %498 = vector.broadcast %c6_i32_344 : i32 to vector<8x512xi32>
    %499 = arith.cmpi sle, %8, %498 : vector<8x512xi32>
    %c6_i32_345 = arith.constant 6 : i32
    %500 = vector.broadcast %c6_i32_345 : i32 to vector<8x512xi32>
    %501 = arith.cmpi sle, %6, %500 : vector<8x512xi32>
    %c6_i32_346 = arith.constant 6 : i32
    %502 = vector.broadcast %c6_i32_346 : i32 to vector<8x512xi32>
    %503 = arith.cmpi sle, %2, %502 : vector<8x512xi32>
    %504 = arith.andi %499, %501 : vector<8x512xi1>
    %505 = arith.andi %504, %503 : vector<8x512xi1>
    %cst_347 = arith.constant 0.000000e+00 : f32
    %506 = vector.broadcast %cst_347 : f32 to vector<8x512xf32>
    %507 = arith.select %505, %497, %506 : vector<8x512xi1>, vector<8x512xf32>
    %c208_348 = arith.constant 208 : index
    %c0_349 = arith.constant 0 : index
    %508 = vector.load %arg9[%c208_348, %c0_349] : memref<216x512xf32, #tpu.memory_space<vmem>>, vector<8x512xf32>
    tpu.vector_store %arg9[%c208_348, %c0_349], %507 {strides = array<i32>} : memref<216x512xf32, #tpu.memory_space<vmem>>, vector<8x512xf32>,
    %c0_350 = arith.constant 0 : index
    %c0_351 = arith.constant 0 : index
    %509 = vector.load %arg4[%c0_350, %c0_351] : memref<8x216xf32, #tpu.memory_space<vmem>>, vector<8x216xf32>
    %c0_352 = arith.constant 0 : index
    %c0_353 = arith.constant 0 : index
    %510 = vector.load %arg9[%c0_352, %c0_353] : memref<216x512xf32, #tpu.memory_space<vmem>>, vector<216x512xf32>
    %cst_354 = arith.constant dense<0.000000e+00> : vector<8x512xf32>
    %511 = tpu.matmul %509, %510, %cst_354 {dimension_numbers = #tpu.dot_dimension_numbers<[1], [0], [0], [1], [0, 0, 1, 1], [], []>} : vector<8x216xf32>, vector<216x512xf32>, vector<8x512xf32> -> vector<8x512xf32>
    %c0_355 = arith.constant 0 : index
    %c0_356 = arith.constant 0 : index
    %512 = vector.load %arg5[%c0_355, %c0_356] : memref<8x8xf32, #tpu.memory_space<vmem>>, vector<8x8xf32>
    %cst_357 = arith.constant dense<0.000000e+00> : vector<8x512xf32>
    %513 = tpu.matmul %512, %14, %cst_357 {dimension_numbers = #tpu.dot_dimension_numbers<[1], [0], [0], [1], [0, 0, 1, 1], [], []>} : vector<8x8xf32>, vector<8x512xf32>, vector<8x512xf32> -> vector<8x512xf32>
    %514 = arith.addf %511, %513 : vector<8x512xf32>
    %c0_358 = arith.constant 0 : index
    %c0_359 = arith.constant 0 : index
    %515 = vector.load %arg6[%c0_358, %c0_359] : memref<8x1xf32, #tpu.memory_space<vmem>>, vector<8x1xf32>
    %516 = vector.broadcast %515 : vector<8x1xf32> to vector<8x512xf32>
    %517 = arith.addf %514, %516 : vector<8x512xf32>
    %cst_360 = arith.constant 0.000000e+00 : f32
    %518 = vector.broadcast %cst_360 : f32 to vector<8x512xf32>
    %519 = arith.maximumf %517, %518 : vector<8x512xf32>
    %c0_361 = arith.constant 0 : index
    %c0_362 = arith.constant 0 : index
    %c0_363 = arith.constant 0 : index
    %520 = vector.load %arg7[%c0_361, %c0_362, %c0_363] : memref<1x8x512xf32, #tpu.memory_space<vmem>>, vector<1x8x512xf32>
    %521 = vector.shape_cast %520 : vector<1x8x512xf32> to vector<8x512xf32>
    %522 = vector.shape_cast %519 : vector<8x512xf32> to vector<1x8x512xf32>
    tpu.vector_store %arg7[%c0_361, %c0_362, %c0_363], %522 {strides = array<i32>} : memref<1x8x512xf32, #tpu.memory_space<vmem>>, vector<1x8x512xf32>,
    return
  }
  func.func @transform_0(%arg0: i32) -> (i32, i32, i32) {
    %c0_i32 = arith.constant 0 : i32
    %c0_i32_0 = arith.constant 0 : i32
    %c0_i32_1 = arith.constant 0 : i32
    return %arg0, %c0_i32, %c0_i32_0 : i32, i32, i32
  }
  func.func @transform_1(%arg0: i32) -> (i32, i32) {
    %c0_i32 = arith.constant 0 : i32
    %c0_i32_0 = arith.constant 0 : i32
    %c0_i32_1 = arith.constant 0 : i32
    return %c0_i32, %c0_i32_0 : i32, i32
  }
  func.func @transform_2(%arg0: i32) -> (i32, i32) {
    %c0_i32 = arith.constant 0 : i32
    %c0_i32_0 = arith.constant 0 : i32
    %c0_i32_1 = arith.constant 0 : i32
    return %c0_i32, %c0_i32_0 : i32, i32
  }
  func.func @transform_3(%arg0: i32) -> (i32, i32) {
    %c0_i32 = arith.constant 0 : i32
    %c0_i32_0 = arith.constant 0 : i32
    %c0_i32_1 = arith.constant 0 : i32
    return %c0_i32, %c0_i32_0 : i32, i32
  }
  func.func @transform_4(%arg0: i32) -> (i32, i32) {
    %c0_i32 = arith.constant 0 : i32
    %c0_i32_0 = arith.constant 0 : i32
    %c0_i32_1 = arith.constant 0 : i32
    return %c0_i32, %c0_i32_0 : i32, i32
  }
  func.func @transform_5(%arg0: i32) -> (i32, i32) {
    %c0_i32 = arith.constant 0 : i32
    %c0_i32_0 = arith.constant 0 : i32
    %c0_i32_1 = arith.constant 0 : i32
    return %c0_i32, %c0_i32_0 : i32, i32
  }
  func.func @transform_6(%arg0: i32) -> (i32, i32, i32) {
    %c0_i32 = arith.constant 0 : i32
    %c0_i32_0 = arith.constant 0 : i32
    %c0_i32_1 = arith.constant 0 : i32
    return %arg0, %c0_i32, %c0_i32_0 : i32, i32, i32
  }
}

</mosaic_0001>

<llo_original>
// kernel: tpu_custom_call.1
$region0: #{tpu_custom_call.1}
  #allocation0 [shape = 'u32[]', space=smem, size = 0x4, offset = 0x4, fixed_abs, tag = 'smem constant byte address 0x4 - core index']
  #allocation1 [shape = 'u32[72,128]{1,0:T(1,128)}', space=vmem, size = 0x9000, scoped, tag = 'internal scratch']
  #allocation2 [shape = 'f32[8,768]{1,0:T(8,128)}', space=vmem, size = 0x6000, scoped, tag = 'scratch operand']
  #allocation3 [shape = 'f32[216,512]{1,0:T(8,128)}', space=vmem, size = 0x6c000, scoped, tag = 'scratch operand']
  %s0 = inlined_call_operand.hbm [shape: f32[2,8,512], index: 0, kind: input, shape index: {}]
  %s1 = inlined_call_operand.vmem [shape: f32[8,216], index: 1, kind: input, shape index: {}]
  %s2 = inlined_call_operand.vmem [shape: f32[8,1], index: 2, kind: input, shape index: {}]
  %s3 = inlined_call_operand.hbm [shape: f32[8,216], index: 3, kind: input, shape index: {}]
  %s4 = inlined_call_operand.hbm [shape: f32[8,8], index: 4, kind: input, shape index: {}]
  %s5 = inlined_call_operand.vmem [shape: f32[8,1], index: 5, kind: input, shape index: {}]
  %s6 = inlined_call_operand.hbm [shape: f32[2,8,512], index: 6, kind: output, shape index: {}]
  %s7 = sld [smem:[#allocation0]]
  $region69: #{tpu_custom_call.1} parent=0
    _
  %s9 = ssub.s32 1, %s7
  %s10 = scalar_select 0, %s9, %s7
  $region1: #{tpu_custom_call.1} parent=0
    #allocation4 [shape = 'u8[32768]{0}', space=vmem, size = 0x8000, scoped, tag = 'input window, operand 0']
    #allocation5 [shape = 's32[2]{0}', space=sflag, size = 0x8, scoped, tag = 'scoped memory for tpu_custom_call.1']
    #allocation6 [shape = 's32[2]{0}', space=sflag, size = 0x8, scoped, tag = 'scoped memory for tpu_custom_call.1']
    #allocation7 [shape = 'u8[8192]{0}', space=vmem, size = 0x2000, scoped, tag = 'input window, operand 3, single buffered']
    #allocation8 [shape = 's32[1]{0}', space=sflag, size = 0x4, scoped, tag = 'scoped memory for tpu_custom_call.1']
    #allocation9 [shape = 'u8[4096]{0}', space=vmem, size = 0x1000, scoped, tag = 'input window, operand 4, single buffered']
    #allocation10 [shape = 'u8[32768]{0}', space=vmem, size = 0x8000, scoped, tag = 'output window, operand 0']
    %11 = vsyncpa [#allocation5], 0
    %s12 = scalar_lea.sflag [#allocation5], 1
    %13 = vsyncpa %s12, 0
    %14 = vsyncpa [#allocation8], 0
    %15 = vsyncpa [#allocation6], 0
    %s16 = scalar_lea.sflag [#allocation6], 1
    %17 = vsyncpa %s16, 0
    loop: start=0, step=1, limit=4
    $region2: #{tpu_custom_call.1} parent=1 // loop_pre_header
      _
    $region3: #{tpu_custom_call.1} parent=1 // loop_header
      %s19 = sphi 0, %s23
      %p20 = scmp.ge.s32.totalorder %s19, 4
      %s29 = sphi 0, %s31
      %s32 = sphi 0, %s29
      %s33 = sphi 0, %s32
      %s49 = sphi 0, %s33
      %s53 = sphi 0, %s53
      %s55 = sphi 0, %s53
      %s56 = sphi 0, %s55
      %s70 = sphi 0, %s56
      %s74 = sphi 0, %s74
      %s76 = sphi 0, %s74
      %s77 = sphi 0, %s76
      %s91 = sphi 0, %s77
      %s95 = sphi 0, %s95
      %s97 = sphi 0, %s95
      %s98 = sphi 0, %s97
      %s112 = sphi 0, %s98
      %s116 = sphi 0, %s116
      %s118 = sphi 0, %s116
      %s119 = sphi 0, %s118
      %s133 = sphi 0, %s119
      %s137 = sphi 0, %s137
      %s139 = sphi 0, %s137
      %s140 = sphi 0, %s139
      %s154 = sphi 0, %s140
      %s160 = sphi 0, %s162
      %s163 = sphi 0, %s160
      %s164 = sphi 0, %s163
      %s180 = sphi 0, %s164
    $region4: #{tpu_custom_call.1} parent=1 // loop_header_branch
      %22 = sbr.rel (%p20) target = $region8
    $region5: #{tpu_custom_call.1} parent=1 // loop_body
      %s24 = ssub.s32 %s19, 1
      %s25 = ssub.s32 %s19, 2
      %s26 = sadd.s32 %s19, 1
      %s27 = ssub.s32 %s19, %s26
      %p28 = scmp.eq.s32.totalorder %s27, 0
      %s30 = sadd.s32 %s29, 1
      %s31 = scalar_select %p28, %s29, %s30
      %p34 = pneg %p28
      %p35 = scmp.eq.s32.totalorder %s19, 1
      %p36 = por %p34, %p35
      %p37 = scmp.ne.s32.totalorder %s29, %s32
      %p38 = scmp.eq.s32.totalorder %s19, 0
      %p39 = por %p37, %p38
      %p40 = scmp.ne.s32.totalorder %s29, %s32
      %p41 = scmp.eq.s32.totalorder %s24, 1
      %p42 = por %p40, %p41
      %p43 = scmp.ne.s32.totalorder %s32, %s33
      %p44 = scmp.eq.s32.totalorder %s24, 0
      %p45 = por %p43, %p44
      %p46 = scmp.ne.s32.totalorder %s32, %s33
      %p47 = scmp.eq.s32.totalorder %s25, 1
      %p48 = por %p46, %p47
      %p50 = scmp.ne.s32.totalorder %s33, %s49
      %p51 = scmp.eq.s32.totalorder %s25, 0
      %p52 = por %p50, %p51
      %s54 = sadd.s32 %s53, 1
      %p57 = scmp.eq.s32.totalorder %s19, 1
      %p58 = scmp.ne.s32.totalorder %s53, %s55
      %p59 = scmp.eq.s32.totalorder %s19, 0
      %p60 = por %p58, %p59
      %p61 = scmp.ne.s32.totalorder %s53, %s55
      %p62 = scmp.eq.s32.totalorder %s24, 1
      %p63 = por %p61, %p62
      %p64 = scmp.ne.s32.totalorder %s55, %s56
      %p65 = scmp.eq.s32.totalorder %s24, 0
      %p66 = por %p64, %p65
      %p67 = scmp.ne.s32.totalorder %s55, %s56
      %p68 = scmp.eq.s32.totalorder %s25, 1
      %p69 = por %p67, %p68
      %p71 = scmp.ne.s32.totalorder %s56, %s70
      %p72 = scmp.eq.s32.totalorder %s25, 0
      %p73 = por %p71, %p72
      %s75 = sadd.s32 %s74, 1
      %p78 = scmp.eq.s32.totalorder %s19, 1
      %p79 = scmp.ne.s32.totalorder %s74, %s76
      %p80 = scmp.eq.s32.totalorder %s19, 0
      %p81 = por %p79, %p80
      %p82 = scmp.ne.s32.totalorder %s74, %s76
      %p83 = scmp.eq.s32.totalorder %s24, 1
      %p84 = por %p82, %p83
      %p85 = scmp.ne.s32.totalorder %s76, %s77
      %p86 = scmp.eq.s32.totalorder %s24, 0
      %p87 = por %p85, %p86
      %p88 = scmp.ne.s32.totalorder %s76, %s77
      %p89 = scmp.eq.s32.totalorder %s25, 1
      %p90 = por %p88, %p89
      %p92 = scmp.ne.s32.totalorder %s77, %s91
      %p93 = scmp.eq.s32.totalorder %s25, 0
      %p94 = por %p92, %p93
      %s96 = sadd.s32 %s95, 1
      %p99 = scmp.eq.s32.totalorder %s19, 1
      %p100 = scmp.ne.s32.totalorder %s95, %s97
      %p101 = scmp.eq.s32.totalorder %s19, 0
      %p102 = por %p100, %p101
      %p103 = scmp.ne.s32.totalorder %s95, %s97
      %p104 = scmp.eq.s32.totalorder %s24, 1
      %p105 = por %p103, %p104
      %p106 = scmp.ne.s32.totalorder %s97, %s98
      %p107 = scmp.eq.s32.totalorder %s24, 0
      %p108 = por %p106, %p107
      %p109 = scmp.ne.s32.totalorder %s97, %s98
      %p110 = scmp.eq.s32.totalorder %s25, 1
      %p111 = por %p109, %p110
      %p113 = scmp.ne.s32.totalorder %s98, %s112
      %p114 = scmp.eq.s32.totalorder %s25, 0
      %p115 = por %p113, %p114
      %s117 = sadd.s32 %s116, 1
      %p120 = scmp.eq.s32.totalorder %s19, 1
      %p121 = scmp.ne.s32.totalorder %s116, %s118
      %p122 = scmp.eq.s32.totalorder %s19, 0
      %p123 = por %p121, %p122
      %p124 = scmp.ne.s32.totalorder %s116, %s118
      %p125 = scmp.eq.s32.totalorder %s24, 1
      %p126 = por %p124, %p125
      %p127 = scmp.ne.s32.totalorder %s118, %s119
      %p128 = scmp.eq.s32.totalorder %s24, 0
      %p129 = por %p127, %p128
      %p130 = scmp.ne.s32.totalorder %s118, %s119
      %p131 = scmp.eq.s32.totalorder %s25, 1
      %p132 = por %p130, %p131
      %p134 = scmp.ne.s32.totalorder %s119, %s133
      %p135 = scmp.eq.s32.totalorder %s25, 0
      %p136 = por %p134, %p135
      %s138 = sadd.s32 %s137, 1
      %p141 = scmp.eq.s32.totalorder %s19, 1
      %p142 = scmp.ne.s32.totalorder %s137, %s139
      %p143 = scmp.eq.s32.totalorder %s19, 0
      %p144 = por %p142, %p143
      %p145 = scmp.ne.s32.totalorder %s137, %s139
      %p146 = scmp.eq.s32.totalorder %s24, 1
      %p147 = por %p145, %p146
      %p148 = scmp.ne.s32.totalorder %s139, %s140
      %p149 = scmp.eq.s32.totalorder %s24, 0
      %p150 = por %p148, %p149
      %p151 = scmp.ne.s32.totalorder %s139, %s140
      %p152 = scmp.eq.s32.totalorder %s25, 1
      %p153 = por %p151, %p152
      %p155 = scmp.ne.s32.totalorder %s140, %s154
      %p156 = scmp.eq.s32.totalorder %s25, 0
      %p157 = por %p155, %p156
      %s158 = ssub.s32 %s19, %s26
      %p159 = scmp.eq.s32.totalorder %s158, 0
      %s161 = sadd.s32 %s160, 1
      %s162 = scalar_select %p159, %s160, %s161
      %p165 = pneg %p159
      %p166 = scmp.eq.s32.totalorder %s19, 1
      %p167 = por %p165, %p166
      %p168 = scmp.ne.s32.totalorder %s160, %s163
      %p169 = scmp.eq.s32.totalorder %s19, 0
      %p170 = por %p168, %p169
      %p171 = scmp.ne.s32.totalorder %s160, %s163
      %p172 = scmp.eq.s32.totalorder %s24, 1
      %p173 = por %p171, %p172
      %p174 = scmp.ne.s32.totalorder %s163, %s164
      %p175 = scmp.eq.s32.totalorder %s24, 0
      %p176 = por %p174, %p175
      %p177 = scmp.ne.s32.totalorder %s163, %s164
      %p178 = scmp.eq.s32.totalorder %s25, 1
      %p179 = por %p177, %p178
      %p181 = scmp.ne.s32.totalorder %s164, %s180
      %p182 = scmp.eq.s32.totalorder %s25, 0
      %p183 = por %p181, %p182
      %p184 = scmp.le.s32.totalorder 1, %s19
      %p185 = scmp.lt.s32.totalorder %s19, 3
      %p186 = pnand %p184, %p185
      %p187 = pneg %p186
      // Predicated region
      $region9: #{tpu_custom_call.1} parent=5 // pred_check
        _
      $region10: #{tpu_custom_call.1} parent=5 // pred_check_branch
        %189 = sbr.rel (%p186) target = $region12
      $region11: #{tpu_custom_call.1} parent=5 // pred_region
        %s190 = ssub.s32 %s19, 1
        // Predicated region
        $region13: #{tpu_custom_call.1} parent=11 // pred_check
          %p191 = pneg %p66
        $region14: #{tpu_custom_call.1} parent=11 // pred_check_branch
          %193 = sbr.rel (%p191) target = $region16
        $region15: #{tpu_custom_call.1} parent=11 // pred_region
          _
        $region16: #{tpu_custom_call.1} parent=11 // pred_fallthru
          _
        // Predicated region
        $region17: #{tpu_custom_call.1} parent=11 // pred_check
          %p194 = pneg %p87
        $region18: #{tpu_custom_call.1} parent=11 // pred_check_branch
          %196 = sbr.rel (%p194) target = $region20
        $region19: #{tpu_custom_call.1} parent=11 // pred_region
          _
        $region20: #{tpu_custom_call.1} parent=11 // pred_fallthru
          _
        // Predicated region
        $region21: #{tpu_custom_call.1} parent=11 // pred_check
          %p197 = pneg %p108
        $region22: #{tpu_custom_call.1} parent=11 // pred_check_branch
          %199 = sbr.rel (%p197) target = $region24
        $region23: #{tpu_custom_call.1} parent=11 // pred_region
          %201 = vsyncadd [#allocation8], 0
          %s203 = sshll.u32 %s3, 4
          %s204 = int_to_ptr.hbm [resolvable:$true] %s203
          %s205 = sshll.u32 [#allocation7], 4
          %s206 = int_to_ptr.vmem [resolvable:$true] %s205
          %208 = dma.hbm_to_vmem [thread:$0]  %s204, 256, %s206, [#allocation8]
        $region24: #{tpu_custom_call.1} parent=11 // pred_fallthru
          _
        // Predicated region
        $region25: #{tpu_custom_call.1} parent=11 // pred_check
          %p209 = pneg %p129
        $region26: #{tpu_custom_call.1} parent=11 // pred_check_branch
          %211 = sbr.rel (%p209) target = $region28
        $region27: #{tpu_custom_call.1} parent=11 // pred_region
          %213 = vsyncadd [#allocation8], 0
          %s215 = sshll.u32 %s4, 4
          %s216 = int_to_ptr.hbm [resolvable:$true] %s215
          %s217 = sshll.u32 [#allocation9], 4
          %s218 = int_to_ptr.vmem [resolvable:$true] %s217
          %220 = dma.hbm_to_vmem [thread:$0]  %s216, 128, %s218, [#allocation8]
        $region28: #{tpu_custom_call.1} parent=11 // pred_fallthru
          _
        // Predicated region
        $region29: #{tpu_custom_call.1} parent=11 // pred_check
          %p221 = pneg %p150
        $region30: #{tpu_custom_call.1} parent=11 // pred_check_branch
          %223 = sbr.rel (%p221) target = $region32
        $region31: #{tpu_custom_call.1} parent=11 // pred_region
          _
        $region32: #{tpu_custom_call.1} parent=11 // pred_fallthru
          _
      $region12: #{tpu_custom_call.1} parent=5 // pred_fallthru
        _
      %p224 = scmp.lt.s32.totalorder %s19, 2
      // Predicated region
      $region33: #{tpu_custom_call.1} parent=5 // pred_check
        %p225 = pneg %p224
      $region34: #{tpu_custom_call.1} parent=5 // pred_check_branch
        %227 = sbr.rel (%p225) target = $region36
      $region35: #{tpu_custom_call.1} parent=5 // pred_region
        // Predicated region
        $region37: #{tpu_custom_call.1} parent=35 // pred_check
          %p228 = pneg %p39
        $region38: #{tpu_custom_call.1} parent=35 // pred_check_branch
          %230 = sbr.rel (%p228) target = $region40
        $region39: #{tpu_custom_call.1} parent=35 // pred_region
          %s231 = sand.u32 %s29, 1
          %s232 = scalar_lea.sflag [#allocation5], %s231
          %s233 = sand.u32 %s29, 1
          %s234 = smul.addr %s233, 32
          %s235 = scalar_lea.vmem [#allocation4], %s234
          %237 = vsyncadd %s232, 0
          %s238 = smul.addr %s19, 4
          %s239 = smul.addr %s238, 8
          %s240 = scalar_lea.hbm %s0, %s239
          %s242 = sshll.u32 %s240, 4
          %s243 = int_to_ptr.hbm [resolvable:$true] %s242
          %s244 = sshll.u32 %s235, 4
          %s245 = int_to_ptr.vmem [resolvable:$true] %s244
          %247 = dma.hbm_to_vmem [thread:$0]  %s243, 512, %s245, %s232
        $region40: #{tpu_custom_call.1} parent=35 // pred_fallthru
          _
      $region36: #{tpu_custom_call.1} parent=5 // pred_fallthru
        _
      %p248 = scmp.le.s32.totalorder 1, %s19
      %p249 = scmp.lt.s32.totalorder %s19, 3
      %p250 = pnand %p248, %p249
      %p251 = pneg %p250
      // Predicated region
      $region41: #{tpu_custom_call.1} parent=5 // pred_check
        _
      $region42: #{tpu_custom_call.1} parent=5 // pred_check_branch
        %253 = sbr.rel (%p250) target = $region44
      $region43: #{tpu_custom_call.1} parent=5 // pred_region
        %s254 = ssub.s32 %s19, 1
        %s255 = sand.u32 %s32, 1
        %s256 = scalar_lea.sflag [#allocation5], %s255
        %s257 = sand.u32 %s32, 1
        %s258 = smul.addr %s257, 32
        %s259 = scalar_lea.vmem [#allocation4], %s258
        // Predicated region
        $region45: #{tpu_custom_call.1} parent=43 // pred_check
          %p260 = pneg %p45
        $region46: #{tpu_custom_call.1} parent=43 // pred_check_branch
          %262 = sbr.rel (%p260) target = $region48
        $region47: #{tpu_custom_call.1} parent=43 // pred_region
          %264 = dma.done %s256, 512
        $region48: #{tpu_custom_call.1} parent=43 // pred_fallthru
          _
        // Predicated region
        $region49: #{tpu_custom_call.1} parent=43 // pred_check
          %p265 = pneg %p108
        $region50: #{tpu_custom_call.1} parent=43 // pred_check_branch
          %267 = sbr.rel (%p265) target = $region52
        $region51: #{tpu_custom_call.1} parent=43 // pred_region
          %269 = dma.done [#allocation8], 256
        $region52: #{tpu_custom_call.1} parent=43 // pred_fallthru
          _
        // Predicated region
        $region53: #{tpu_custom_call.1} parent=43 // pred_check
          %p270 = pneg %p129
        $region54: #{tpu_custom_call.1} parent=43 // pred_check_branch
          %272 = sbr.rel (%p270) target = $region56
        $region55: #{tpu_custom_call.1} parent=43 // pred_region
          %274 = dma.done [#allocation8], 128
        $region56: #{tpu_custom_call.1} parent=43 // pred_fallthru
          _
        %s275 = sand.u32 %s32, 1
        %s276 = scalar_lea.sflag [#allocation5], %s275
        %s277 = sand.u32 %s32, 1
        %s278 = smul.addr %s277, 32
        %s279 = scalar_lea.vmem [#allocation4], %s278
        %p280 = pneg %p45
        %p281 = pneg %p42
        %p282 = pneg %p66
        %p283 = pneg %p63
        %p284 = pneg %p87
        %p285 = pneg %p84
        %p286 = pneg %p108
        %p287 = pneg %p105
        %p288 = pneg %p129
        %p289 = pneg %p126
        %p290 = pneg %p150
        %p291 = pneg %p147
        %p292 = pneg %p176
        %p293 = pneg %p173
        %s294 = sand.u32 %s163, 1
        %s295 = scalar_lea.sflag [#allocation6], %s294
        %s296 = sand.u32 %s163, 1
        %s297 = smul.addr %s296, 32
        %s298 = scalar_lea.vmem [#allocation10], %s297
        %v299 = vlaneseq
        %v300 = vand.u32 %v299, 127
        %v301 = vadd.s32 %v300, 128
        %v302 = vadd.s32 %v300, 256
        %v303 = vadd.s32 %v300, 384
        %v304 = vand.u32 %v300, 7
        %v305 = vand.u32 %v301, 7
        %v306 = vand.u32 %v302, 7
        %v307 = vand.u32 %v303, 7
        %v308 = vshra.s32 %v300, 3
        %v309 = vshra.s32 %v301, 3
        %v310 = vshra.s32 %v302, 3
        %v311 = vshra.s32 %v303, 3
        %v312 = vand.u32 %v308, 7
        %v313 = vand.u32 %v309, 7
        %v314 = vand.u32 %v310, 7
        %v315 = vand.u32 %v311, 7
        %v316 = vshra.s32 %v300, 6
        %v317 = vshra.s32 %v301, 6
        %v318 = vshra.s32 %v302, 6
        %v319 = vshra.s32 %v303, 6
        %320 = vst [vmem:[#allocation2] sm:$0xff] 0.0
        %321 = vst [vmem:[#allocation2 + $0x28] sm:$0xff] 0.0
        %v322 = vld [vmem:[%s259] sm:$0xff]
        %v323 = vld [vmem:[%s259 + $0x8] sm:$0xff]
        %v324 = vld [vmem:[%s259 + $0x10] sm:$0xff]
        %v325 = vld [vmem:[%s259 + $0x18] sm:$0xff]
        %326 = vst [vmem:[#allocation2 + $0x8] sm:$0xff] %v322
        %327 = vst [vmem:[#allocation2 + $0x10] sm:$0xff] %v323
        %328 = vst [vmem:[#allocation2 + $0x18] sm:$0xff] %v324
        %329 = vst [vmem:[#allocation2 + $0x20] sm:$0xff] %v325
        %v330 = vld [vmem:[#allocation2] sm:$0xff]
        %v331 = vld [vmem:[#allocation2 + $0x8] sm:$0xff]
        %v332 = vld [vmem:[#allocation2 + $0x10] sm:$0xff]
        %v333 = vld [vmem:[#allocation2 + $0x18] sm:$0xff]
        %v334 = vld [vmem:[#allocation2 + $0x20] sm:$0xff]
        %vm335 = vcmp.ge.s32.totalorder %v316, 1
        %vm336 = vcmp.ge.s32.totalorder %v317, 1
        %vm337 = vcmp.ge.s32.totalorder %v318, 1
        %vm338 = vcmp.ge.s32.totalorder %v319, 1
        %vm339 = vcmp.ge.s32.totalorder %v312, 1
        %vm340 = vcmp.ge.s32.totalorder %v313, 1
        %vm341 = vcmp.ge.s32.totalorder %v314, 1
        %vm342 = vcmp.ge.s32.totalorder %v315, 1
        %vm343 = vcmp.ge.s32.totalorder %v304, 1
        %vm344 = vcmp.ge.s32.totalorder %v305, 1
        %vm345 = vcmp.ge.s32.totalorder %v306, 1
        %vm346 = vcmp.ge.s32.totalorder %v307, 1
        %vm347 = vmand %vm335, %vm339
        %vm348 = vmand %vm336, %vm340
        %vm349 = vmand %vm337, %vm341
        %vm350 = vmand %vm338, %vm342
        %vm351 = vmand %vm347, %vm343
        %vm352 = vmand %vm348, %vm344
        %vm353 = vmand %vm349, %vm345
        %vm354 = vmand %vm350, %vm346
        %360 = vrot.lane.b32.xlu0 %v330, 73
        %v361 = vpop.permute.xlu0 %360
        %362 = vrot.lane.b32.xlu0 %v331, 73
        %v363 = vpop.permute.xlu0 %362
        %364 = vrot.lane.b32.xlu0 %v332, 73
        %v365 = vpop.permute.xlu0 %364
        %366 = vrot.lane.b32.xlu0 %v333, 73
        %v367 = vpop.permute.xlu0 %366
        %368 = vrot.lane.b32.xlu0 %v334, 73
        %v369 = vpop.permute.xlu0 %368
        %vm370 = vcmask 596992
        %v371 = vsel %vm370, %v361, %v363
        %v372 = vsel %vm370, %v363, %v365
        %v373 = vsel %vm370, %v365, %v367
        %v374 = vsel %vm370, %v367, %v369
        %v379 = vsel %vm351, %v371, 0.0
        %v380 = vsel %vm352, %v372, 0.0
        %v381 = vsel %vm353, %v373, 0.0
        %v382 = vsel %vm354, %v374, 0.0
        %383 = vst [vmem:[#allocation3] sm:$0xff] %v379
        %384 = vst [vmem:[#allocation3 + $0x8] sm:$0xff] %v380
        %385 = vst [vmem:[#allocation3 + $0x10] sm:$0xff] %v381
        %386 = vst [vmem:[#allocation3 + $0x18] sm:$0xff] %v382
        %v387 = vld [vmem:[#allocation2] sm:$0xff]
        %v388 = vld [vmem:[#allocation2 + $0x8] sm:$0xff]
        %v389 = vld [vmem:[#allocation2 + $0x10] sm:$0xff]
        %v390 = vld [vmem:[#allocation2 + $0x18] sm:$0xff]
        %v391 = vld [vmem:[#allocation2 + $0x20] sm:$0xff]
        %397 = vrot.lane.b32.xlu0 %v387, 72
        %v398 = vpop.permute.xlu0 %397
        %399 = vrot.lane.b32.xlu0 %v388, 72
        %v400 = vpop.permute.xlu0 %399
        %401 = vrot.lane.b32.xlu0 %v389, 72
        %v402 = vpop.permute.xlu0 %401
        %403 = vrot.lane.b32.xlu0 %v390, 72
        %v404 = vpop.permute.xlu0 %403
        %405 = vrot.lane.b32.xlu0 %v391, 72
        %v406 = vpop.permute.xlu0 %405
        %vm407 = vcmask 588800
        %v408 = vsel %vm407, %v398, %v400
        %v409 = vsel %vm407, %v400, %v402
        %v410 = vsel %vm407, %v402, %v404
        %v411 = vsel %vm407, %v404, %v406
        %v416 = vsel %vm347, %v408, 0.0
        %v417 = vsel %vm348, %v409, 0.0
        %v418 = vsel %vm349, %v410, 0.0
        %v419 = vsel %vm350, %v411, 0.0
        %420 = vst [vmem:[#allocation3 + $0x20] sm:$0xff] %v416
        %421 = vst [vmem:[#allocation3 + $0x28] sm:$0xff] %v417
        %422 = vst [vmem:[#allocation3 + $0x30] sm:$0xff] %v418
        %423 = vst [vmem:[#allocation3 + $0x38] sm:$0xff] %v419
        %v424 = vld [vmem:[#allocation2] sm:$0xff]
        %v425 = vld [vmem:[#allocation2 + $0x8] sm:$0xff]
        %v426 = vld [vmem:[#allocation2 + $0x10] sm:$0xff]
        %v427 = vld [vmem:[#allocation2 + $0x18] sm:$0xff]
        %v428 = vld [vmem:[#allocation2 + $0x20] sm:$0xff]
        %vm429 = vcmp.le.s32.totalorder %v304, 6
        %vm430 = vcmp.le.s32.totalorder %v305, 6
        %vm431 = vcmp.le.s32.totalorder %v306, 6
        %vm432 = vcmp.le.s32.totalorder %v307, 6
        %vm433 = vmand %vm347, %vm429
        %vm434 = vmand %vm348, %vm430
        %vm435 = vmand %vm349, %vm431
        %vm436 = vmand %vm350, %vm432
        %442 = vrot.lane.b32.xlu0 %v424, 71
        %v443 = vpop.permute.xlu0 %442
        %444 = vrot.lane.b32.xlu0 %v425, 71
        %v445 = vpop.permute.xlu0 %444
        %446 = vrot.lane.b32.xlu0 %v426, 71
        %v447 = vpop.permute.xlu0 %446
        %448 = vrot.lane.b32.xlu0 %v427, 71
        %v449 = vpop.permute.xlu0 %448
        %450 = vrot.lane.b32.xlu0 %v428, 71
        %v451 = vpop.permute.xlu0 %450
        %vm452 = vcmask 580608
        %v453 = vsel %vm452, %v443, %v445
        %v454 = vsel %vm452, %v445, %v447
        %v455 = vsel %vm452, %v447, %v449
        %v456 = vsel %vm452, %v449, %v451
        %v461 = vsel %vm433, %v453, 0.0
        %v462 = vsel %vm434, %v454, 0.0
        %v463 = vsel %vm435, %v455, 0.0
        %v464 = vsel %vm436, %v456, 0.0
        %465 = vst [vmem:[#allocation3 + $0x40] sm:$0xff] %v461
        %466 = vst [vmem:[#allocation3 + $0x48] sm:$0xff] %v462
        %467 = vst [vmem:[#allocation3 + $0x50] sm:$0xff] %v463
        %468 = vst [vmem:[#allocation3 + $0x58] sm:$0xff] %v464
        %v469 = vld [vmem:[#allocation2] sm:$0xff]
        %v470 = vld [vmem:[#allocation2 + $0x8] sm:$0xff]
        %v471 = vld [vmem:[#allocation2 + $0x10] sm:$0xff]
        %v472 = vld [vmem:[#allocation2 + $0x18] sm:$0xff]
        %v473 = vld [vmem:[#allocation2 + $0x20] sm:$0xff]
        %vm474 = vmand %vm335, %vm343
        %vm475 = vmand %vm336, %vm344
        %vm476 = vmand %vm337, %vm345
        %vm477 = vmand %vm338, %vm346
        %483 = vrot.lane.b32.xlu0 %v469, 65
        %v484 = vpop.permute.xlu0 %483
        %485 = vrot.lane.b32.xlu0 %v470, 65
        %v486 = vpop.permute.xlu0 %485
        %487 = vrot.lane.b32.xlu0 %v471, 65
        %v488 = vpop.permute.xlu0 %487
        %489 = vrot.lane.b32.xlu0 %v472, 65
        %v490 = vpop.permute.xlu0 %489
        %491 = vrot.lane.b32.xlu0 %v473, 65
        %v492 = vpop.permute.xlu0 %491
        %vm493 = vcmask 531456
        %v494 = vsel %vm493, %v484, %v486
        %v495 = vsel %vm493, %v486, %v488
        %v496 = vsel %vm493, %v488, %v490
        %v497 = vsel %vm493, %v490, %v492
        %v502 = vsel %vm474, %v494, 0.0
        %v503 = vsel %vm475, %v495, 0.0
        %v504 = vsel %vm476, %v496, 0.0
        %v505 = vsel %vm477, %v497, 0.0
        %506 = vst [vmem:[#allocation3 + $0x60] sm:$0xff] %v502
        %507 = vst [vmem:[#allocation3 + $0x68] sm:$0xff] %v503
        %508 = vst [vmem:[#allocation3 + $0x70] sm:$0xff] %v504
        %509 = vst [vmem:[#allocation3 + $0x78] sm:$0xff] %v505
        %v510 = vld [vmem:[#allocation2] sm:$0xff]
        %v511 = vld [vmem:[#allocation2 + $0x8] sm:$0xff]
        %v512 = vld [vmem:[#allocation2 + $0x10] sm:$0xff]
        %v513 = vld [vmem:[#allocation2 + $0x18] sm:$0xff]
        %v514 = vld [vmem:[#allocation2 + $0x20] sm:$0xff]
        %520 = vrot.lane.b32.xlu0 %v510, 64
        %v521 = vpop.permute.xlu0 %520
        %522 = vrot.lane.b32.xlu0 %v511, 64
        %v523 = vpop.permute.xlu0 %522
        %524 = vrot.lane.b32.xlu0 %v512, 64
        %v525 = vpop.permute.xlu0 %524
        %526 = vrot.lane.b32.xlu0 %v513, 64
        %v527 = vpop.permute.xlu0 %526
        %528 = vrot.lane.b32.xlu0 %v514, 64
        %v529 = vpop.permute.xlu0 %528
        %vm530 = vcmask 523264
        %v531 = vsel %vm530, %v521, %v523
        %v532 = vsel %vm530, %v523, %v525
        %v533 = vsel %vm530, %v525, %v527
        %v534 = vsel %vm530, %v527, %v529
        %v539 = vsel %vm335, %v531, 0.0
        %v540 = vsel %vm336, %v532, 0.0
        %v541 = vsel %vm337, %v533, 0.0
        %v542 = vsel %vm338, %v534, 0.0
        %543 = vst [vmem:[#allocation3 + $0x80] sm:$0xff] %v539
        %544 = vst [vmem:[#allocation3 + $0x88] sm:$0xff] %v540
        %545 = vst [vmem:[#allocation3 + $0x90] sm:$0xff] %v541
        %546 = vst [vmem:[#allocation3 + $0x98] sm:$0xff] %v542
        %v547 = vld [vmem:[#allocation2] sm:$0xff]
        %v548 = vld [vmem:[#allocation2 + $0x8] sm:$0xff]
        %v549 = vld [vmem:[#allocation2 + $0x10] sm:$0xff]
        %v550 = vld [vmem:[#allocation2 + $0x18] sm:$0xff]
        %v551 = vld [vmem:[#allocation2 + $0x20] sm:$0xff]
        %vm552 = vmand %vm335, %vm429
        %vm553 = vmand %vm336, %vm430
        %vm554 = vmand %vm337, %vm431
        %vm555 = vmand %vm338, %vm432
        %561 = vrot.lane.b32.xlu0 %v547, 63
        %v562 = vpop.permute.xlu0 %561
        %563 = vrot.lane.b32.xlu0 %v548, 63
        %v564 = vpop.permute.xlu0 %563
        %565 = vrot.lane.b32.xlu0 %v549, 63
        %v566 = vpop.permute.xlu0 %565
        %567 = vrot.lane.b32.xlu0 %v550, 63
        %v568 = vpop.permute.xlu0 %567
        %569 = vrot.lane.b32.xlu0 %v551, 63
        %v570 = vpop.permute.xlu0 %569
        %vm571 = vcmask 515072
        %v572 = vsel %vm571, %v562, %v564
        %v573 = vsel %vm571, %v564, %v566
        %v574 = vsel %vm571, %v566, %v568
        %v575 = vsel %vm571, %v568, %v570
        %v580 = vsel %vm552, %v572, 0.0
        %v581 = vsel %vm553, %v573, 0.0
        %v582 = vsel %vm554, %v574, 0.0
        %v583 = vsel %vm555, %v575, 0.0
        %584 = vst [vmem:[#allocation3 + $0xa0] sm:$0xff] %v580
        %585 = vst [vmem:[#allocation3 + $0xa8] sm:$0xff] %v581
        %586 = vst [vmem:[#allocation3 + $0xb0] sm:$0xff] %v582
        %587 = vst [vmem:[#allocation3 + $0xb8] sm:$0xff] %v583
        %v588 = vld [vmem:[#allocation2] sm:$0xff]
        %v589 = vld [vmem:[#allocation2 + $0x8] sm:$0xff]
        %v590 = vld [vmem:[#allocation2 + $0x10] sm:$0xff]
        %v591 = vld [vmem:[#allocation2 + $0x18] sm:$0xff]
        %v592 = vld [vmem:[#allocation2 + $0x20] sm:$0xff]
        %vm593 = vcmp.le.s32.totalorder %v312, 6
        %vm594 = vcmp.le.s32.totalorder %v313, 6
        %vm595 = vcmp.le.s32.totalorder %v314, 6
        %vm596 = vcmp.le.s32.totalorder %v315, 6
        %vm597 = vmand %vm335, %vm593
        %vm598 = vmand %vm336, %vm594
        %vm599 = vmand %vm337, %vm595
        %vm600 = vmand %vm338, %vm596
        %vm601 = vmand %vm597, %vm343
        %vm602 = vmand %vm598, %vm344
        %vm603 = vmand %vm599, %vm345
        %vm604 = vmand %vm600, %vm346
        %610 = vrot.lane.b32.xlu0 %v588, 57
        %v611 = vpop.permute.xlu0 %610
        %612 = vrot.lane.b32.xlu0 %v589, 57
        %v613 = vpop.permute.xlu0 %612
        %614 = vrot.lane.b32.xlu0 %v590, 57
        %v615 = vpop.permute.xlu0 %614
        %616 = vrot.lane.b32.xlu0 %v591, 57
        %v617 = vpop.permute.xlu0 %616
        %618 = vrot.lane.b32.xlu0 %v592, 57
        %v619 = vpop.permute.xlu0 %618
        %vm620 = vcmask 465920
        %v621 = vsel %vm620, %v611, %v613
        %v622 = vsel %vm620, %v613, %v615
        %v623 = vsel %vm620, %v615, %v617
        %v624 = vsel %vm620, %v617, %v619
        %v629 = vsel %vm601, %v621, 0.0
        %v630 = vsel %vm602, %v622, 0.0
        %v631 = vsel %vm603, %v623, 0.0
        %v632 = vsel %vm604, %v624, 0.0
        %633 = vst [vmem:[#allocation3 + $0xc0] sm:$0xff] %v629
        %634 = vst [vmem:[#allocation3 + $0xc8] sm:$0xff] %v630
        %635 = vst [vmem:[#allocation3 + $0xd0] sm:$0xff] %v631
        %636 = vst [vmem:[#allocation3 + $0xd8] sm:$0xff] %v632
        %v637 = vld [vmem:[#allocation2] sm:$0xff]
        %v638 = vld [vmem:[#allocation2 + $0x8] sm:$0xff]
        %v639 = vld [vmem:[#allocation2 + $0x10] sm:$0xff]
        %v640 = vld [vmem:[#allocation2 + $0x18] sm:$0xff]
        %v641 = vld [vmem:[#allocation2 + $0x20] sm:$0xff]
        %647 = vrot.lane.b32.xlu0 %v637, 56
        %v648 = vpop.permute.xlu0 %647
        %649 = vrot.lane.b32.xlu0 %v638, 56
        %v650 = vpop.permute.xlu0 %649
        %651 = vrot.lane.b32.xlu0 %v639, 56
        %v652 = vpop.permute.xlu0 %651
        %653 = vrot.lane.b32.xlu0 %v640, 56
        %v654 = vpop.permute.xlu0 %653
        %655 = vrot.lane.b32.xlu0 %v641, 56
        %v656 = vpop.permute.xlu0 %655
        %vm657 = vcmask 457728
        %v658 = vsel %vm657, %v648, %v650
        %v659 = vsel %vm657, %v650, %v652
        %v660 = vsel %vm657, %v652, %v654
        %v661 = vsel %vm657, %v654, %v656
        %v666 = vsel %vm597, %v658, 0.0
        %v667 = vsel %vm598, %v659, 0.0
        %v668 = vsel %vm599, %v660, 0.0
        %v669 = vsel %vm600, %v661, 0.0
        %670 = vst [vmem:[#allocation3 + $0xe0] sm:$0xff] %v666
        %671 = vst [vmem:[#allocation3 + $0xe8] sm:$0xff] %v667
        %672 = vst [vmem:[#allocation3 + $0xf0] sm:$0xff] %v668
        %673 = vst [vmem:[#allocation3 + $0xf8] sm:$0xff] %v669
        %v674 = vld [vmem:[#allocation2] sm:$0xff]
        %v675 = vld [vmem:[#allocation2 + $0x8] sm:$0xff]
        %v676 = vld [vmem:[#allocation2 + $0x10] sm:$0xff]
        %v677 = vld [vmem:[#allocation2 + $0x18] sm:$0xff]
        %v678 = vld [vmem:[#allocation2 + $0x20] sm:$0xff]
        %vm679 = vmand %vm597, %vm429
        %vm680 = vmand %vm598, %vm430
        %vm681 = vmand %vm599, %vm431
        %vm682 = vmand %vm600, %vm432
        %688 = vrot.lane.b32.xlu0 %v674, 55
        %v689 = vpop.permute.xlu0 %688
        %690 = vrot.lane.b32.xlu0 %v675, 55
        %v691 = vpop.permute.xlu0 %690
        %692 = vrot.lane.b32.xlu0 %v676, 55
        %v693 = vpop.permute.xlu0 %692
        %694 = vrot.lane.b32.xlu0 %v677, 55
        %v695 = vpop.permute.xlu0 %694
        %696 = vrot.lane.b32.xlu0 %v678, 55
        %v697 = vpop.permute.xlu0 %696
        %vm698 = vcmask 449536
        %v699 = vsel %vm698, %v689, %v691
        %v700 = vsel %vm698, %v691, %v693
        %v701 = vsel %vm698, %v693, %v695
        %v702 = vsel %vm698, %v695, %v697
        %v707 = vsel %vm679, %v699, 0.0
        %v708 = vsel %vm680, %v700, 0.0
        %v709 = vsel %vm681, %v701, 0.0
        %v710 = vsel %vm682, %v702, 0.0
        %711 = vst [vmem:[#allocation3 + $0x100] sm:$0xff] %v707
        %712 = vst [vmem:[#allocation3 + $0x108] sm:$0xff] %v708
        %713 = vst [vmem:[#allocation3 + $0x110] sm:$0xff] %v709
        %714 = vst [vmem:[#allocation3 + $0x118] sm:$0xff] %v710
        %v715 = vld [vmem:[#allocation2] sm:$0xff]
        %v716 = vld [vmem:[#allocation2 + $0x8] sm:$0xff]
        %v717 = vld [vmem:[#allocation2 + $0x10] sm:$0xff]
        %v718 = vld [vmem:[#allocation2 + $0x18] sm:$0xff]
        %v719 = vld [vmem:[#allocation2 + $0x20] sm:$0xff]
        %vm720 = vmand %vm339, %vm343
        %vm721 = vmand %vm340, %vm344
        %vm722 = vmand %vm341, %vm345
        %vm723 = vmand %vm342, %vm346
        %729 = vrot.lane.b32.xlu0 %v715, 9
        %v730 = vpop.permute.xlu0 %729
        %731 = vrot.lane.b32.xlu0 %v716, 9
        %v732 = vpop.permute.xlu0 %731
        %733 = vrot.lane.b32.xlu0 %v717, 9
        %v734 = vpop.permute.xlu0 %733
        %735 = vrot.lane.b32.xlu0 %v718, 9
        %v736 = vpop.permute.xlu0 %735
        %737 = vrot.lane.b32.xlu0 %v719, 9
        %v738 = vpop.permute.xlu0 %737
        %vm739 = vcmask 72704
        %v740 = vsel %vm739, %v730, %v732
        %v741 = vsel %vm739, %v732, %v734
        %v742 = vsel %vm739, %v734, %v736
        %v743 = vsel %vm739, %v736, %v738
        %v748 = vsel %vm720, %v740, 0.0
        %v749 = vsel %vm721, %v741, 0.0
        %v750 = vsel %vm722, %v742, 0.0
        %v751 = vsel %vm723, %v743, 0.0
        %752 = vst [vmem:[#allocation3 + $0x120] sm:$0xff] %v748
        %753 = vst [vmem:[#allocation3 + $0x128] sm:$0xff] %v749
        %754 = vst [vmem:[#allocation3 + $0x130] sm:$0xff] %v750
        %755 = vst [vmem:[#allocation3 + $0x138] sm:$0xff] %v751
        %v756 = vld [vmem:[#allocation2] sm:$0xff]
        %v757 = vld [vmem:[#allocation2 + $0x8] sm:$0xff]
        %v758 = vld [vmem:[#allocation2 + $0x10] sm:$0xff]
        %v759 = vld [vmem:[#allocation2 + $0x18] sm:$0xff]
        %v760 = vld [vmem:[#allocation2 + $0x20] sm:$0xff]
        %766 = vrot.lane.b32.xlu0 %v756, 8
        %v767 = vpop.permute.xlu0 %766
        %768 = vrot.lane.b32.xlu0 %v757, 8
        %v769 = vpop.permute.xlu0 %768
        %770 = vrot.lane.b32.xlu0 %v758, 8
        %v771 = vpop.permute.xlu0 %770
        %772 = vrot.lane.b32.xlu0 %v759, 8
        %v773 = vpop.permute.xlu0 %772
        %774 = vrot.lane.b32.xlu0 %v760, 8
        %v775 = vpop.permute.xlu0 %774
        %vm776 = vcmask 64512
        %v777 = vsel %vm776, %v767, %v769
        %v778 = vsel %vm776, %v769, %v771
        %v779 = vsel %vm776, %v771, %v773
        %v780 = vsel %vm776, %v773, %v775
        %v785 = vsel %vm339, %v777, 0.0
        %v786 = vsel %vm340, %v778, 0.0
        %v787 = vsel %vm341, %v779, 0.0
        %v788 = vsel %vm342, %v780, 0.0
        %789 = vst [vmem:[#allocation3 + $0x140] sm:$0xff] %v785
        %790 = vst [vmem:[#allocation3 + $0x148] sm:$0xff] %v786
        %791 = vst [vmem:[#allocation3 + $0x150] sm:$0xff] %v787
        %792 = vst [vmem:[#allocation3 + $0x158] sm:$0xff] %v788
        %v793 = vld [vmem:[#allocation2] sm:$0xff]
        %v794 = vld [vmem:[#allocation2 + $0x8] sm:$0xff]
        %v795 = vld [vmem:[#allocation2 + $0x10] sm:$0xff]
        %v796 = vld [vmem:[#allocation2 + $0x18] sm:$0xff]
        %v797 = vld [vmem:[#allocation2 + $0x20] sm:$0xff]
        %vm798 = vmand %vm339, %vm429
        %vm799 = vmand %vm340, %vm430
        %vm800 = vmand %vm341, %vm431
        %vm801 = vmand %vm342, %vm432
        %807 = vrot.lane.b32.xlu0 %v793, 7
        %v808 = vpop.permute.xlu0 %807
        %809 = vrot.lane.b32.xlu0 %v794, 7
        %v810 = vpop.permute.xlu0 %809
        %811 = vrot.lane.b32.xlu0 %v795, 7
        %v812 = vpop.permute.xlu0 %811
        %813 = vrot.lane.b32.xlu0 %v796, 7
        %v814 = vpop.permute.xlu0 %813
        %815 = vrot.lane.b32.xlu0 %v797, 7
        %v816 = vpop.permute.xlu0 %815
        %vm817 = vcmask 56320
        %v818 = vsel %vm817, %v808, %v810
        %v819 = vsel %vm817, %v810, %v812
        %v820 = vsel %vm817, %v812, %v814
        %v821 = vsel %vm817, %v814, %v816
        %v826 = vsel %vm798, %v818, 0.0
        %v827 = vsel %vm799, %v819, 0.0
        %v828 = vsel %vm800, %v820, 0.0
        %v829 = vsel %vm801, %v821, 0.0
        %830 = vst [vmem:[#allocation3 + $0x160] sm:$0xff] %v826
        %831 = vst [vmem:[#allocation3 + $0x168] sm:$0xff] %v827
        %832 = vst [vmem:[#allocation3 + $0x170] sm:$0xff] %v828
        %833 = vst [vmem:[#allocation3 + $0x178] sm:$0xff] %v829
        %v834 = vld [vmem:[#allocation2] sm:$0xff]
        %v835 = vld [vmem:[#allocation2 + $0x8] sm:$0xff]
        %v836 = vld [vmem:[#allocation2 + $0x10] sm:$0xff]
        %v837 = vld [vmem:[#allocation2 + $0x18] sm:$0xff]
        %v838 = vld [vmem:[#allocation2 + $0x20] sm:$0xff]
        %844 = vrot.lane.b32.xlu0 %v834, 1
        %v845 = vpop.permute.xlu0 %844
        %846 = vrot.lane.b32.xlu0 %v835, 1
        %v847 = vpop.permute.xlu0 %846
        %848 = vrot.lane.b32.xlu0 %v836, 1
        %v849 = vpop.permute.xlu0 %848
        %850 = vrot.lane.b32.xlu0 %v837, 1
        %v851 = vpop.permute.xlu0 %850
        %852 = vrot.lane.b32.xlu0 %v838, 1
        %v853 = vpop.permute.xlu0 %852
        %vm854 = vcmask 7168
        %v855 = vsel %vm854, %v845, %v847
        %v856 = vsel %vm854, %v847, %v849
        %v857 = vsel %vm854, %v849, %v851
        %v858 = vsel %vm854, %v851, %v853
        %v863 = vsel %vm343, %v855, 0.0
        %v864 = vsel %vm344, %v856, 0.0
        %v865 = vsel %vm345, %v857, 0.0
        %v866 = vsel %vm346, %v858, 0.0
        %867 = vst [vmem:[#allocation3 + $0x180] sm:$0xff] %v863
        %868 = vst [vmem:[#allocation3 + $0x188] sm:$0xff] %v864
        %869 = vst [vmem:[#allocation3 + $0x190] sm:$0xff] %v865
        %870 = vst [vmem:[#allocation3 + $0x198] sm:$0xff] %v866
        %v871 = vld [vmem:[#allocation2 + $0x8] sm:$0xff]
        %v872 = vld [vmem:[#allocation2 + $0x10] sm:$0xff]
        %v873 = vld [vmem:[#allocation2 + $0x18] sm:$0xff]
        %v874 = vld [vmem:[#allocation2 + $0x20] sm:$0xff]
        %875 = vst [vmem:[#allocation3 + $0x1a0] sm:$0xff] %v871
        %876 = vst [vmem:[#allocation3 + $0x1a8] sm:$0xff] %v872
        %877 = vst [vmem:[#allocation3 + $0x1b0] sm:$0xff] %v873
        %878 = vst [vmem:[#allocation3 + $0x1b8] sm:$0xff] %v874
        %v879 = vld [vmem:[#allocation2 + $0x8] sm:$0xff]
        %v880 = vld [vmem:[#allocation2 + $0x10] sm:$0xff]
        %v881 = vld [vmem:[#allocation2 + $0x18] sm:$0xff]
        %v882 = vld [vmem:[#allocation2 + $0x20] sm:$0xff]
        %v883 = vld [vmem:[#allocation2 + $0x28] sm:$0xff]
        %889 = vrot.lane.b32.xlu0 %v879, 127
        %v890 = vpop.permute.xlu0 %889
        %891 = vrot.lane.b32.xlu0 %v880, 127
        %v892 = vpop.permute.xlu0 %891
        %893 = vrot.lane.b32.xlu0 %v881, 127
        %v894 = vpop.permute.xlu0 %893
        %895 = vrot.lane.b32.xlu0 %v882, 127
        %v896 = vpop.permute.xlu0 %895
        %897 = vrot.lane.b32.xlu0 %v883, 127
        %v898 = vpop.permute.xlu0 %897
        %vm899 = vcmask 1039360
        %v900 = vsel %vm899, %v890, %v892
        %v901 = vsel %vm899, %v892, %v894
        %v902 = vsel %vm899, %v894, %v896
        %v903 = vsel %vm899, %v896, %v898
        %v908 = vsel %vm429, %v900, 0.0
        %v909 = vsel %vm430, %v901, 0.0
        %v910 = vsel %vm431, %v902, 0.0
        %v911 = vsel %vm432, %v903, 0.0
        %912 = vst [vmem:[#allocation3 + $0x1c0] sm:$0xff] %v908
        %913 = vst [vmem:[#allocation3 + $0x1c8] sm:$0xff] %v909
        %914 = vst [vmem:[#allocation3 + $0x1d0] sm:$0xff] %v910
        %915 = vst [vmem:[#allocation3 + $0x1d8] sm:$0xff] %v911
        %v916 = vld [vmem:[#allocation2 + $0x8] sm:$0xff]
        %v917 = vld [vmem:[#allocation2 + $0x10] sm:$0xff]
        %v918 = vld [vmem:[#allocation2 + $0x18] sm:$0xff]
        %v919 = vld [vmem:[#allocation2 + $0x20] sm:$0xff]
        %v920 = vld [vmem:[#allocation2 + $0x28] sm:$0xff]
        %vm921 = vmand %vm593, %vm343
        %vm922 = vmand %vm594, %vm344
        %vm923 = vmand %vm595, %vm345
        %vm924 = vmand %vm596, %vm346
        %930 = vrot.lane.b32.xlu0 %v916, 121
        %v931 = vpop.permute.xlu0 %930
        %932 = vrot.lane.b32.xlu0 %v917, 121
        %v933 = vpop.permute.xlu0 %932
        %934 = vrot.lane.b32.xlu0 %v918, 121
        %v935 = vpop.permute.xlu0 %934
        %936 = vrot.lane.b32.xlu0 %v919, 121
        %v937 = vpop.permute.xlu0 %936
        %938 = vrot.lane.b32.xlu0 %v920, 121
        %v939 = vpop.permute.xlu0 %938
        %vm940 = vcmask 990208
        %v941 = vsel %vm940, %v931, %v933
        %v942 = vsel %vm940, %v933, %v935
        %v943 = vsel %vm940, %v935, %v937
        %v944 = vsel %vm940, %v937, %v939
        %v949 = vsel %vm921, %v941, 0.0
        %v950 = vsel %vm922, %v942, 0.0
        %v951 = vsel %vm923, %v943, 0.0
        %v952 = vsel %vm924, %v944, 0.0
        %953 = vst [vmem:[#allocation3 + $0x1e0] sm:$0xff] %v949
        %954 = vst [vmem:[#allocation3 + $0x1e8] sm:$0xff] %v950
        %955 = vst [vmem:[#allocation3 + $0x1f0] sm:$0xff] %v951
        %956 = vst [vmem:[#allocation3 + $0x1f8] sm:$0xff] %v952
        %v957 = vld [vmem:[#allocation2 + $0x8] sm:$0xff]
        %v958 = vld [vmem:[#allocation2 + $0x10] sm:$0xff]
        %v959 = vld [vmem:[#allocation2 + $0x18] sm:$0xff]
        %v960 = vld [vmem:[#allocation2 + $0x20] sm:$0xff]
        %v961 = vld [vmem:[#allocation2 + $0x28] sm:$0xff]
        %967 = vrot.lane.b32.xlu0 %v957, 120
        %v968 = vpop.permute.xlu0 %967
        %969 = vrot.lane.b32.xlu0 %v958, 120
        %v970 = vpop.permute.xlu0 %969
        %971 = vrot.lane.b32.xlu0 %v959, 120
        %v972 = vpop.permute.xlu0 %971
        %973 = vrot.lane.b32.xlu0 %v960, 120
        %v974 = vpop.permute.xlu0 %973
        %975 = vrot.lane.b32.xlu0 %v961, 120
        %v976 = vpop.permute.xlu0 %975
        %vm977 = vcmask 982016
        %v978 = vsel %vm977, %v968, %v970
        %v979 = vsel %vm977, %v970, %v972
        %v980 = vsel %vm977, %v972, %v974
        %v981 = vsel %vm977, %v974, %v976
        %v986 = vsel %vm593, %v978, 0.0
        %v987 = vsel %vm594, %v979, 0.0
        %v988 = vsel %vm595, %v980, 0.0
        %v989 = vsel %vm596, %v981, 0.0
        %990 = vst [vmem:[#allocation3 + $0x200] sm:$0xff] %v986
        %991 = vst [vmem:[#allocation3 + $0x208] sm:$0xff] %v987
        %992 = vst [vmem:[#allocation3 + $0x210] sm:$0xff] %v988
        %993 = vst [vmem:[#allocation3 + $0x218] sm:$0xff] %v989
        %v994 = vld [vmem:[#allocation2 + $0x8] sm:$0xff]
        %v995 = vld [vmem:[#allocation2 + $0x10] sm:$0xff]
        %v996 = vld [vmem:[#allocation2 + $0x18] sm:$0xff]
        %v997 = vld [vmem:[#allocation2 + $0x20] sm:$0xff]
        %v998 = vld [vmem:[#allocation2 + $0x28] sm:$0xff]
        %vm999 = vmand %vm593, %vm429
        %vm1000 = vmand %vm594, %vm430
        %vm1001 = vmand %vm595, %vm431
        %vm1002 = vmand %vm596, %vm432
        %1008 = vrot.lane.b32.xlu0 %v994, 119
        %v1009 = vpop.permute.xlu0 %1008
        %1010 = vrot.lane.b32.xlu0 %v995, 119
        %v1011 = vpop.permute.xlu0 %1010
        %1012 = vrot.lane.b32.xlu0 %v996, 119
        %v1013 = vpop.permute.xlu0 %1012
        %1014 = vrot.lane.b32.xlu0 %v997, 119
        %v1015 = vpop.permute.xlu0 %1014
        %1016 = vrot.lane.b32.xlu0 %v998, 119
        %v1017 = vpop.permute.xlu0 %1016
        %vm1018 = vcmask 973824
        %v1019 = vsel %vm1018, %v1009, %v1011
        %v1020 = vsel %vm1018, %v1011, %v1013
        %v1021 = vsel %vm1018, %v1013, %v1015
        %v1022 = vsel %vm1018, %v1015, %v1017
        %v1027 = vsel %vm999, %v1019, 0.0
        %v1028 = vsel %vm1000, %v1020, 0.0
        %v1029 = vsel %vm1001, %v1021, 0.0
        %v1030 = vsel %vm1002, %v1022, 0.0
        %1031 = vst [vmem:[#allocation3 + $0x220] sm:$0xff] %v1027
        %1032 = vst [vmem:[#allocation3 + $0x228] sm:$0xff] %v1028
        %1033 = vst [vmem:[#allocation3 + $0x230] sm:$0xff] %v1029
        %1034 = vst [vmem:[#allocation3 + $0x238] sm:$0xff] %v1030
        %v1035 = vld [vmem:[#allocation2 + $0x8] sm:$0xff]
        %v1036 = vld [vmem:[#allocation2 + $0x10] sm:$0xff]
        %v1037 = vld [vmem:[#allocation2 + $0x18] sm:$0xff]
        %v1038 = vld [vmem:[#allocation2 + $0x20] sm:$0xff]
        %v1039 = vld [vmem:[#allocation2 + $0x28] sm:$0xff]
        %vm1040 = vcmp.le.s32.totalorder %v316, 6
        %vm1041 = vcmp.le.s32.totalorder %v317, 6
        %vm1042 = vcmp.le.s32.totalorder %v318, 6
        %vm1043 = vcmp.le.s32.totalorder %v319, 6
        %vm1044 = vmand %vm1040, %vm339
        %vm1045 = vmand %vm1041, %vm340
        %vm1046 = vmand %vm1042, %vm341
        %vm1047 = vmand %vm1043, %vm342
        %vm1048 = vmand %vm1044, %vm343
        %vm1049 = vmand %vm1045, %vm344
        %vm1050 = vmand %vm1046, %vm345
        %vm1051 = vmand %vm1047, %vm346
        %1057 = vrot.lane.b32.xlu0 %v1035, 73
        %v1058 = vpop.permute.xlu0 %1057
        %1059 = vrot.lane.b32.xlu0 %v1036, 73
        %v1060 = vpop.permute.xlu0 %1059
        %1061 = vrot.lane.b32.xlu0 %v1037, 73
        %v1062 = vpop.permute.xlu0 %1061
        %1063 = vrot.lane.b32.xlu0 %v1038, 73
        %v1064 = vpop.permute.xlu0 %1063
        %1065 = vrot.lane.b32.xlu0 %v1039, 73
        %v1066 = vpop.permute.xlu0 %1065
        %v1067 = vsel %vm370, %v1058, %v1060
        %v1068 = vsel %vm370, %v1060, %v1062
        %v1069 = vsel %vm370, %v1062, %v1064
        %v1070 = vsel %vm370, %v1064, %v1066
        %v1075 = vsel %vm1048, %v1067, 0.0
        %v1076 = vsel %vm1049, %v1068, 0.0
        %v1077 = vsel %vm1050, %v1069, 0.0
        %v1078 = vsel %vm1051, %v1070, 0.0
        %1079 = vst [vmem:[#allocation3 + $0x240] sm:$0xff] %v1075
        %1080 = vst [vmem:[#allocation3 + $0x248] sm:$0xff] %v1076
        %1081 = vst [vmem:[#allocation3 + $0x250] sm:$0xff] %v1077
        %1082 = vst [vmem:[#allocation3 + $0x258] sm:$0xff] %v1078
        %v1083 = vld [vmem:[#allocation2 + $0x8] sm:$0xff]
        %v1084 = vld [vmem:[#allocation2 + $0x10] sm:$0xff]
        %v1085 = vld [vmem:[#allocation2 + $0x18] sm:$0xff]
        %v1086 = vld [vmem:[#allocation2 + $0x20] sm:$0xff]
        %v1087 = vld [vmem:[#allocation2 + $0x28] sm:$0xff]
        %1093 = vrot.lane.b32.xlu0 %v1083, 72
        %v1094 = vpop.permute.xlu0 %1093
        %1095 = vrot.lane.b32.xlu0 %v1084, 72
        %v1096 = vpop.permute.xlu0 %1095
        %1097 = vrot.lane.b32.xlu0 %v1085, 72
        %v1098 = vpop.permute.xlu0 %1097
        %1099 = vrot.lane.b32.xlu0 %v1086, 72
        %v1100 = vpop.permute.xlu0 %1099
        %1101 = vrot.lane.b32.xlu0 %v1087, 72
        %v1102 = vpop.permute.xlu0 %1101
        %v1103 = vsel %vm407, %v1094, %v1096
        %v1104 = vsel %vm407, %v1096, %v1098
        %v1105 = vsel %vm407, %v1098, %v1100
        %v1106 = vsel %vm407, %v1100, %v1102
        %v1111 = vsel %vm1044, %v1103, 0.0
        %v1112 = vsel %vm1045, %v1104, 0.0
        %v1113 = vsel %vm1046, %v1105, 0.0
        %v1114 = vsel %vm1047, %v1106, 0.0
        %1115 = vst [vmem:[#allocation3 + $0x260] sm:$0xff] %v1111
        %1116 = vst [vmem:[#allocation3 + $0x268] sm:$0xff] %v1112
        %1117 = vst [vmem:[#allocation3 + $0x270] sm:$0xff] %v1113
        %1118 = vst [vmem:[#allocation3 + $0x278] sm:$0xff] %v1114
        %v1119 = vld [vmem:[#allocation2 + $0x8] sm:$0xff]
        %v1120 = vld [vmem:[#allocation2 + $0x10] sm:$0xff]
        %v1121 = vld [vmem:[#allocation2 + $0x18] sm:$0xff]
        %v1122 = vld [vmem:[#allocation2 + $0x20] sm:$0xff]
        %v1123 = vld [vmem:[#allocation2 + $0x28] sm:$0xff]
        %vm1124 = vmand %vm1044, %vm429
        %vm1125 = vmand %vm1045, %vm430
        %vm1126 = vmand %vm1046, %vm431
        %vm1127 = vmand %vm1047, %vm432
        %1133 = vrot.lane.b32.xlu0 %v1119, 71
        %v1134 = vpop.permute.xlu0 %1133
        %1135 = vrot.lane.b32.xlu0 %v1120, 71
        %v1136 = vpop.permute.xlu0 %1135
        %1137 = vrot.lane.b32.xlu0 %v1121, 71
        %v1138 = vpop.permute.xlu0 %1137
        %1139 = vrot.lane.b32.xlu0 %v1122, 71
        %v1140 = vpop.permute.xlu0 %1139
        %1141 = vrot.lane.b32.xlu0 %v1123, 71
        %v1142 = vpop.permute.xlu0 %1141
        %v1143 = vsel %vm452, %v1134, %v1136
        %v1144 = vsel %vm452, %v1136, %v1138
        %v1145 = vsel %vm452, %v1138, %v1140
        %v1146 = vsel %vm452, %v1140, %v1142
        %v1151 = vsel %vm1124, %v1143, 0.0
        %v1152 = vsel %vm1125, %v1144, 0.0
        %v1153 = vsel %vm1126, %v1145, 0.0
        %v1154 = vsel %vm1127, %v1146, 0.0
        %1155 = vst [vmem:[#allocation3 + $0x280] sm:$0xff] %v1151
        %1156 = vst [vmem:[#allocation3 + $0x288] sm:$0xff] %v1152
        %1157 = vst [vmem:[#allocation3 + $0x290] sm:$0xff] %v1153
        %1158 = vst [vmem:[#allocation3 + $0x298] sm:$0xff] %v1154
        %v1159 = vld [vmem:[#allocation2 + $0x8] sm:$0xff]
        %v1160 = vld [vmem:[#allocation2 + $0x10] sm:$0xff]
        %v1161 = vld [vmem:[#allocation2 + $0x18] sm:$0xff]
        %v1162 = vld [vmem:[#allocation2 + $0x20] sm:$0xff]
        %v1163 = vld [vmem:[#allocation2 + $0x28] sm:$0xff]
        %vm1164 = vmand %vm1040, %vm343
        %vm1165 = vmand %vm1041, %vm344
        %vm1166 = vmand %vm1042, %vm345
        %vm1167 = vmand %vm1043, %vm346
        %1173 = vrot.lane.b32.xlu0 %v1159, 65
        %v1174 = vpop.permute.xlu0 %1173
        %1175 = vrot.lane.b32.xlu0 %v1160, 65
        %v1176 = vpop.permute.xlu0 %1175
        %1177 = vrot.lane.b32.xlu0 %v1161, 65
        %v1178 = vpop.permute.xlu0 %1177
        %1179 = vrot.lane.b32.xlu0 %v1162, 65
        %v1180 = vpop.permute.xlu0 %1179
        %1181 = vrot.lane.b32.xlu0 %v1163, 65
        %v1182 = vpop.permute.xlu0 %1181
        %v1183 = vsel %vm493, %v1174, %v1176
        %v1184 = vsel %vm493, %v1176, %v1178
        %v1185 = vsel %vm493, %v1178, %v1180
        %v1186 = vsel %vm493, %v1180, %v1182
        %v1191 = vsel %vm1164, %v1183, 0.0
        %v1192 = vsel %vm1165, %v1184, 0.0
        %v1193 = vsel %vm1166, %v1185, 0.0
        %v1194 = vsel %vm1167, %v1186, 0.0
        %1195 = vst [vmem:[#allocation3 + $0x2a0] sm:$0xff] %v1191
        %1196 = vst [vmem:[#allocation3 + $0x2a8] sm:$0xff] %v1192
        %1197 = vst [vmem:[#allocation3 + $0x2b0] sm:$0xff] %v1193
        %1198 = vst [vmem:[#allocation3 + $0x2b8] sm:$0xff] %v1194
        %v1199 = vld [vmem:[#allocation2 + $0x8] sm:$0xff]
        %v1200 = vld [vmem:[#allocation2 + $0x10] sm:$0xff]
        %v1201 = vld [vmem:[#allocation2 + $0x18] sm:$0xff]
        %v1202 = vld [vmem:[#allocation2 + $0x20] sm:$0xff]
        %v1203 = vld [vmem:[#allocation2 + $0x28] sm:$0xff]
        %1209 = vrot.lane.b32.xlu0 %v1199, 64
        %v1210 = vpop.permute.xlu0 %1209
        %1211 = vrot.lane.b32.xlu0 %v1200, 64
        %v1212 = vpop.permute.xlu0 %1211
        %1213 = vrot.lane.b32.xlu0 %v1201, 64
        %v1214 = vpop.permute.xlu0 %1213
        %1215 = vrot.lane.b32.xlu0 %v1202, 64
        %v1216 = vpop.permute.xlu0 %1215
        %1217 = vrot.lane.b32.xlu0 %v1203, 64
        %v1218 = vpop.permute.xlu0 %1217
        %v1219 = vsel %vm530, %v1210, %v1212
        %v1220 = vsel %vm530, %v1212, %v1214
        %v1221 = vsel %vm530, %v1214, %v1216
        %v1222 = vsel %vm530, %v1216, %v1218
        %v1227 = vsel %vm1040, %v1219, 0.0
        %v1228 = vsel %vm1041, %v1220, 0.0
        %v1229 = vsel %vm1042, %v1221, 0.0
        %v1230 = vsel %vm1043, %v1222, 0.0
        %1231 = vst [vmem:[#allocation3 + $0x2c0] sm:$0xff] %v1227
        %1232 = vst [vmem:[#allocation3 + $0x2c8] sm:$0xff] %v1228
        %1233 = vst [vmem:[#allocation3 + $0x2d0] sm:$0xff] %v1229
        %1234 = vst [vmem:[#allocation3 + $0x2d8] sm:$0xff] %v1230
        %v1235 = vld [vmem:[#allocation2 + $0x8] sm:$0xff]
        %v1236 = vld [vmem:[#allocation2 + $0x10] sm:$0xff]
        %v1237 = vld [vmem:[#allocation2 + $0x18] sm:$0xff]
        %v1238 = vld [vmem:[#allocation2 + $0x20] sm:$0xff]
        %v1239 = vld [vmem:[#allocation2 + $0x28] sm:$0xff]
        %vm1240 = vmand %vm1040, %vm429
        %vm1241 = vmand %vm1041, %vm430
        %vm1242 = vmand %vm1042, %vm431
        %vm1243 = vmand %vm1043, %vm432
        %1249 = vrot.lane.b32.xlu0 %v1235, 63
        %v1250 = vpop.permute.xlu0 %1249
        %1251 = vrot.lane.b32.xlu0 %v1236, 63
        %v1252 = vpop.permute.xlu0 %1251
        %1253 = vrot.lane.b32.xlu0 %v1237, 63
        %v1254 = vpop.permute.xlu0 %1253
        %1255 = vrot.lane.b32.xlu0 %v1238, 63
        %v1256 = vpop.permute.xlu0 %1255
        %1257 = vrot.lane.b32.xlu0 %v1239, 63
        %v1258 = vpop.permute.xlu0 %1257
        %v1259 = vsel %vm571, %v1250, %v1252
        %v1260 = vsel %vm571, %v1252, %v1254
        %v1261 = vsel %vm571, %v1254, %v1256
        %v1262 = vsel %vm571, %v1256, %v1258
        %v1267 = vsel %vm1240, %v1259, 0.0
        %v1268 = vsel %vm1241, %v1260, 0.0
        %v1269 = vsel %vm1242, %v1261, 0.0
        %v1270 = vsel %vm1243, %v1262, 0.0
        %1271 = vst [vmem:[#allocation3 + $0x2e0] sm:$0xff] %v1267
        %1272 = vst [vmem:[#allocation3 + $0x2e8] sm:$0xff] %v1268
        %1273 = vst [vmem:[#allocation3 + $0x2f0] sm:$0xff] %v1269
        %1274 = vst [vmem:[#allocation3 + $0x2f8] sm:$0xff] %v1270
        %v1275 = vld [vmem:[#allocation2 + $0x8] sm:$0xff]
        %v1276 = vld [vmem:[#allocation2 + $0x10] sm:$0xff]
        %v1277 = vld [vmem:[#allocation2 + $0x18] sm:$0xff]
        %v1278 = vld [vmem:[#allocation2 + $0x20] sm:$0xff]
        %v1279 = vld [vmem:[#allocation2 + $0x28] sm:$0xff]
        %vm1280 = vmand %vm1040, %vm593
        %vm1281 = vmand %vm1041, %vm594
        %vm1282 = vmand %vm1042, %vm595
        %vm1283 = vmand %vm1043, %vm596
        %vm1284 = vmand %vm1280, %vm343
        %vm1285 = vmand %vm1281, %vm344
        %vm1286 = vmand %vm1282, %vm345
        %vm1287 = vmand %vm1283, %vm346
        %1293 = vrot.lane.b32.xlu0 %v1275, 57
        %v1294 = vpop.permute.xlu0 %1293
        %1295 = vrot.lane.b32.xlu0 %v1276, 57
        %v1296 = vpop.permute.xlu0 %1295
        %1297 = vrot.lane.b32.xlu0 %v1277, 57
        %v1298 = vpop.permute.xlu0 %1297
        %1299 = vrot.lane.b32.xlu0 %v1278, 57
        %v1300 = vpop.permute.xlu0 %1299
        %1301 = vrot.lane.b32.xlu0 %v1279, 57
        %v1302 = vpop.permute.xlu0 %1301
        %v1303 = vsel %vm620, %v1294, %v1296
        %v1304 = vsel %vm620, %v1296, %v1298
        %v1305 = vsel %vm620, %v1298, %v1300
        %v1306 = vsel %vm620, %v1300, %v1302
        %v1311 = vsel %vm1284, %v1303, 0.0
        %v1312 = vsel %vm1285, %v1304, 0.0
        %v1313 = vsel %vm1286, %v1305, 0.0
        %v1314 = vsel %vm1287, %v1306, 0.0
        %1315 = vst [vmem:[#allocation3 + $0x300] sm:$0xff] %v1311
        %1316 = vst [vmem:[#allocation3 + $0x308] sm:$0xff] %v1312
        %1317 = vst [vmem:[#allocation3 + $0x310] sm:$0xff] %v1313
        %1318 = vst [vmem:[#allocation3 + $0x318] sm:$0xff] %v1314
        %v1319 = vld [vmem:[#allocation2 + $0x8] sm:$0xff]
        %v1320 = vld [vmem:[#allocation2 + $0x10] sm:$0xff]
        %v1321 = vld [vmem:[#allocation2 + $0x18] sm:$0xff]
        %v1322 = vld [vmem:[#allocation2 + $0x20] sm:$0xff]
        %v1323 = vld [vmem:[#allocation2 + $0x28] sm:$0xff]
        %1329 = vrot.lane.b32.xlu0 %v1319, 56
        %v1330 = vpop.permute.xlu0 %1329
        %1331 = vrot.lane.b32.xlu0 %v1320, 56
        %v1332 = vpop.permute.xlu0 %1331
        %1333 = vrot.lane.b32.xlu0 %v1321, 56
        %v1334 = vpop.permute.xlu0 %1333
        %1335 = vrot.lane.b32.xlu0 %v1322, 56
        %v1336 = vpop.permute.xlu0 %1335
        %1337 = vrot.lane.b32.xlu0 %v1323, 56
        %v1338 = vpop.permute.xlu0 %1337
        %v1339 = vsel %vm657, %v1330, %v1332
        %v1340 = vsel %vm657, %v1332, %v1334
        %v1341 = vsel %vm657, %v1334, %v1336
        %v1342 = vsel %vm657, %v1336, %v1338
        %v1347 = vsel %vm1280, %v1339, 0.0
        %v1348 = vsel %vm1281, %v1340, 0.0
        %v1349 = vsel %vm1282, %v1341, 0.0
        %v1350 = vsel %vm1283, %v1342, 0.0
        %1351 = vst [vmem:[#allocation3 + $0x320] sm:$0xff] %v1347
        %1352 = vst [vmem:[#allocation3 + $0x328] sm:$0xff] %v1348
        %1353 = vst [vmem:[#allocation3 + $0x330] sm:$0xff] %v1349
        %1354 = vst [vmem:[#allocation3 + $0x338] sm:$0xff] %v1350
        %v1355 = vld [vmem:[#allocation2 + $0x8] sm:$0xff]
        %v1356 = vld [vmem:[#allocation2 + $0x10] sm:$0xff]
        %v1357 = vld [vmem:[#allocation2 + $0x18] sm:$0xff]
        %v1358 = vld [vmem:[#allocation2 + $0x20] sm:$0xff]
        %v1359 = vld [vmem:[#allocation2 + $0x28] sm:$0xff]
        %vm1360 = vmand %vm1280, %vm429
        %vm1361 = vmand %vm1281, %vm430
        %vm1362 = vmand %vm1282, %vm431
        %vm1363 = vmand %vm1283, %vm432
        %1369 = vrot.lane.b32.xlu0 %v1355, 55
        %v1370 = vpop.permute.xlu0 %1369
        %1371 = vrot.lane.b32.xlu0 %v1356, 55
        %v1372 = vpop.permute.xlu0 %1371
        %1373 = vrot.lane.b32.xlu0 %v1357, 55
        %v1374 = vpop.permute.xlu0 %1373
        %1375 = vrot.lane.b32.xlu0 %v1358, 55
        %v1376 = vpop.permute.xlu0 %1375
        %1377 = vrot.lane.b32.xlu0 %v1359, 55
        %v1378 = vpop.permute.xlu0 %1377
        %v1379 = vsel %vm698, %v1370, %v1372
        %v1380 = vsel %vm698, %v1372, %v1374
        %v1381 = vsel %vm698, %v1374, %v1376
        %v1382 = vsel %vm698, %v1376, %v1378
        %v1387 = vsel %vm1360, %v1379, 0.0
        %v1388 = vsel %vm1361, %v1380, 0.0
        %v1389 = vsel %vm1362, %v1381, 0.0
        %v1390 = vsel %vm1363, %v1382, 0.0
        %1391 = vst [vmem:[#allocation3 + $0x340] sm:$0xff] %v1387
        %1392 = vst [vmem:[#allocation3 + $0x348] sm:$0xff] %v1388
        %1393 = vst [vmem:[#allocation3 + $0x350] sm:$0xff] %v1389
        %1394 = vst [vmem:[#allocation3 + $0x358] sm:$0xff] %v1390
        %v1395 = vld [vmem:[%s1] sm:$0xff]
        %v1396 = vld [vmem:[%s1 + $0x8] sm:$0xff]
        %v1397 = vld [vmem:[#allocation3] sm:$0xff]
        %v1398 = vld [vmem:[#allocation3 + $0x8] sm:$0xff]
        %v1399 = vld [vmem:[#allocation3 + $0x10] sm:$0xff]
        %v1400 = vld [vmem:[#allocation3 + $0x18] sm:$0xff]
        %v1401 = vld [vmem:[#allocation3 + $0x20] sm:$0xff]
        %v1402 = vld [vmem:[#allocation3 + $0x28] sm:$0xff]
        %v1403 = vld [vmem:[#allocation3 + $0x30] sm:$0xff]
        %v1404 = vld [vmem:[#allocation3 + $0x38] sm:$0xff]
        %v1405 = vld [vmem:[#allocation3 + $0x40] sm:$0xff]
        %v1406 = vld [vmem:[#allocation3 + $0x48] sm:$0xff]
        %v1407 = vld [vmem:[#allocation3 + $0x50] sm:$0xff]
        %v1408 = vld [vmem:[#allocation3 + $0x58] sm:$0xff]
        %v1409 = vld [vmem:[#allocation3 + $0x60] sm:$0xff]
        %v1410 = vld [vmem:[#allocation3 + $0x68] sm:$0xff]
        %v1411 = vld [vmem:[#allocation3 + $0x70] sm:$0xff]
        %v1412 = vld [vmem:[#allocation3 + $0x78] sm:$0xff]
        %v1413 = vld [vmem:[#allocation3 + $0x80] sm:$0xff]
        %v1414 = vld [vmem:[#allocation3 + $0x88] sm:$0xff]
        %v1415 = vld [vmem:[#allocation3 + $0x90] sm:$0xff]
        %v1416 = vld [vmem:[#allocation3 + $0x98] sm:$0xff]
        %v1417 = vld [vmem:[#allocation3 + $0xa0] sm:$0xff]
        %v1418 = vld [vmem:[#allocation3 + $0xa8] sm:$0xff]
        %v1419 = vld [vmem:[#allocation3 + $0xb0] sm:$0xff]
        %v1420 = vld [vmem:[#allocation3 + $0xb8] sm:$0xff]
        %v1421 = vld [vmem:[#allocation3 + $0xc0] sm:$0xff]
        %v1422 = vld [vmem:[#allocation3 + $0xc8] sm:$0xff]
        %v1423 = vld [vmem:[#allocation3 + $0xd0] sm:$0xff]
        %v1424 = vld [vmem:[#allocation3 + $0xd8] sm:$0xff]
        %v1425 = vld [vmem:[#allocation3 + $0xe0] sm:$0xff]
        %v1426 = vld [vmem:[#allocation3 + $0xe8] sm:$0xff]
        %v1427 = vld [vmem:[#allocation3 + $0xf0] sm:$0xff]
        %v1428 = vld [vmem:[#allocation3 + $0xf8] sm:$0xff]
        %v1429 = vld [vmem:[#allocation3 + $0x100] sm:$0xff]
        %v1430 = vld [vmem:[#allocation3 + $0x108] sm:$0xff]
        %v1431 = vld [vmem:[#allocation3 + $0x110] sm:$0xff]
        %v1432 = vld [vmem:[#allocation3 + $0x118] sm:$0xff]
        %v1433 = vld [vmem:[#allocation3 + $0x120] sm:$0xff]
        %v1434 = vld [vmem:[#allocation3 + $0x128] sm:$0xff]
        %v1435 = vld [vmem:[#allocation3 + $0x130] sm:$0xff]
        %v1436 = vld [vmem:[#allocation3 + $0x138] sm:$0xff]
        %v1437 = vld [vmem:[#allocation3 + $0x140] sm:$0xff]
        %v1438 = vld [vmem:[#allocation3 + $0x148] sm:$0xff]
        %v1439 = vld [vmem:[#allocation3 + $0x150] sm:$0xff]
        %v1440 = vld [vmem:[#allocation3 + $0x158] sm:$0xff]
        %v1441 = vld [vmem:[#allocation3 + $0x160] sm:$0xff]
        %v1442 = vld [vmem:[#allocation3 + $0x168] sm:$0xff]
        %v1443 = vld [vmem:[#allocation3 + $0x170] sm:$0xff]
        %v1444 = vld [vmem:[#allocation3 + $0x178] sm:$0xff]
        %v1445 = vld [vmem:[#allocation3 + $0x180] sm:$0xff]
        %v1446 = vld [vmem:[#allocation3 + $0x188] sm:$0xff]
        %v1447 = vld [vmem:[#allocation3 + $0x190] sm:$0xff]
        %v1448 = vld [vmem:[#allocation3 + $0x198] sm:$0xff]
        %v1449 = vld [vmem:[#allocation3 + $0x1a0] sm:$0xff]
        %v1450 = vld [vmem:[#allocation3 + $0x1a8] sm:$0xff]
        %v1451 = vld [vmem:[#allocation3 + $0x1b0] sm:$0xff]
        %v1452 = vld [vmem:[#allocation3 + $0x1b8] sm:$0xff]
        %v1453 = vld [vmem:[#allocation3 + $0x1c0] sm:$0xff]
        %v1454 = vld [vmem:[#allocation3 + $0x1c8] sm:$0xff]
        %v1455 = vld [vmem:[#allocation3 + $0x1d0] sm:$0xff]
        %v1456 = vld [vmem:[#allocation3 + $0x1d8] sm:$0xff]
        %v1457 = vld [vmem:[#allocation3 + $0x1e0] sm:$0xff]
        %v1458 = vld [vmem:[#allocation3 + $0x1e8] sm:$0xff]
        %v1459 = vld [vmem:[#allocation3 + $0x1f0] sm:$0xff]
        %v1460 = vld [vmem:[#allocation3 + $0x1f8] sm:$0xff]
        %v1461 = vld [vmem:[#allocation3 + $0x200] sm:$0xff]
        %v1462 = vld [vmem:[#allocation3 + $0x208] sm:$0xff]
        %v1463 = vld [vmem:[#allocation3 + $0x210] sm:$0xff]
        %v1464 = vld [vmem:[#allocation3 + $0x218] sm:$0xff]
        %v1465 = vld [vmem:[#allocation3 + $0x220] sm:$0xff]
        %v1466 = vld [vmem:[#allocation3 + $0x228] sm:$0xff]
        %v1467 = vld [vmem:[#allocation3 + $0x230] sm:$0xff]
        %v1468 = vld [vmem:[#allocation3 + $0x238] sm:$0xff]
        %v1469 = vld [vmem:[#allocation3 + $0x240] sm:$0xff]
        %v1470 = vld [vmem:[#allocation3 + $0x248] sm:$0xff]
        %v1471 = vld [vmem:[#allocation3 + $0x250] sm:$0xff]
        %v1472 = vld [vmem:[#allocation3 + $0x258] sm:$0xff]
        %v1473 = vld [vmem:[#allocation3 + $0x260] sm:$0xff]
        %v1474 = vld [vmem:[#allocation3 + $0x268] sm:$0xff]
        %v1475 = vld [vmem:[#allocation3 + $0x270] sm:$0xff]
        %v1476 = vld [vmem:[#allocation3 + $0x278] sm:$0xff]
        %v1477 = vld [vmem:[#allocation3 + $0x280] sm:$0xff]
        %v1478 = vld [vmem:[#allocation3 + $0x288] sm:$0xff]
        %v1479 = vld [vmem:[#allocation3 + $0x290] sm:$0xff]
        %v1480 = vld [vmem:[#allocation3 + $0x298] sm:$0xff]
        %v1481 = vld [vmem:[#allocation3 + $0x2a0] sm:$0xff]
        %v1482 = vld [vmem:[#allocation3 + $0x2a8] sm:$0xff]
        %v1483 = vld [vmem:[#allocation3 + $0x2b0] sm:$0xff]
        %v1484 = vld [vmem:[#allocation3 + $0x2b8] sm:$0xff]
        %v1485 = vld [vmem:[#allocation3 + $0x2c0] sm:$0xff]
        %v1486 = vld [vmem:[#allocation3 + $0x2c8] sm:$0xff]
        %v1487 = vld [vmem:[#allocation3 + $0x2d0] sm:$0xff]
        %v1488 = vld [vmem:[#allocation3 + $0x2d8] sm:$0xff]
        %v1489 = vld [vmem:[#allocation3 + $0x2e0] sm:$0xff]
        %v1490 = vld [vmem:[#allocation3 + $0x2e8] sm:$0xff]
        %v1491 = vld [vmem:[#allocation3 + $0x2f0] sm:$0xff]
        %v1492 = vld [vmem:[#allocation3 + $0x2f8] sm:$0xff]
        %v1493 = vld [vmem:[#allocation3 + $0x300] sm:$0xff]
        %v1494 = vld [vmem:[#allocation3 + $0x308] sm:$0xff]
        %v1495 = vld [vmem:[#allocation3 + $0x310] sm:$0xff]
        %v1496 = vld [vmem:[#allocation3 + $0x318] sm:$0xff]
        %v1497 = vld [vmem:[#allocation3 + $0x320] sm:$0xff]
        %v1498 = vld [vmem:[#allocation3 + $0x328] sm:$0xff]
        %v1499 = vld [vmem:[#allocation3 + $0x330] sm:$0xff]
        %v1500 = vld [vmem:[#allocation3 + $0x338] sm:$0xff]
        %v1501 = vld [vmem:[#allocation3 + $0x340] sm:$0xff]
        %v1502 = vld [vmem:[#allocation3 + $0x348] sm:$0xff]
        %v1503 = vld [vmem:[#allocation3 + $0x350] sm:$0xff]
        %v1504 = vld [vmem:[#allocation3 + $0x358] sm:$0xff]
        %v1505 = vld [vmem:[%s2] sm:$0xff]
        %1507 = vset.pattern.permute.xlu0 0
        %1508 = vperm.xlu0 %1507, %v1505
        %v1509 = vpop.permute.xlu0 %1508
        %vm1511 = vcmask 719872
        %v1513 = vsel %vm1511, %v1396, 0
        %1515 = vmatpush.msra.mxu0 %v1457
        %1516 = vmatpush.msra.mxu0 %v1453
        %1517 = vmatpush.msra.mxu0 %v1449
        %1518 = vmatpush.msra.mxu0 %v1445
        %1519 = vmatpush.msra.mxu0 %v1441
        %1520 = vmatpush.msra.mxu0 %v1437
        %1521 = vmatpush.msra.mxu0 %v1433
        %1522 = vmatpush.msra.mxu0 %v1429
        %1523 = vmatpush.msra.mxu0 %v1425
        %1524 = vmatpush.msra.mxu0 %v1421
        %1525 = vmatpush.msra.mxu0 %v1417
        %1526 = vmatpush.msra.mxu0 %v1413
        %1527 = vmatpush.msra.mxu0 %v1409
        %1528 = vmatpush.msra.mxu0 %v1405
        %1529 = vmatpush.msra.mxu0 %v1401
        %1530 = vmatpush.msra.mxu0 %v1397
        %1531 = vmatmul.f32.gmra.mxu0 %v1395
        %v1532 = vpop.f32.mrf.mxu0
        %v1533 = vadd.f32 %v1509, %v1532
        %1534 = vdwg.mxu0
        %1535 = vmatpush.msra.mxu0 0.0
        %1536 = vmatpush.msra.mxu0 0.0
        %1537 = vmatpush.msra.mxu0 0.0
        %1538 = vmatpush.msra.mxu0 0.0
        %1539 = vmatpush.msra.mxu0 0.0
        %1540 = vmatpush.msra.mxu0 %v1501
        %1541 = vmatpush.msra.mxu0 %v1497
        %1542 = vmatpush.msra.mxu0 %v1493
        %1543 = vmatpush.msra.mxu0 %v1489
        %1544 = vmatpush.msra.mxu0 %v1485
        %1545 = vmatpush.msra.mxu0 %v1481
        %1546 = vmatpush.msra.mxu0 %v1477
        %1547 = vmatpush.msra.mxu0 %v1473
        %1548 = vmatpush.msra.mxu0 %v1469
        %1549 = vmatpush.msra.mxu0 %v1465
        %1550 = vmatpush.msra.mxu0 %v1461
        %1551 = vmatmul.f32.gmra.mxu0 %v1513
        %v1552 = vpop.f32.mrf.mxu0
        %v1553 = vadd.f32 %v1533, %v1552
        %1554 = vdwg.mxu0
        %1555 = vmatpush.msra.mxu0 %v1458
        %1556 = vmatpush.msra.mxu0 %v1454
        %1557 = vmatpush.msra.mxu0 %v1450
        %1558 = vmatpush.msra.mxu0 %v1446
        %1559 = vmatpush.msra.mxu0 %v1442
        %1560 = vmatpush.msra.mxu0 %v1438
        %1561 = vmatpush.msra.mxu0 %v1434
        %1562 = vmatpush.msra.mxu0 %v1430
        %1563 = vmatpush.msra.mxu0 %v1426
        %1564 = vmatpush.msra.mxu0 %v1422
        %1565 = vmatpush.msra.mxu0 %v1418
        %1566 = vmatpush.msra.mxu0 %v1414
        %1567 = vmatpush.msra.mxu0 %v1410
        %1568 = vmatpush.msra.mxu0 %v1406
        %1569 = vmatpush.msra.mxu0 %v1402
        %1570 = vmatpush.msra.mxu0 %v1398
        %1571 = vmatmul.f32.gmra.mxu0 %v1395
        %v1572 = vpop.f32.mrf.mxu0
        %v1573 = vadd.f32 %v1509, %v1572
        %1574 = vdwg.mxu0
        %1575 = vmatpush.msra.mxu0 0.0
        %1576 = vmatpush.msra.mxu0 0.0
        %1577 = vmatpush.msra.mxu0 0.0
        %1578 = vmatpush.msra.mxu0 0.0
        %1579 = vmatpush.msra.mxu0 0.0
        %1580 = vmatpush.msra.mxu0 %v1502
        %1581 = vmatpush.msra.mxu0 %v1498
        %1582 = vmatpush.msra.mxu0 %v1494
        %1583 = vmatpush.msra.mxu0 %v1490
        %1584 = vmatpush.msra.mxu0 %v1486
        %1585 = vmatpush.msra.mxu0 %v1482
        %1586 = vmatpush.msra.mxu0 %v1478
        %1587 = vmatpush.msra.mxu0 %v1474
        %1588 = vmatpush.msra.mxu0 %v1470
        %1589 = vmatpush.msra.mxu0 %v1466
        %1590 = vmatpush.msra.mxu0 %v1462
        %1591 = vmatmul.f32.gmra.mxu0 %v1513
        %v1592 = vpop.f32.mrf.mxu0
        %v1593 = vadd.f32 %v1573, %v1592
        %1594 = vdwg.mxu0
        %1595 = vmatpush.msra.mxu0 %v1459
        %1596 = vmatpush.msra.mxu0 %v1455
        %1597 = vmatpush.msra.mxu0 %v1451
        %1598 = vmatpush.msra.mxu0 %v1447
        %1599 = vmatpush.msra.mxu0 %v1443
        %1600 = vmatpush.msra.mxu0 %v1439
        %1601 = vmatpush.msra.mxu0 %v1435
        %1602 = vmatpush.msra.mxu0 %v1431
        %1603 = vmatpush.msra.mxu0 %v1427
        %1604 = vmatpush.msra.mxu0 %v1423
        %1605 = vmatpush.msra.mxu0 %v1419
        %1606 = vmatpush.msra.mxu0 %v1415
        %1607 = vmatpush.msra.mxu0 %v1411
        %1608 = vmatpush.msra.mxu0 %v1407
        %1609 = vmatpush.msra.mxu0 %v1403
        %1610 = vmatpush.msra.mxu0 %v1399
        %1611 = vmatmul.f32.gmra.mxu0 %v1395
        %v1612 = vpop.f32.mrf.mxu0
        %v1613 = vadd.f32 %v1509, %v1612
        %1614 = vdwg.mxu0
        %1615 = vmatpush.msra.mxu0 0.0
        %1616 = vmatpush.msra.mxu0 0.0
        %1617 = vmatpush.msra.mxu0 0.0
        %1618 = vmatpush.msra.mxu0 0.0
        %1619 = vmatpush.msra.mxu0 0.0
        %1620 = vmatpush.msra.mxu0 %v1503
        %1621 = vmatpush.msra.mxu0 %v1499
        %1622 = vmatpush.msra.mxu0 %v1495
        %1623 = vmatpush.msra.mxu0 %v1491
        %1624 = vmatpush.msra.mxu0 %v1487
        %1625 = vmatpush.msra.mxu0 %v1483
        %1626 = vmatpush.msra.mxu0 %v1479
        %1627 = vmatpush.msra.mxu0 %v1475
        %1628 = vmatpush.msra.mxu0 %v1471
        %1629 = vmatpush.msra.mxu0 %v1467
        %1630 = vmatpush.msra.mxu0 %v1463
        %1631 = vmatmul.f32.gmra.mxu0 %v1513
        %v1632 = vpop.f32.mrf.mxu0
        %v1633 = vadd.f32 %v1613, %v1632
        %1634 = vdwg.mxu0
        %1635 = vmatpush.msra.mxu0 %v1460
        %1636 = vmatpush.msra.mxu0 %v1456
        %1637 = vmatpush.msra.mxu0 %v1452
        %1638 = vmatpush.msra.mxu0 %v1448
        %1639 = vmatpush.msra.mxu0 %v1444
        %1640 = vmatpush.msra.mxu0 %v1440
        %1641 = vmatpush.msra.mxu0 %v1436
        %1642 = vmatpush.msra.mxu0 %v1432
        %1643 = vmatpush.msra.mxu0 %v1428
        %1644 = vmatpush.msra.mxu0 %v1424
        %1645 = vmatpush.msra.mxu0 %v1420
        %1646 = vmatpush.msra.mxu0 %v1416
        %1647 = vmatpush.msra.mxu0 %v1412
        %1648 = vmatpush.msra.mxu0 %v1408
        %1649 = vmatpush.msra.mxu0 %v1404
        %1650 = vmatpush.msra.mxu0 %v1400
        %1651 = vmatmul.f32.gmra.mxu0 %v1395
        %v1652 = vpop.f32.mrf.mxu0
        %v1653 = vadd.f32 %v1509, %v1652
        %1654 = vdwg.mxu0
        %1655 = vmatpush.msra.mxu0 0.0
        %1656 = vmatpush.msra.mxu0 0.0
        %1657 = vmatpush.msra.mxu0 0.0
        %1658 = vmatpush.msra.mxu0 0.0
        %1659 = vmatpush.msra.mxu0 0.0
        %1660 = vmatpush.msra.mxu0 %v1504
        %1661 = vmatpush.msra.mxu0 %v1500
        %1662 = vmatpush.msra.mxu0 %v1496
        %1663 = vmatpush.msra.mxu0 %v1492
        %1664 = vmatpush.msra.mxu0 %v1488
        %1665 = vmatpush.msra.mxu0 %v1484
        %1666 = vmatpush.msra.mxu0 %v1480
        %1667 = vmatpush.msra.mxu0 %v1476
        %1668 = vmatpush.msra.mxu0 %v1472
        %1669 = vmatpush.msra.mxu0 %v1468
        %1670 = vmatpush.msra.mxu0 %v1464
        %1671 = vmatmul.f32.gmra.mxu0 %v1513
        %v1672 = vpop.f32.mrf.mxu0
        %v1673 = vadd.f32 %v1653, %v1672
        %1674 = vdwg.mxu0
        %v1675 = vmax.f32 %v1553, 0.0
        %v1676 = vmax.f32 %v1593, 0.0
        %v1677 = vmax.f32 %v1633, 0.0
        %v1678 = vmax.f32 %v1673, 0.0
        %1679 = vst [vmem:[#allocation2 + $0x8] sm:$0xff] %v1675
        %1680 = vst [vmem:[#allocation2 + $0x10] sm:$0xff] %v1676
        %1681 = vst [vmem:[#allocation2 + $0x18] sm:$0xff] %v1677
        %1682 = vst [vmem:[#allocation2 + $0x20] sm:$0xff] %v1678
        %v1683 = vld [vmem:[#allocation2] sm:$0xff]
        %v1684 = vld [vmem:[#allocation2 + $0x8] sm:$0xff]
        %v1685 = vld [vmem:[#allocation2 + $0x10] sm:$0xff]
        %v1686 = vld [vmem:[#allocation2 + $0x18] sm:$0xff]
        %v1687 = vld [vmem:[#allocation2 + $0x20] sm:$0xff]
        %1693 = vrot.lane.b32.xlu0 %v1683, 73
        %v1694 = vpop.permute.xlu0 %1693
        %1695 = vrot.lane.b32.xlu0 %v1684, 73
        %v1696 = vpop.permute.xlu0 %1695
        %1697 = vrot.lane.b32.xlu0 %v1685, 73
        %v1698 = vpop.permute.xlu0 %1697
        %1699 = vrot.lane.b32.xlu0 %v1686, 73
        %v1700 = vpop.permute.xlu0 %1699
        %1701 = vrot.lane.b32.xlu0 %v1687, 73
        %v1702 = vpop.permute.xlu0 %1701
        %v1703 = vsel %vm370, %v1694, %v1696
        %v1704 = vsel %vm370, %v1696, %v1698
        %v1705 = vsel %vm370, %v1698, %v1700
        %v1706 = vsel %vm370, %v1700, %v1702
        %v1711 = vsel %vm351, %v1703, 0.0
        %v1712 = vsel %vm352, %v1704, 0.0
        %v1713 = vsel %vm353, %v1705, 0.0
        %v1714 = vsel %vm354, %v1706, 0.0
        %1715 = vst [vmem:[#allocation3] sm:$0xff] %v1711
        %1716 = vst [vmem:[#allocation3 + $0x8] sm:$0xff] %v1712
        %1717 = vst [vmem:[#allocation3 + $0x10] sm:$0xff] %v1713
        %1718 = vst [vmem:[#allocation3 + $0x18] sm:$0xff] %v1714
        %v1719 = vld [vmem:[#allocation2] sm:$0xff]
        %v1720 = vld [vmem:[#allocation2 + $0x8] sm:$0xff]
        %v1721 = vld [vmem:[#allocation2 + $0x10] sm:$0xff]
        %v1722 = vld [vmem:[#allocation2 + $0x18] sm:$0xff]
        %v1723 = vld [vmem:[#allocation2 + $0x20] sm:$0xff]
        %1729 = vrot.lane.b32.xlu0 %v1719, 72
        %v1730 = vpop.permute.xlu0 %1729
        %1731 = vrot.lane.b32.xlu0 %v1720, 72
        %v1732 = vpop.permute.xlu0 %1731
        %1733 = vrot.lane.b32.xlu0 %v1721, 72
        %v1734 = vpop.permute.xlu0 %1733
        %1735 = vrot.lane.b32.xlu0 %v1722, 72
        %v1736 = vpop.permute.xlu0 %1735
        %1737 = vrot.lane.b32.xlu0 %v1723, 72
        %v1738 = vpop.permute.xlu0 %1737
        %v1739 = vsel %vm407, %v1730, %v1732
        %v1740 = vsel %vm407, %v1732, %v1734
        %v1741 = vsel %vm407, %v1734, %v1736
        %v1742 = vsel %vm407, %v1736, %v1738
        %v1747 = vsel %vm347, %v1739, 0.0
        %v1748 = vsel %vm348, %v1740, 0.0
        %v1749 = vsel %vm349, %v1741, 0.0
        %v1750 = vsel %vm350, %v1742, 0.0
        %1751 = vst [vmem:[#allocation3 + $0x20] sm:$0xff] %v1747
        %1752 = vst [vmem:[#allocation3 + $0x28] sm:$0xff] %v1748
        %1753 = vst [vmem:[#allocation3 + $0x30] sm:$0xff] %v1749
        %1754 = vst [vmem:[#allocation3 + $0x38] sm:$0xff] %v1750
        %v1755 = vld [vmem:[#allocation2] sm:$0xff]
        %v1756 = vld [vmem:[#allocation2 + $0x8] sm:$0xff]
        %v1757 = vld [vmem:[#allocation2 + $0x10] sm:$0xff]
        %v1758 = vld [vmem:[#allocation2 + $0x18] sm:$0xff]
        %v1759 = vld [vmem:[#allocation2 + $0x20] sm:$0xff]
        %1765 = vrot.lane.b32.xlu0 %v1755, 71
        %v1766 = vpop.permute.xlu0 %1765
        %1767 = vrot.lane.b32.xlu0 %v1756, 71
        %v1768 = vpop.permute.xlu0 %1767
        %1769 = vrot.lane.b32.xlu0 %v1757, 71
        %v1770 = vpop.permute.xlu0 %1769
        %1771 = vrot.lane.b32.xlu0 %v1758, 71
        %v1772 = vpop.permute.xlu0 %1771
        %1773 = vrot.lane.b32.xlu0 %v1759, 71
        %v1774 = vpop.permute.xlu0 %1773
        %v1775 = vsel %vm452, %v1766, %v1768
        %v1776 = vsel %vm452, %v1768, %v1770
        %v1777 = vsel %vm452, %v1770, %v1772
        %v1778 = vsel %vm452, %v1772, %v1774
        %v1783 = vsel %vm433, %v1775, 0.0
        %v1784 = vsel %vm434, %v1776, 0.0
        %v1785 = vsel %vm435, %v1777, 0.0
        %v1786 = vsel %vm436, %v1778, 0.0
        %1787 = vst [vmem:[#allocation3 + $0x40] sm:$0xff] %v1783
        %1788 = vst [vmem:[#allocation3 + $0x48] sm:$0xff] %v1784
        %1789 = vst [vmem:[#allocation3 + $0x50] sm:$0xff] %v1785
        %1790 = vst [vmem:[#allocation3 + $0x58] sm:$0xff] %v1786
        %v1791 = vld [vmem:[#allocation2] sm:$0xff]
        %v1792 = vld [vmem:[#allocation2 + $0x8] sm:$0xff]
        %v1793 = vld [vmem:[#allocation2 + $0x10] sm:$0xff]
        %v1794 = vld [vmem:[#allocation2 + $0x18] sm:$0xff]
        %v1795 = vld [vmem:[#allocation2 + $0x20] sm:$0xff]
        %1801 = vrot.lane.b32.xlu0 %v1791, 65
        %v1802 = vpop.permute.xlu0 %1801
        %1803 = vrot.lane.b32.xlu0 %v1792, 65
        %v1804 = vpop.permute.xlu0 %1803
        %1805 = vrot.lane.b32.xlu0 %v1793, 65
        %v1806 = vpop.permute.xlu0 %1805
        %1807 = vrot.lane.b32.xlu0 %v1794, 65
        %v1808 = vpop.permute.xlu0 %1807
        %1809 = vrot.lane.b32.xlu0 %v1795, 65
        %v1810 = vpop.permute.xlu0 %1809
        %v1811 = vsel %vm493, %v1802, %v1804
        %v1812 = vsel %vm493, %v1804, %v1806
        %v1813 = vsel %vm493, %v1806, %v1808
        %v1814 = vsel %vm493, %v1808, %v1810
        %v1819 = vsel %vm474, %v1811, 0.0
        %v1820 = vsel %vm475, %v1812, 0.0
        %v1821 = vsel %vm476, %v1813, 0.0
        %v1822 = vsel %vm477, %v1814, 0.0
        %1823 = vst [vmem:[#allocation3 + $0x60] sm:$0xff] %v1819
        %1824 = vst [vmem:[#allocation3 + $0x68] sm:$0xff] %v1820
        %1825 = vst [vmem:[#allocation3 + $0x70] sm:$0xff] %v1821
        %1826 = vst [vmem:[#allocation3 + $0x78] sm:$0xff] %v1822
        %v1827 = vld [vmem:[#allocation2] sm:$0xff]
        %v1828 = vld [vmem:[#allocation2 + $0x8] sm:$0xff]
        %v1829 = vld [vmem:[#allocation2 + $0x10] sm:$0xff]
        %v1830 = vld [vmem:[#allocation2 + $0x18] sm:$0xff]
        %v1831 = vld [vmem:[#allocation2 + $0x20] sm:$0xff]
        %1837 = vrot.lane.b32.xlu0 %v1827, 64
        %v1838 = vpop.permute.xlu0 %1837
        %1839 = vrot.lane.b32.xlu0 %v1828, 64
        %v1840 = vpop.permute.xlu0 %1839
        %1841 = vrot.lane.b32.xlu0 %v1829, 64
        %v1842 = vpop.permute.xlu0 %1841
        %1843 = vrot.lane.b32.xlu0 %v1830, 64
        %v1844 = vpop.permute.xlu0 %1843
        %1845 = vrot.lane.b32.xlu0 %v1831, 64
        %v1846 = vpop.permute.xlu0 %1845
        %v1847 = vsel %vm530, %v1838, %v1840
        %v1848 = vsel %vm530, %v1840, %v1842
        %v1849 = vsel %vm530, %v1842, %v1844
        %v1850 = vsel %vm530, %v1844, %v1846
        %v1855 = vsel %vm335, %v1847, 0.0
        %v1856 = vsel %vm336, %v1848, 0.0
        %v1857 = vsel %vm337, %v1849, 0.0
        %v1858 = vsel %vm338, %v1850, 0.0
        %1859 = vst [vmem:[#allocation3 + $0x80] sm:$0xff] %v1855
        %1860 = vst [vmem:[#allocation3 + $0x88] sm:$0xff] %v1856
        %1861 = vst [vmem:[#allocation3 + $0x90] sm:$0xff] %v1857
        %1862 = vst [vmem:[#allocation3 + $0x98] sm:$0xff] %v1858
        %v1863 = vld [vmem:[#allocation2] sm:$0xff]
        %v1864 = vld [vmem:[#allocation2 + $0x8] sm:$0xff]
        %v1865 = vld [vmem:[#allocation2 + $0x10] sm:$0xff]
        %v1866 = vld [vmem:[#allocation2 + $0x18] sm:$0xff]
        %v1867 = vld [vmem:[#allocation2 + $0x20] sm:$0xff]
        %1873 = vrot.lane.b32.xlu0 %v1863, 63
        %v1874 = vpop.permute.xlu0 %1873
        %1875 = vrot.lane.b32.xlu0 %v1864, 63
        %v1876 = vpop.permute.xlu0 %1875
        %1877 = vrot.lane.b32.xlu0 %v1865, 63
        %v1878 = vpop.permute.xlu0 %1877
        %1879 = vrot.lane.b32.xlu0 %v1866, 63
        %v1880 = vpop.permute.xlu0 %1879
        %1881 = vrot.lane.b32.xlu0 %v1867, 63
        %v1882 = vpop.permute.xlu0 %1881
        %v1883 = vsel %vm571, %v1874, %v1876
        %v1884 = vsel %vm571, %v1876, %v1878
        %v1885 = vsel %vm571, %v1878, %v1880
        %v1886 = vsel %vm571, %v1880, %v1882
        %v1891 = vsel %vm552, %v1883, 0.0
        %v1892 = vsel %vm553, %v1884, 0.0
        %v1893 = vsel %vm554, %v1885, 0.0
        %v1894 = vsel %vm555, %v1886, 0.0
        %1895 = vst [vmem:[#allocation3 + $0xa0] sm:$0xff] %v1891
        %1896 = vst [vmem:[#allocation3 + $0xa8] sm:$0xff] %v1892
        %1897 = vst [vmem:[#allocation3 + $0xb0] sm:$0xff] %v1893
        %1898 = vst [vmem:[#allocation3 + $0xb8] sm:$0xff] %v1894
        %v1899 = vld [vmem:[#allocation2] sm:$0xff]
        %v1900 = vld [vmem:[#allocation2 + $0x8] sm:$0xff]
        %v1901 = vld [vmem:[#allocation2 + $0x10] sm:$0xff]
        %v1902 = vld [vmem:[#allocation2 + $0x18] sm:$0xff]
        %v1903 = vld [vmem:[#allocation2 + $0x20] sm:$0xff]
        %1909 = vrot.lane.b32.xlu0 %v1899, 57
        %v1910 = vpop.permute.xlu0 %1909
        %1911 = vrot.lane.b32.xlu0 %v1900, 57
        %v1912 = vpop.permute.xlu0 %1911
        %1913 = vrot.lane.b32.xlu0 %v1901, 57
        %v1914 = vpop.permute.xlu0 %1913
        %1915 = vrot.lane.b32.xlu0 %v1902, 57
        %v1916 = vpop.permute.xlu0 %1915
        %1917 = vrot.lane.b32.xlu0 %v1903, 57
        %v1918 = vpop.permute.xlu0 %1917
        %v1919 = vsel %vm620, %v1910, %v1912
        %v1920 = vsel %vm620, %v1912, %v1914
        %v1921 = vsel %vm620, %v1914, %v1916
        %v1922 = vsel %vm620, %v1916, %v1918
        %v1927 = vsel %vm601, %v1919, 0.0
        %v1928 = vsel %vm602, %v1920, 0.0
        %v1929 = vsel %vm603, %v1921, 0.0
        %v1930 = vsel %vm604, %v1922, 0.0
        %1931 = vst [vmem:[#allocation3 + $0xc0] sm:$0xff] %v1927
        %1932 = vst [vmem:[#allocation3 + $0xc8] sm:$0xff] %v1928
        %1933 = vst [vmem:[#allocation3 + $0xd0] sm:$0xff] %v1929
        %1934 = vst [vmem:[#allocation3 + $0xd8] sm:$0xff] %v1930
        %v1935 = vld [vmem:[#allocation2] sm:$0xff]
        %v1936 = vld [vmem:[#allocation2 + $0x8] sm:$0xff]
        %v1937 = vld [vmem:[#allocation2 + $0x10] sm:$0xff]
        %v1938 = vld [vmem:[#allocation2 + $0x18] sm:$0xff]
        %v1939 = vld [vmem:[#allocation2 + $0x20] sm:$0xff]
        %1945 = vrot.lane.b32.xlu0 %v1935, 56
        %v1946 = vpop.permute.xlu0 %1945
        %1947 = vrot.lane.b32.xlu0 %v1936, 56
        %v1948 = vpop.permute.xlu0 %1947
        %1949 = vrot.lane.b32.xlu0 %v1937, 56
        %v1950 = vpop.permute.xlu0 %1949
        %1951 = vrot.lane.b32.xlu0 %v1938, 56
        %v1952 = vpop.permute.xlu0 %1951
        %1953 = vrot.lane.b32.xlu0 %v1939, 56
        %v1954 = vpop.permute.xlu0 %1953
        %v1955 = vsel %vm657, %v1946, %v1948
        %v1956 = vsel %vm657, %v1948, %v1950
        %v1957 = vsel %vm657, %v1950, %v1952
        %v1958 = vsel %vm657, %v1952, %v1954
        %v1963 = vsel %vm597, %v1955, 0.0
        %v1964 = vsel %vm598, %v1956, 0.0
        %v1965 = vsel %vm599, %v1957, 0.0
        %v1966 = vsel %vm600, %v1958, 0.0
        %1967 = vst [vmem:[#allocation3 + $0xe0] sm:$0xff] %v1963
        %1968 = vst [vmem:[#allocation3 + $0xe8] sm:$0xff] %v1964
        %1969 = vst [vmem:[#allocation3 + $0xf0] sm:$0xff] %v1965
        %1970 = vst [vmem:[#allocation3 + $0xf8] sm:$0xff] %v1966
        %v1971 = vld [vmem:[#allocation2] sm:$0xff]
        %v1972 = vld [vmem:[#allocation2 + $0x8] sm:$0xff]
        %v1973 = vld [vmem:[#allocation2 + $0x10] sm:$0xff]
        %v1974 = vld [vmem:[#allocation2 + $0x18] sm:$0xff]
        %v1975 = vld [vmem:[#allocation2 + $0x20] sm:$0xff]
        %1981 = vrot.lane.b32.xlu0 %v1971, 55
        %v1982 = vpop.permute.xlu0 %1981
        %1983 = vrot.lane.b32.xlu0 %v1972, 55
        %v1984 = vpop.permute.xlu0 %1983
        %1985 = vrot.lane.b32.xlu0 %v1973, 55
        %v1986 = vpop.permute.xlu0 %1985
        %1987 = vrot.lane.b32.xlu0 %v1974, 55
        %v1988 = vpop.permute.xlu0 %1987
        %1989 = vrot.lane.b32.xlu0 %v1975, 55
        %v1990 = vpop.permute.xlu0 %1989
        %v1991 = vsel %vm698, %v1982, %v1984
        %v1992 = vsel %vm698, %v1984, %v1986
        %v1993 = vsel %vm698, %v1986, %v1988
        %v1994 = vsel %vm698, %v1988, %v1990
        %v1999 = vsel %vm679, %v1991, 0.0
        %v2000 = vsel %vm680, %v1992, 0.0
        %v2001 = vsel %vm681, %v1993, 0.0
        %v2002 = vsel %vm682, %v1994, 0.0
        %2003 = vst [vmem:[#allocation3 + $0x100] sm:$0xff] %v1999
        %2004 = vst [vmem:[#allocation3 + $0x108] sm:$0xff] %v2000
        %2005 = vst [vmem:[#allocation3 + $0x110] sm:$0xff] %v2001
        %2006 = vst [vmem:[#allocation3 + $0x118] sm:$0xff] %v2002
        %v2007 = vld [vmem:[#allocation2] sm:$0xff]
        %v2008 = vld [vmem:[#allocation2 + $0x8] sm:$0xff]
        %v2009 = vld [vmem:[#allocation2 + $0x10] sm:$0xff]
        %v2010 = vld [vmem:[#allocation2 + $0x18] sm:$0xff]
        %v2011 = vld [vmem:[#allocation2 + $0x20] sm:$0xff]
        %2017 = vrot.lane.b32.xlu0 %v2007, 9
        %v2018 = vpop.permute.xlu0 %2017
        %2019 = vrot.lane.b32.xlu0 %v2008, 9
        %v2020 = vpop.permute.xlu0 %2019
        %2021 = vrot.lane.b32.xlu0 %v2009, 9
        %v2022 = vpop.permute.xlu0 %2021
        %2023 = vrot.lane.b32.xlu0 %v2010, 9
        %v2024 = vpop.permute.xlu0 %2023
        %2025 = vrot.lane.b32.xlu0 %v2011, 9
        %v2026 = vpop.permute.xlu0 %2025
        %v2027 = vsel %vm739, %v2018, %v2020
        %v2028 = vsel %vm739, %v2020, %v2022
        %v2029 = vsel %vm739, %v2022, %v2024
        %v2030 = vsel %vm739, %v2024, %v2026
        %v2035 = vsel %vm720, %v2027, 0.0
        %v2036 = vsel %vm721, %v2028, 0.0
        %v2037 = vsel %vm722, %v2029, 0.0
        %v2038 = vsel %vm723, %v2030, 0.0
        %2039 = vst [vmem:[#allocation3 + $0x120] sm:$0xff] %v2035
        %2040 = vst [vmem:[#allocation3 + $0x128] sm:$0xff] %v2036
        %2041 = vst [vmem:[#allocation3 + $0x130] sm:$0xff] %v2037
        %2042 = vst [vmem:[#allocation3 + $0x138] sm:$0xff] %v2038
        %v2043 = vld [vmem:[#allocation2] sm:$0xff]
        %v2044 = vld [vmem:[#allocation2 + $0x8] sm:$0xff]
        %v2045 = vld [vmem:[#allocation2 + $0x10] sm:$0xff]
        %v2046 = vld [vmem:[#allocation2 + $0x18] sm:$0xff]
        %v2047 = vld [vmem:[#allocation2 + $0x20] sm:$0xff]
        %2053 = vrot.lane.b32.xlu0 %v2043, 8
        %v2054 = vpop.permute.xlu0 %2053
        %2055 = vrot.lane.b32.xlu0 %v2044, 8
        %v2056 = vpop.permute.xlu0 %2055
        %2057 = vrot.lane.b32.xlu0 %v2045, 8
        %v2058 = vpop.permute.xlu0 %2057
        %2059 = vrot.lane.b32.xlu0 %v2046, 8
        %v2060 = vpop.permute.xlu0 %2059
        %2061 = vrot.lane.b32.xlu0 %v2047, 8
        %v2062 = vpop.permute.xlu0 %2061
        %v2063 = vsel %vm776, %v2054, %v2056
        %v2064 = vsel %vm776, %v2056, %v2058
        %v2065 = vsel %vm776, %v2058, %v2060
        %v2066 = vsel %vm776, %v2060, %v2062
        %v2071 = vsel %vm339, %v2063, 0.0
        %v2072 = vsel %vm340, %v2064, 0.0
        %v2073 = vsel %vm341, %v2065, 0.0
        %v2074 = vsel %vm342, %v2066, 0.0
        %2075 = vst [vmem:[#allocation3 + $0x140] sm:$0xff] %v2071
        %2076 = vst [vmem:[#allocation3 + $0x148] sm:$0xff] %v2072
        %2077 = vst [vmem:[#allocation3 + $0x150] sm:$0xff] %v2073
        %2078 = vst [vmem:[#allocation3 + $0x158] sm:$0xff] %v2074
        %v2079 = vld [vmem:[#allocation2] sm:$0xff]
        %v2080 = vld [vmem:[#allocation2 + $0x8] sm:$0xff]
        %v2081 = vld [vmem:[#allocation2 + $0x10] sm:$0xff]
        %v2082 = vld [vmem:[#allocation2 + $0x18] sm:$0xff]
        %v2083 = vld [vmem:[#allocation2 + $0x20] sm:$0xff]
        %2089 = vrot.lane.b32.xlu0 %v2079, 7
        %v2090 = vpop.permute.xlu0 %2089
        %2091 = vrot.lane.b32.xlu0 %v2080, 7
        %v2092 = vpop.permute.xlu0 %2091
        %2093 = vrot.lane.b32.xlu0 %v2081, 7
        %v2094 = vpop.permute.xlu0 %2093
        %2095 = vrot.lane.b32.xlu0 %v2082, 7
        %v2096 = vpop.permute.xlu0 %2095
        %2097 = vrot.lane.b32.xlu0 %v2083, 7
        %v2098 = vpop.permute.xlu0 %2097
        %v2099 = vsel %vm817, %v2090, %v2092
        %v2100 = vsel %vm817, %v2092, %v2094
        %v2101 = vsel %vm817, %v2094, %v2096
        %v2102 = vsel %vm817, %v2096, %v2098
        %v2107 = vsel %vm798, %v2099, 0.0
        %v2108 = vsel %vm799, %v2100, 0.0
        %v2109 = vsel %vm800, %v2101, 0.0
        %v2110 = vsel %vm801, %v2102, 0.0
        %2111 = vst [vmem:[#allocation3 + $0x160] sm:$0xff] %v2107
        %2112 = vst [vmem:[#allocation3 + $0x168] sm:$0xff] %v2108
        %2113 = vst [vmem:[#allocation3 + $0x170] sm:$0xff] %v2109
        %2114 = vst [vmem:[#allocation3 + $0x178] sm:$0xff] %v2110
        %v2115 = vld [vmem:[#allocation2] sm:$0xff]
        %v2116 = vld [vmem:[#allocation2 + $0x8] sm:$0xff]
        %v2117 = vld [vmem:[#allocation2 + $0x10] sm:$0xff]
        %v2118 = vld [vmem:[#allocation2 + $0x18] sm:$0xff]
        %v2119 = vld [vmem:[#allocation2 + $0x20] sm:$0xff]
        %2125 = vrot.lane.b32.xlu0 %v2115, 1
        %v2126 = vpop.permute.xlu0 %2125
        %2127 = vrot.lane.b32.xlu0 %v2116, 1
        %v2128 = vpop.permute.xlu0 %2127
        %2129 = vrot.lane.b32.xlu0 %v2117, 1
        %v2130 = vpop.permute.xlu0 %2129
        %2131 = vrot.lane.b32.xlu0 %v2118, 1
        %v2132 = vpop.permute.xlu0 %2131
        %2133 = vrot.lane.b32.xlu0 %v2119, 1
        %v2134 = vpop.permute.xlu0 %2133
        %v2135 = vsel %vm854, %v2126, %v2128
        %v2136 = vsel %vm854, %v2128, %v2130
        %v2137 = vsel %vm854, %v2130, %v2132
        %v2138 = vsel %vm854, %v2132, %v2134
        %v2143 = vsel %vm343, %v2135, 0.0
        %v2144 = vsel %vm344, %v2136, 0.0
        %v2145 = vsel %vm345, %v2137, 0.0
        %v2146 = vsel %vm346, %v2138, 0.0
        %2147 = vst [vmem:[#allocation3 + $0x180] sm:$0xff] %v2143
        %2148 = vst [vmem:[#allocation3 + $0x188] sm:$0xff] %v2144
        %2149 = vst [vmem:[#allocation3 + $0x190] sm:$0xff] %v2145
        %2150 = vst [vmem:[#allocation3 + $0x198] sm:$0xff] %v2146
        %v2151 = vld [vmem:[#allocation2 + $0x8] sm:$0xff]
        %v2152 = vld [vmem:[#allocation2 + $0x10] sm:$0xff]
        %v2153 = vld [vmem:[#allocation2 + $0x18] sm:$0xff]
        %v2154 = vld [vmem:[#allocation2 + $0x20] sm:$0xff]
        %2155 = vst [vmem:[#allocation3 + $0x1a0] sm:$0xff] %v2151
        %2156 = vst [vmem:[#allocation3 + $0x1a8] sm:$0xff] %v2152
        %2157 = vst [vmem:[#allocation3 + $0x1b0] sm:$0xff] %v2153
        %2158 = vst [vmem:[#allocation3 + $0x1b8] sm:$0xff] %v2154
        %v2159 = vld [vmem:[#allocation2 + $0x8] sm:$0xff]
        %v2160 = vld [vmem:[#allocation2 + $0x10] sm:$0xff]
        %v2161 = vld [vmem:[#allocation2 + $0x18] sm:$0xff]
        %v2162 = vld [vmem:[#allocation2 + $0x20] sm:$0xff]
        %v2163 = vld [vmem:[#allocation2 + $0x28] sm:$0xff]
        %2169 = vrot.lane.b32.xlu0 %v2159, 127
        %v2170 = vpop.permute.xlu0 %2169
        %2171 = vrot.lane.b32.xlu0 %v2160, 127
        %v2172 = vpop.permute.xlu0 %2171
        %2173 = vrot.lane.b32.xlu0 %v2161, 127
        %v2174 = vpop.permute.xlu0 %2173
        %2175 = vrot.lane.b32.xlu0 %v2162, 127
        %v2176 = vpop.permute.xlu0 %2175
        %2177 = vrot.lane.b32.xlu0 %v2163, 127
        %v2178 = vpop.permute.xlu0 %2177
        %v2179 = vsel %vm899, %v2170, %v2172
        %v2180 = vsel %vm899, %v2172, %v2174
        %v2181 = vsel %vm899, %v2174, %v2176
        %v2182 = vsel %vm899, %v2176, %v2178
        %v2187 = vsel %vm429, %v2179, 0.0
        %v2188 = vsel %vm430, %v2180, 0.0
        %v2189 = vsel %vm431, %v2181, 0.0
        %v2190 = vsel %vm432, %v2182, 0.0
        %2191 = vst [vmem:[#allocation3 + $0x1c0] sm:$0xff] %v2187
        %2192 = vst [vmem:[#allocation3 + $0x1c8] sm:$0xff] %v2188
        %2193 = vst [vmem:[#allocation3 + $0x1d0] sm:$0xff] %v2189
        %2194 = vst [vmem:[#allocation3 + $0x1d8] sm:$0xff] %v2190
        %v2195 = vld [vmem:[#allocation2 + $0x8] sm:$0xff]
        %v2196 = vld [vmem:[#allocation2 + $0x10] sm:$0xff]
        %v2197 = vld [vmem:[#allocation2 + $0x18] sm:$0xff]
        %v2198 = vld [vmem:[#allocation2 + $0x20] sm:$0xff]
        %v2199 = vld [vmem:[#allocation2 + $0x28] sm:$0xff]
        %2205 = vrot.lane.b32.xlu0 %v2195, 121
        %v2206 = vpop.permute.xlu0 %2205
        %2207 = vrot.lane.b32.xlu0 %v2196, 121
        %v2208 = vpop.permute.xlu0 %2207
        %2209 = vrot.lane.b32.xlu0 %v2197, 121
        %v2210 = vpop.permute.xlu0 %2209
        %2211 = vrot.lane.b32.xlu0 %v2198, 121
        %v2212 = vpop.permute.xlu0 %2211
        %2213 = vrot.lane.b32.xlu0 %v2199, 121
        %v2214 = vpop.permute.xlu0 %2213
        %v2215 = vsel %vm940, %v2206, %v2208
        %v2216 = vsel %vm940, %v2208, %v2210
        %v2217 = vsel %vm940, %v2210, %v2212
        %v2218 = vsel %vm940, %v2212, %v2214
        %v2223 = vsel %vm921, %v2215, 0.0
        %v2224 = vsel %vm922, %v2216, 0.0
        %v2225 = vsel %vm923, %v2217, 0.0
        %v2226 = vsel %vm924, %v2218, 0.0
        %2227 = vst [vmem:[#allocation3 + $0x1e0] sm:$0xff] %v2223
        %2228 = vst [vmem:[#allocation3 + $0x1e8] sm:$0xff] %v2224
        %2229 = vst [vmem:[#allocation3 + $0x1f0] sm:$0xff] %v2225
        %2230 = vst [vmem:[#allocation3 + $0x1f8] sm:$0xff] %v2226
        %v2231 = vld [vmem:[#allocation2 + $0x8] sm:$0xff]
        %v2232 = vld [vmem:[#allocation2 + $0x10] sm:$0xff]
        %v2233 = vld [vmem:[#allocation2 + $0x18] sm:$0xff]
        %v2234 = vld [vmem:[#allocation2 + $0x20] sm:$0xff]
        %v2235 = vld [vmem:[#allocation2 + $0x28] sm:$0xff]
        %2241 = vrot.lane.b32.xlu0 %v2231, 120
        %v2242 = vpop.permute.xlu0 %2241
        %2243 = vrot.lane.b32.xlu0 %v2232, 120
        %v2244 = vpop.permute.xlu0 %2243
        %2245 = vrot.lane.b32.xlu0 %v2233, 120
        %v2246 = vpop.permute.xlu0 %2245
        %2247 = vrot.lane.b32.xlu0 %v2234, 120
        %v2248 = vpop.permute.xlu0 %2247
        %2249 = vrot.lane.b32.xlu0 %v2235, 120
        %v2250 = vpop.permute.xlu0 %2249
        %v2251 = vsel %vm977, %v2242, %v2244
        %v2252 = vsel %vm977, %v2244, %v2246
        %v2253 = vsel %vm977, %v2246, %v2248
        %v2254 = vsel %vm977, %v2248, %v2250
        %v2259 = vsel %vm593, %v2251, 0.0
        %v2260 = vsel %vm594, %v2252, 0.0
        %v2261 = vsel %vm595, %v2253, 0.0
        %v2262 = vsel %vm596, %v2254, 0.0
        %2263 = vst [vmem:[#allocation3 + $0x200] sm:$0xff] %v2259
        %2264 = vst [vmem:[#allocation3 + $0x208] sm:$0xff] %v2260
        %2265 = vst [vmem:[#allocation3 + $0x210] sm:$0xff] %v2261
        %2266 = vst [vmem:[#allocation3 + $0x218] sm:$0xff] %v2262
        %v2267 = vld [vmem:[#allocation2 + $0x8] sm:$0xff]
        %v2268 = vld [vmem:[#allocation2 + $0x10] sm:$0xff]
        %v2269 = vld [vmem:[#allocation2 + $0x18] sm:$0xff]
        %v2270 = vld [vmem:[#allocation2 + $0x20] sm:$0xff]
        %v2271 = vld [vmem:[#allocation2 + $0x28] sm:$0xff]
        %2277 = vrot.lane.b32.xlu0 %v2267, 119
        %v2278 = vpop.permute.xlu0 %2277
        %2279 = vrot.lane.b32.xlu0 %v2268, 119
        %v2280 = vpop.permute.xlu0 %2279
        %2281 = vrot.lane.b32.xlu0 %v2269, 119
        %v2282 = vpop.permute.xlu0 %2281
        %2283 = vrot.lane.b32.xlu0 %v2270, 119
        %v2284 = vpop.permute.xlu0 %2283
        %2285 = vrot.lane.b32.xlu0 %v2271, 119
        %v2286 = vpop.permute.xlu0 %2285
        %v2287 = vsel %vm1018, %v2278, %v2280
        %v2288 = vsel %vm1018, %v2280, %v2282
        %v2289 = vsel %vm1018, %v2282, %v2284
        %v2290 = vsel %vm1018, %v2284, %v2286
        %v2295 = vsel %vm999, %v2287, 0.0
        %v2296 = vsel %vm1000, %v2288, 0.0
        %v2297 = vsel %vm1001, %v2289, 0.0
        %v2298 = vsel %vm1002, %v2290, 0.0
        %2299 = vst [vmem:[#allocation3 + $0x220] sm:$0xff] %v2295
        %2300 = vst [vmem:[#allocation3 + $0x228] sm:$0xff] %v2296
        %2301 = vst [vmem:[#allocation3 + $0x230] sm:$0xff] %v2297
        %2302 = vst [vmem:[#allocation3 + $0x238] sm:$0xff] %v2298
        %v2303 = vld [vmem:[#allocation2 + $0x8] sm:$0xff]
        %v2304 = vld [vmem:[#allocation2 + $0x10] sm:$0xff]
        %v2305 = vld [vmem:[#allocation2 + $0x18] sm:$0xff]
        %v2306 = vld [vmem:[#allocation2 + $0x20] sm:$0xff]
        %v2307 = vld [vmem:[#allocation2 + $0x28] sm:$0xff]
        %2313 = vrot.lane.b32.xlu0 %v2303, 73
        %v2314 = vpop.permute.xlu0 %2313
        %2315 = vrot.lane.b32.xlu0 %v2304, 73
        %v2316 = vpop.permute.xlu0 %2315
        %2317 = vrot.lane.b32.xlu0 %v2305, 73
        %v2318 = vpop.permute.xlu0 %2317
        %2319 = vrot.lane.b32.xlu0 %v2306, 73
        %v2320 = vpop.permute.xlu0 %2319
        %2321 = vrot.lane.b32.xlu0 %v2307, 73
        %v2322 = vpop.permute.xlu0 %2321
        %v2323 = vsel %vm370, %v2314, %v2316
        %v2324 = vsel %vm370, %v2316, %v2318
        %v2325 = vsel %vm370, %v2318, %v2320
        %v2326 = vsel %vm370, %v2320, %v2322
        %v2331 = vsel %vm1048, %v2323, 0.0
        %v2332 = vsel %vm1049, %v2324, 0.0
        %v2333 = vsel %vm1050, %v2325, 0.0
        %v2334 = vsel %vm1051, %v2326, 0.0
        %2335 = vst [vmem:[#allocation3 + $0x240] sm:$0xff] %v2331
        %2336 = vst [vmem:[#allocation3 + $0x248] sm:$0xff] %v2332
        %2337 = vst [vmem:[#allocation3 + $0x250] sm:$0xff] %v2333
        %2338 = vst [vmem:[#allocation3 + $0x258] sm:$0xff] %v2334
        %v2339 = vld [vmem:[#allocation2 + $0x8] sm:$0xff]
        %v2340 = vld [vmem:[#allocation2 + $0x10] sm:$0xff]
        %v2341 = vld [vmem:[#allocation2 + $0x18] sm:$0xff]
        %v2342 = vld [vmem:[#allocation2 + $0x20] sm:$0xff]
        %v2343 = vld [vmem:[#allocation2 + $0x28] sm:$0xff]
        %2349 = vrot.lane.b32.xlu0 %v2339, 72
        %v2350 = vpop.permute.xlu0 %2349
        %2351 = vrot.lane.b32.xlu0 %v2340, 72
        %v2352 = vpop.permute.xlu0 %2351
        %2353 = vrot.lane.b32.xlu0 %v2341, 72
        %v2354 = vpop.permute.xlu0 %2353
        %2355 = vrot.lane.b32.xlu0 %v2342, 72
        %v2356 = vpop.permute.xlu0 %2355
        %2357 = vrot.lane.b32.xlu0 %v2343, 72
        %v2358 = vpop.permute.xlu0 %2357
        %v2359 = vsel %vm407, %v2350, %v2352
        %v2360 = vsel %vm407, %v2352, %v2354
        %v2361 = vsel %vm407, %v2354, %v2356
        %v2362 = vsel %vm407, %v2356, %v2358
        %v2367 = vsel %vm1044, %v2359, 0.0
        %v2368 = vsel %vm1045, %v2360, 0.0
        %v2369 = vsel %vm1046, %v2361, 0.0
        %v2370 = vsel %vm1047, %v2362, 0.0
        %2371 = vst [vmem:[#allocation3 + $0x260] sm:$0xff] %v2367
        %2372 = vst [vmem:[#allocation3 + $0x268] sm:$0xff] %v2368
        %2373 = vst [vmem:[#allocation3 + $0x270] sm:$0xff] %v2369
        %2374 = vst [vmem:[#allocation3 + $0x278] sm:$0xff] %v2370
        %v2375 = vld [vmem:[#allocation2 + $0x8] sm:$0xff]
        %v2376 = vld [vmem:[#allocation2 + $0x10] sm:$0xff]
        %v2377 = vld [vmem:[#allocation2 + $0x18] sm:$0xff]
        %v2378 = vld [vmem:[#allocation2 + $0x20] sm:$0xff]
        %v2379 = vld [vmem:[#allocation2 + $0x28] sm:$0xff]
        %2385 = vrot.lane.b32.xlu0 %v2375, 71
        %v2386 = vpop.permute.xlu0 %2385
        %2387 = vrot.lane.b32.xlu0 %v2376, 71
        %v2388 = vpop.permute.xlu0 %2387
        %2389 = vrot.lane.b32.xlu0 %v2377, 71
        %v2390 = vpop.permute.xlu0 %2389
        %2391 = vrot.lane.b32.xlu0 %v2378, 71
        %v2392 = vpop.permute.xlu0 %2391
        %2393 = vrot.lane.b32.xlu0 %v2379, 71
        %v2394 = vpop.permute.xlu0 %2393
        %v2395 = vsel %vm452, %v2386, %v2388
        %v2396 = vsel %vm452, %v2388, %v2390
        %v2397 = vsel %vm452, %v2390, %v2392
        %v2398 = vsel %vm452, %v2392, %v2394
        %v2403 = vsel %vm1124, %v2395, 0.0
        %v2404 = vsel %vm1125, %v2396, 0.0
        %v2405 = vsel %vm1126, %v2397, 0.0
        %v2406 = vsel %vm1127, %v2398, 0.0
        %2407 = vst [vmem:[#allocation3 + $0x280] sm:$0xff] %v2403
        %2408 = vst [vmem:[#allocation3 + $0x288] sm:$0xff] %v2404
        %2409 = vst [vmem:[#allocation3 + $0x290] sm:$0xff] %v2405
        %2410 = vst [vmem:[#allocation3 + $0x298] sm:$0xff] %v2406
        %v2411 = vld [vmem:[#allocation2 + $0x8] sm:$0xff]
        %v2412 = vld [vmem:[#allocation2 + $0x10] sm:$0xff]
        %v2413 = vld [vmem:[#allocation2 + $0x18] sm:$0xff]
        %v2414 = vld [vmem:[#allocation2 + $0x20] sm:$0xff]
        %v2415 = vld [vmem:[#allocation2 + $0x28] sm:$0xff]
        %2421 = vrot.lane.b32.xlu0 %v2411, 65
        %v2422 = vpop.permute.xlu0 %2421
        %2423 = vrot.lane.b32.xlu0 %v2412, 65
        %v2424 = vpop.permute.xlu0 %2423
        %2425 = vrot.lane.b32.xlu0 %v2413, 65
        %v2426 = vpop.permute.xlu0 %2425
        %2427 = vrot.lane.b32.xlu0 %v2414, 65
        %v2428 = vpop.permute.xlu0 %2427
        %2429 = vrot.lane.b32.xlu0 %v2415, 65
        %v2430 = vpop.permute.xlu0 %2429
        %v2431 = vsel %vm493, %v2422, %v2424
        %v2432 = vsel %vm493, %v2424, %v2426
        %v2433 = vsel %vm493, %v2426, %v2428
        %v2434 = vsel %vm493, %v2428, %v2430
        %v2439 = vsel %vm1164, %v2431, 0.0
        %v2440 = vsel %vm1165, %v2432, 0.0
        %v2441 = vsel %vm1166, %v2433, 0.0
        %v2442 = vsel %vm1167, %v2434, 0.0
        %2443 = vst [vmem:[#allocation3 + $0x2a0] sm:$0xff] %v2439
        %2444 = vst [vmem:[#allocation3 + $0x2a8] sm:$0xff] %v2440
        %2445 = vst [vmem:[#allocation3 + $0x2b0] sm:$0xff] %v2441
        %2446 = vst [vmem:[#allocation3 + $0x2b8] sm:$0xff] %v2442
        %v2447 = vld [vmem:[#allocation2 + $0x8] sm:$0xff]
        %v2448 = vld [vmem:[#allocation2 + $0x10] sm:$0xff]
        %v2449 = vld [vmem:[#allocation2 + $0x18] sm:$0xff]
        %v2450 = vld [vmem:[#allocation2 + $0x20] sm:$0xff]
        %v2451 = vld [vmem:[#allocation2 + $0x28] sm:$0xff]
        %2457 = vrot.lane.b32.xlu0 %v2447, 64
        %v2458 = vpop.permute.xlu0 %2457
        %2459 = vrot.lane.b32.xlu0 %v2448, 64
        %v2460 = vpop.permute.xlu0 %2459
        %2461 = vrot.lane.b32.xlu0 %v2449, 64
        %v2462 = vpop.permute.xlu0 %2461
        %2463 = vrot.lane.b32.xlu0 %v2450, 64
        %v2464 = vpop.permute.xlu0 %2463
        %2465 = vrot.lane.b32.xlu0 %v2451, 64
        %v2466 = vpop.permute.xlu0 %2465
        %v2467 = vsel %vm530, %v2458, %v2460
        %v2468 = vsel %vm530, %v2460, %v2462
        %v2469 = vsel %vm530, %v2462, %v2464
        %v2470 = vsel %vm530, %v2464, %v2466
        %v2475 = vsel %vm1040, %v2467, 0.0
        %v2476 = vsel %vm1041, %v2468, 0.0
        %v2477 = vsel %vm1042, %v2469, 0.0
        %v2478 = vsel %vm1043, %v2470, 0.0
        %2479 = vst [vmem:[#allocation3 + $0x2c0] sm:$0xff] %v2475
        %2480 = vst [vmem:[#allocation3 + $0x2c8] sm:$0xff] %v2476
        %2481 = vst [vmem:[#allocation3 + $0x2d0] sm:$0xff] %v2477
        %2482 = vst [vmem:[#allocation3 + $0x2d8] sm:$0xff] %v2478
        %v2483 = vld [vmem:[#allocation2 + $0x8] sm:$0xff]
        %v2484 = vld [vmem:[#allocation2 + $0x10] sm:$0xff]
        %v2485 = vld [vmem:[#allocation2 + $0x18] sm:$0xff]
        %v2486 = vld [vmem:[#allocation2 + $0x20] sm:$0xff]
        %v2487 = vld [vmem:[#allocation2 + $0x28] sm:$0xff]
        %2493 = vrot.lane.b32.xlu0 %v2483, 63
        %v2494 = vpop.permute.xlu0 %2493
        %2495 = vrot.lane.b32.xlu0 %v2484, 63
        %v2496 = vpop.permute.xlu0 %2495
        %2497 = vrot.lane.b32.xlu0 %v2485, 63
        %v2498 = vpop.permute.xlu0 %2497
        %2499 = vrot.lane.b32.xlu0 %v2486, 63
        %v2500 = vpop.permute.xlu0 %2499
        %2501 = vrot.lane.b32.xlu0 %v2487, 63
        %v2502 = vpop.permute.xlu0 %2501
        %v2503 = vsel %vm571, %v2494, %v2496
        %v2504 = vsel %vm571, %v2496, %v2498
        %v2505 = vsel %vm571, %v2498, %v2500
        %v2506 = vsel %vm571, %v2500, %v2502
        %v2511 = vsel %vm1240, %v2503, 0.0
        %v2512 = vsel %vm1241, %v2504, 0.0
        %v2513 = vsel %vm1242, %v2505, 0.0
        %v2514 = vsel %vm1243, %v2506, 0.0
        %2515 = vst [vmem:[#allocation3 + $0x2e0] sm:$0xff] %v2511
        %2516 = vst [vmem:[#allocation3 + $0x2e8] sm:$0xff] %v2512
        %2517 = vst [vmem:[#allocation3 + $0x2f0] sm:$0xff] %v2513
        %2518 = vst [vmem:[#allocation3 + $0x2f8] sm:$0xff] %v2514
        %v2519 = vld [vmem:[#allocation2 + $0x8] sm:$0xff]
        %v2520 = vld [vmem:[#allocation2 + $0x10] sm:$0xff]
        %v2521 = vld [vmem:[#allocation2 + $0x18] sm:$0xff]
        %v2522 = vld [vmem:[#allocation2 + $0x20] sm:$0xff]
        %v2523 = vld [vmem:[#allocation2 + $0x28] sm:$0xff]
        %2529 = vrot.lane.b32.xlu0 %v2519, 57
        %v2530 = vpop.permute.xlu0 %2529
        %2531 = vrot.lane.b32.xlu0 %v2520, 57
        %v2532 = vpop.permute.xlu0 %2531
        %2533 = vrot.lane.b32.xlu0 %v2521, 57
        %v2534 = vpop.permute.xlu0 %2533
        %2535 = vrot.lane.b32.xlu0 %v2522, 57
        %v2536 = vpop.permute.xlu0 %2535
        %2537 = vrot.lane.b32.xlu0 %v2523, 57
        %v2538 = vpop.permute.xlu0 %2537
        %v2539 = vsel %vm620, %v2530, %v2532
        %v2540 = vsel %vm620, %v2532, %v2534
        %v2541 = vsel %vm620, %v2534, %v2536
        %v2542 = vsel %vm620, %v2536, %v2538
        %v2547 = vsel %vm1284, %v2539, 0.0
        %v2548 = vsel %vm1285, %v2540, 0.0
        %v2549 = vsel %vm1286, %v2541, 0.0
        %v2550 = vsel %vm1287, %v2542, 0.0
        %2551 = vst [vmem:[#allocation3 + $0x300] sm:$0xff] %v2547
        %2552 = vst [vmem:[#allocation3 + $0x308] sm:$0xff] %v2548
        %2553 = vst [vmem:[#allocation3 + $0x310] sm:$0xff] %v2549
        %2554 = vst [vmem:[#allocation3 + $0x318] sm:$0xff] %v2550
        %v2555 = vld [vmem:[#allocation2 + $0x8] sm:$0xff]
        %v2556 = vld [vmem:[#allocation2 + $0x10] sm:$0xff]
        %v2557 = vld [vmem:[#allocation2 + $0x18] sm:$0xff]
        %v2558 = vld [vmem:[#allocation2 + $0x20] sm:$0xff]
        %v2559 = vld [vmem:[#allocation2 + $0x28] sm:$0xff]
        %2565 = vrot.lane.b32.xlu0 %v2555, 56
        %v2566 = vpop.permute.xlu0 %2565
        %2567 = vrot.lane.b32.xlu0 %v2556, 56
        %v2568 = vpop.permute.xlu0 %2567
        %2569 = vrot.lane.b32.xlu0 %v2557, 56
        %v2570 = vpop.permute.xlu0 %2569
        %2571 = vrot.lane.b32.xlu0 %v2558, 56
        %v2572 = vpop.permute.xlu0 %2571
        %2573 = vrot.lane.b32.xlu0 %v2559, 56
        %v2574 = vpop.permute.xlu0 %2573
        %v2575 = vsel %vm657, %v2566, %v2568
        %v2576 = vsel %vm657, %v2568, %v2570
        %v2577 = vsel %vm657, %v2570, %v2572
        %v2578 = vsel %vm657, %v2572, %v2574
        %v2583 = vsel %vm1280, %v2575, 0.0
        %v2584 = vsel %vm1281, %v2576, 0.0
        %v2585 = vsel %vm1282, %v2577, 0.0
        %v2586 = vsel %vm1283, %v2578, 0.0
        %2587 = vst [vmem:[#allocation3 + $0x320] sm:$0xff] %v2583
        %2588 = vst [vmem:[#allocation3 + $0x328] sm:$0xff] %v2584
        %2589 = vst [vmem:[#allocation3 + $0x330] sm:$0xff] %v2585
        %2590 = vst [vmem:[#allocation3 + $0x338] sm:$0xff] %v2586
        %v2591 = vld [vmem:[#allocation2 + $0x8] sm:$0xff]
        %v2592 = vld [vmem:[#allocation2 + $0x10] sm:$0xff]
        %v2593 = vld [vmem:[#allocation2 + $0x18] sm:$0xff]
        %v2594 = vld [vmem:[#allocation2 + $0x20] sm:$0xff]
        %v2595 = vld [vmem:[#allocation2 + $0x28] sm:$0xff]
        %2601 = vrot.lane.b32.xlu0 %v2591, 55
        %v2602 = vpop.permute.xlu0 %2601
        %2603 = vrot.lane.b32.xlu0 %v2592, 55
        %v2604 = vpop.permute.xlu0 %2603
        %2605 = vrot.lane.b32.xlu0 %v2593, 55
        %v2606 = vpop.permute.xlu0 %2605
        %2607 = vrot.lane.b32.xlu0 %v2594, 55
        %v2608 = vpop.permute.xlu0 %2607
        %2609 = vrot.lane.b32.xlu0 %v2595, 55
        %v2610 = vpop.permute.xlu0 %2609
        %v2611 = vsel %vm698, %v2602, %v2604
        %v2612 = vsel %vm698, %v2604, %v2606
        %v2613 = vsel %vm698, %v2606, %v2608
        %v2614 = vsel %vm698, %v2608, %v2610
        %v2619 = vsel %vm1360, %v2611, 0.0
        %v2620 = vsel %vm1361, %v2612, 0.0
        %v2621 = vsel %vm1362, %v2613, 0.0
        %v2622 = vsel %vm1363, %v2614, 0.0
        %2623 = vst [vmem:[#allocation3 + $0x340] sm:$0xff] %v2619
        %2624 = vst [vmem:[#allocation3 + $0x348] sm:$0xff] %v2620
        %2625 = vst [vmem:[#allocation3 + $0x350] sm:$0xff] %v2621
        %2626 = vst [vmem:[#allocation3 + $0x358] sm:$0xff] %v2622
        %v2627 = vld [vmem:[#allocation7] sm:$0xff]
        %v2628 = vld [vmem:[#allocation7 + $0x8] sm:$0xff]
        %v2629 = vld [vmem:[#allocation3] sm:$0xff]
        %v2630 = vld [vmem:[#allocation3 + $0x8] sm:$0xff]
        %v2631 = vld [vmem:[#allocation3 + $0x10] sm:$0xff]
        %v2632 = vld [vmem:[#allocation3 + $0x18] sm:$0xff]
        %v2633 = vld [vmem:[#allocation3 + $0x20] sm:$0xff]
        %v2634 = vld [vmem:[#allocation3 + $0x28] sm:$0xff]
        %v2635 = vld [vmem:[#allocation3 + $0x30] sm:$0xff]
        %v2636 = vld [vmem:[#allocation3 + $0x38] sm:$0xff]
        %v2637 = vld [vmem:[#allocation3 + $0x40] sm:$0xff]
        %v2638 = vld [vmem:[#allocation3 + $0x48] sm:$0xff]
        %v2639 = vld [vmem:[#allocation3 + $0x50] sm:$0xff]
        %v2640 = vld [vmem:[#allocation3 + $0x58] sm:$0xff]
        %v2641 = vld [vmem:[#allocation3 + $0x60] sm:$0xff]
        %v2642 = vld [vmem:[#allocation3 + $0x68] sm:$0xff]
        %v2643 = vld [vmem:[#allocation3 + $0x70] sm:$0xff]
        %v2644 = vld [vmem:[#allocation3 + $0x78] sm:$0xff]
        %v2645 = vld [vmem:[#allocation3 + $0x80] sm:$0xff]
        %v2646 = vld [vmem:[#allocation3 + $0x88] sm:$0xff]
        %v2647 = vld [vmem:[#allocation3 + $0x90] sm:$0xff]
        %v2648 = vld [vmem:[#allocation3 + $0x98] sm:$0xff]
        %v2649 = vld [vmem:[#allocation3 + $0xa0] sm:$0xff]
        %v2650 = vld [vmem:[#allocation3 + $0xa8] sm:$0xff]
        %v2651 = vld [vmem:[#allocation3 + $0xb0] sm:$0xff]
        %v2652 = vld [vmem:[#allocation3 + $0xb8] sm:$0xff]
        %v2653 = vld [vmem:[#allocation3 + $0xc0] sm:$0xff]
        %v2654 = vld [vmem:[#allocation3 + $0xc8] sm:$0xff]
        %v2655 = vld [vmem:[#allocation3 + $0xd0] sm:$0xff]
        %v2656 = vld [vmem:[#allocation3 + $0xd8] sm:$0xff]
        %v2657 = vld [vmem:[#allocation3 + $0xe0] sm:$0xff]
        %v2658 = vld [vmem:[#allocation3 + $0xe8] sm:$0xff]
        %v2659 = vld [vmem:[#allocation3 + $0xf0] sm:$0xff]
        %v2660 = vld [vmem:[#allocation3 + $0xf8] sm:$0xff]
        %v2661 = vld [vmem:[#allocation3 + $0x100] sm:$0xff]
        %v2662 = vld [vmem:[#allocation3 + $0x108] sm:$0xff]
        %v2663 = vld [vmem:[#allocation3 + $0x110] sm:$0xff]
        %v2664 = vld [vmem:[#allocation3 + $0x118] sm:$0xff]
        %v2665 = vld [vmem:[#allocation3 + $0x120] sm:$0xff]
        %v2666 = vld [vmem:[#allocation3 + $0x128] sm:$0xff]
        %v2667 = vld [vmem:[#allocation3 + $0x130] sm:$0xff]
        %v2668 = vld [vmem:[#allocation3 + $0x138] sm:$0xff]
        %v2669 = vld [vmem:[#allocation3 + $0x140] sm:$0xff]
        %v2670 = vld [vmem:[#allocation3 + $0x148] sm:$0xff]
        %v2671 = vld [vmem:[#allocation3 + $0x150] sm:$0xff]
        %v2672 = vld [vmem:[#allocation3 + $0x158] sm:$0xff]
        %v2673 = vld [vmem:[#allocation3 + $0x160] sm:$0xff]
        %v2674 = vld [vmem:[#allocation3 + $0x168] sm:$0xff]
        %v2675 = vld [vmem:[#allocation3 + $0x170] sm:$0xff]
        %v2676 = vld [vmem:[#allocation3 + $0x178] sm:$0xff]
        %v2677 = vld [vmem:[#allocation3 + $0x180] sm:$0xff]
        %v2678 = vld [vmem:[#allocation3 + $0x188] sm:$0xff]
        %v2679 = vld [vmem:[#allocation3 + $0x190] sm:$0xff]
        %v2680 = vld [vmem:[#allocation3 + $0x198] sm:$0xff]
        %v2681 = vld [vmem:[#allocation3 + $0x1a0] sm:$0xff]
        %v2682 = vld [vmem:[#allocation3 + $0x1a8] sm:$0xff]
        %v2683 = vld [vmem:[#allocation3 + $0x1b0] sm:$0xff]
        %v2684 = vld [vmem:[#allocation3 + $0x1b8] sm:$0xff]
        %v2685 = vld [vmem:[#allocation3 + $0x1c0] sm:$0xff]
        %v2686 = vld [vmem:[#allocation3 + $0x1c8] sm:$0xff]
        %v2687 = vld [vmem:[#allocation3 + $0x1d0] sm:$0xff]
        %v2688 = vld [vmem:[#allocation3 + $0x1d8] sm:$0xff]
        %v2689 = vld [vmem:[#allocation3 + $0x1e0] sm:$0xff]
        %v2690 = vld [vmem:[#allocation3 + $0x1e8] sm:$0xff]
        %v2691 = vld [vmem:[#allocation3 + $0x1f0] sm:$0xff]
        %v2692 = vld [vmem:[#allocation3 + $0x1f8] sm:$0xff]
        %v2693 = vld [vmem:[#allocation3 + $0x200] sm:$0xff]
        %v2694 = vld [vmem:[#allocation3 + $0x208] sm:$0xff]
        %v2695 = vld [vmem:[#allocation3 + $0x210] sm:$0xff]
        %v2696 = vld [vmem:[#allocation3 + $0x218] sm:$0xff]
        %v2697 = vld [vmem:[#allocation3 + $0x220] sm:$0xff]
        %v2698 = vld [vmem:[#allocation3 + $0x228] sm:$0xff]
        %v2699 = vld [vmem:[#allocation3 + $0x230] sm:$0xff]
        %v2700 = vld [vmem:[#allocation3 + $0x238] sm:$0xff]
        %v2701 = vld [vmem:[#allocation3 + $0x240] sm:$0xff]
        %v2702 = vld [vmem:[#allocation3 + $0x248] sm:$0xff]
        %v2703 = vld [vmem:[#allocation3 + $0x250] sm:$0xff]
        %v2704 = vld [vmem:[#allocation3 + $0x258] sm:$0xff]
        %v2705 = vld [vmem:[#allocation3 + $0x260] sm:$0xff]
        %v2706 = vld [vmem:[#allocation3 + $0x268] sm:$0xff]
        %v2707 = vld [vmem:[#allocation3 + $0x270] sm:$0xff]
        %v2708 = vld [vmem:[#allocation3 + $0x278] sm:$0xff]
        %v2709 = vld [vmem:[#allocation3 + $0x280] sm:$0xff]
        %v2710 = vld [vmem:[#allocation3 + $0x288] sm:$0xff]
        %v2711 = vld [vmem:[#allocation3 + $0x290] sm:$0xff]
        %v2712 = vld [vmem:[#allocation3 + $0x298] sm:$0xff]
        %v2713 = vld [vmem:[#allocation3 + $0x2a0] sm:$0xff]
        %v2714 = vld [vmem:[#allocation3 + $0x2a8] sm:$0xff]
        %v2715 = vld [vmem:[#allocation3 + $0x2b0] sm:$0xff]
        %v2716 = vld [vmem:[#allocation3 + $0x2b8] sm:$0xff]
        %v2717 = vld [vmem:[#allocation3 + $0x2c0] sm:$0xff]
        %v2718 = vld [vmem:[#allocation3 + $0x2c8] sm:$0xff]
        %v2719 = vld [vmem:[#allocation3 + $0x2d0] sm:$0xff]
        %v2720 = vld [vmem:[#allocation3 + $0x2d8] sm:$0xff]
        %v2721 = vld [vmem:[#allocation3 + $0x2e0] sm:$0xff]
        %v2722 = vld [vmem:[#allocation3 + $0x2e8] sm:$0xff]
        %v2723 = vld [vmem:[#allocation3 + $0x2f0] sm:$0xff]
        %v2724 = vld [vmem:[#allocation3 + $0x2f8] sm:$0xff]
        %v2725 = vld [vmem:[#allocation3 + $0x300] sm:$0xff]
        %v2726 = vld [vmem:[#allocation3 + $0x308] sm:$0xff]
        %v2727 = vld [vmem:[#allocation3 + $0x310] sm:$0xff]
        %v2728 = vld [vmem:[#allocation3 + $0x318] sm:$0xff]
        %v2729 = vld [vmem:[#allocation3 + $0x320] sm:$0xff]
        %v2730 = vld [vmem:[#allocation3 + $0x328] sm:$0xff]
        %v2731 = vld [vmem:[#allocation3 + $0x330] sm:$0xff]
        %v2732 = vld [vmem:[#allocation3 + $0x338] sm:$0xff]
        %v2733 = vld [vmem:[#allocation3 + $0x340] sm:$0xff]
        %v2734 = vld [vmem:[#allocation3 + $0x348] sm:$0xff]
        %v2735 = vld [vmem:[#allocation3 + $0x350] sm:$0xff]
        %v2736 = vld [vmem:[#allocation3 + $0x358] sm:$0xff]
        %v2737 = vld [vmem:[#allocation9] sm:$0xff]
        %v2739 = vsel %vm776, %v2737, 0
        %2741 = vmatpush.msra.mxu0 0.0
        %2742 = vmatpush.msra.mxu0 0.0
        %2743 = vmatpush.msra.mxu0 0.0
        %2744 = vmatpush.msra.mxu0 0.0
        %2745 = vmatpush.msra.mxu0 0.0
        %2746 = vmatpush.msra.mxu0 0.0
        %2747 = vmatpush.msra.mxu0 0.0
        %2748 = vmatpush.msra.mxu0 0.0
        %2749 = vmatpush.msra.mxu0 0.0
        %2750 = vmatpush.msra.mxu0 0.0
        %2751 = vmatpush.msra.mxu0 0.0
        %2752 = vmatpush.msra.mxu0 0.0
        %2753 = vmatpush.msra.mxu0 0.0
        %2754 = vmatpush.msra.mxu0 0.0
        %2755 = vmatpush.msra.mxu0 0.0
        %2756 = vmatpush.msra.mxu0 %v322
        %2757 = vmatmul.f32.gmra.mxu0 %v2739
        %v2758 = vpop.f32.mrf.mxu0
        %v2759 = vadd.f32 0.0, %v2758
        %2760 = vdwg.mxu0
        %2761 = vmatpush.msra.mxu0 0.0
        %2762 = vmatpush.msra.mxu0 0.0
        %2763 = vmatpush.msra.mxu0 0.0
        %2764 = vmatpush.msra.mxu0 0.0
        %2765 = vmatpush.msra.mxu0 0.0
        %2766 = vmatpush.msra.mxu0 0.0
        %2767 = vmatpush.msra.mxu0 0.0
        %2768 = vmatpush.msra.mxu0 0.0
        %2769 = vmatpush.msra.mxu0 0.0
        %2770 = vmatpush.msra.mxu0 0.0
        %2771 = vmatpush.msra.mxu0 0.0
        %2772 = vmatpush.msra.mxu0 0.0
        %2773 = vmatpush.msra.mxu0 0.0
        %2774 = vmatpush.msra.mxu0 0.0
        %2775 = vmatpush.msra.mxu0 0.0
        %2776 = vmatpush.msra.mxu0 %v323
        %2777 = vmatmul.f32.gmra.mxu0 %v2739
        %v2778 = vpop.f32.mrf.mxu0
        %v2779 = vadd.f32 0.0, %v2778
        %2780 = vdwg.mxu0
        %2781 = vmatpush.msra.mxu0 0.0
        %2782 = vmatpush.msra.mxu0 0.0
        %2783 = vmatpush.msra.mxu0 0.0
        %2784 = vmatpush.msra.mxu0 0.0
        %2785 = vmatpush.msra.mxu0 0.0
        %2786 = vmatpush.msra.mxu0 0.0
        %2787 = vmatpush.msra.mxu0 0.0
        %2788 = vmatpush.msra.mxu0 0.0
        %2789 = vmatpush.msra.mxu0 0.0
        %2790 = vmatpush.msra.mxu0 0.0
        %2791 = vmatpush.msra.mxu0 0.0
        %2792 = vmatpush.msra.mxu0 0.0
        %2793 = vmatpush.msra.mxu0 0.0
        %2794 = vmatpush.msra.mxu0 0.0
        %2795 = vmatpush.msra.mxu0 0.0
        %2796 = vmatpush.msra.mxu0 %v324
        %2797 = vmatmul.f32.gmra.mxu0 %v2739
        %v2798 = vpop.f32.mrf.mxu0
        %v2799 = vadd.f32 0.0, %v2798
        %2800 = vdwg.mxu0
        %2801 = vmatpush.msra.mxu0 0.0
        %2802 = vmatpush.msra.mxu0 0.0
        %2803 = vmatpush.msra.mxu0 0.0
        %2804 = vmatpush.msra.mxu0 0.0
        %2805 = vmatpush.msra.mxu0 0.0
        %2806 = vmatpush.msra.mxu0 0.0
        %2807 = vmatpush.msra.mxu0 0.0
        %2808 = vmatpush.msra.mxu0 0.0
        %2809 = vmatpush.msra.mxu0 0.0
        %2810 = vmatpush.msra.mxu0 0.0
        %2811 = vmatpush.msra.mxu0 0.0
        %2812 = vmatpush.msra.mxu0 0.0
        %2813 = vmatpush.msra.mxu0 0.0
        %2814 = vmatpush.msra.mxu0 0.0
        %2815 = vmatpush.msra.mxu0 0.0
        %2816 = vmatpush.msra.mxu0 %v325
        %2817 = vmatmul.f32.gmra.mxu0 %v2739
        %v2818 = vpop.f32.mrf.mxu0
        %v2819 = vadd.f32 0.0, %v2818
        %2820 = vdwg.mxu0
        %v2822 = vsel %vm1511, %v2628, 0
        %2824 = vmatpush.msra.mxu0 %v2689
        %2825 = vmatpush.msra.mxu0 %v2685
        %2826 = vmatpush.msra.mxu0 %v2681
        %2827 = vmatpush.msra.mxu0 %v2677
        %2828 = vmatpush.msra.mxu0 %v2673
        %2829 = vmatpush.msra.mxu0 %v2669
        %2830 = vmatpush.msra.mxu0 %v2665
        %2831 = vmatpush.msra.mxu0 %v2661
        %2832 = vmatpush.msra.mxu0 %v2657
        %2833 = vmatpush.msra.mxu0 %v2653
        %2834 = vmatpush.msra.mxu0 %v2649
        %2835 = vmatpush.msra.mxu0 %v2645
        %2836 = vmatpush.msra.mxu0 %v2641
        %2837 = vmatpush.msra.mxu0 %v2637
        %2838 = vmatpush.msra.mxu0 %v2633
        %2839 = vmatpush.msra.mxu0 %v2629
        %2840 = vmatmul.f32.gmra.mxu0 %v2627
        %v2841 = vpop.f32.mrf.mxu0
        %v2842 = vadd.f32 %v2759, %v2841
        %2843 = vdwg.mxu0
        %2844 = vmatpush.msra.mxu0 0.0
        %2845 = vmatpush.msra.mxu0 0.0
        %2846 = vmatpush.msra.mxu0 0.0
        %2847 = vmatpush.msra.mxu0 0.0
        %2848 = vmatpush.msra.mxu0 0.0
        %2849 = vmatpush.msra.mxu0 %v2733
        %2850 = vmatpush.msra.mxu0 %v2729
        %2851 = vmatpush.msra.mxu0 %v2725
        %2852 = vmatpush.msra.mxu0 %v2721
        %2853 = vmatpush.msra.mxu0 %v2717
        %2854 = vmatpush.msra.mxu0 %v2713
        %2855 = vmatpush.msra.mxu0 %v2709
        %2856 = vmatpush.msra.mxu0 %v2705
        %2857 = vmatpush.msra.mxu0 %v2701
        %2858 = vmatpush.msra.mxu0 %v2697
        %2859 = vmatpush.msra.mxu0 %v2693
        %2860 = vmatmul.f32.gmra.mxu0 %v2822
        %v2861 = vpop.f32.mrf.mxu0
        %v2862 = vadd.f32 %v2842, %v2861
        %2863 = vdwg.mxu0
        %2864 = vmatpush.msra.mxu0 %v2690
        %2865 = vmatpush.msra.mxu0 %v2686
        %2866 = vmatpush.msra.mxu0 %v2682
        %2867 = vmatpush.msra.mxu0 %v2678
        %2868 = vmatpush.msra.mxu0 %v2674
        %2869 = vmatpush.msra.mxu0 %v2670
        %2870 = vmatpush.msra.mxu0 %v2666
        %2871 = vmatpush.msra.mxu0 %v2662
        %2872 = vmatpush.msra.mxu0 %v2658
        %2873 = vmatpush.msra.mxu0 %v2654
        %2874 = vmatpush.msra.mxu0 %v2650
        %2875 = vmatpush.msra.mxu0 %v2646
        %2876 = vmatpush.msra.mxu0 %v2642
        %2877 = vmatpush.msra.mxu0 %v2638
        %2878 = vmatpush.msra.mxu0 %v2634
        %2879 = vmatpush.msra.mxu0 %v2630
        %2880 = vmatmul.f32.gmra.mxu0 %v2627
        %v2881 = vpop.f32.mrf.mxu0
        %v2882 = vadd.f32 %v2779, %v2881
        %2883 = vdwg.mxu0
        %2884 = vmatpush.msra.mxu0 0.0
        %2885 = vmatpush.msra.mxu0 0.0
        %2886 = vmatpush.msra.mxu0 0.0
        %2887 = vmatpush.msra.mxu0 0.0
        %2888 = vmatpush.msra.mxu0 0.0
        %2889 = vmatpush.msra.mxu0 %v2734
        %2890 = vmatpush.msra.mxu0 %v2730
        %2891 = vmatpush.msra.mxu0 %v2726
        %2892 = vmatpush.msra.mxu0 %v2722
        %2893 = vmatpush.msra.mxu0 %v2718
        %2894 = vmatpush.msra.mxu0 %v2714
        %2895 = vmatpush.msra.mxu0 %v2710
        %2896 = vmatpush.msra.mxu0 %v2706
        %2897 = vmatpush.msra.mxu0 %v2702
        %2898 = vmatpush.msra.mxu0 %v2698
        %2899 = vmatpush.msra.mxu0 %v2694
        %2900 = vmatmul.f32.gmra.mxu0 %v2822
        %v2901 = vpop.f32.mrf.mxu0
        %v2902 = vadd.f32 %v2882, %v2901
        %2903 = vdwg.mxu0
        %2904 = vmatpush.msra.mxu0 %v2691
        %2905 = vmatpush.msra.mxu0 %v2687
        %2906 = vmatpush.msra.mxu0 %v2683
        %2907 = vmatpush.msra.mxu0 %v2679
        %2908 = vmatpush.msra.mxu0 %v2675
        %2909 = vmatpush.msra.mxu0 %v2671
        %2910 = vmatpush.msra.mxu0 %v2667
        %2911 = vmatpush.msra.mxu0 %v2663
        %2912 = vmatpush.msra.mxu0 %v2659
        %2913 = vmatpush.msra.mxu0 %v2655
        %2914 = vmatpush.msra.mxu0 %v2651
        %2915 = vmatpush.msra.mxu0 %v2647
        %2916 = vmatpush.msra.mxu0 %v2643
        %2917 = vmatpush.msra.mxu0 %v2639
        %2918 = vmatpush.msra.mxu0 %v2635
        %2919 = vmatpush.msra.mxu0 %v2631
        %2920 = vmatmul.f32.gmra.mxu0 %v2627
        %v2921 = vpop.f32.mrf.mxu0
        %v2922 = vadd.f32 %v2799, %v2921
        %2923 = vdwg.mxu0
        %2924 = vmatpush.msra.mxu0 0.0
        %2925 = vmatpush.msra.mxu0 0.0
        %2926 = vmatpush.msra.mxu0 0.0
        %2927 = vmatpush.msra.mxu0 0.0
        %2928 = vmatpush.msra.mxu0 0.0
        %2929 = vmatpush.msra.mxu0 %v2735
        %2930 = vmatpush.msra.mxu0 %v2731
        %2931 = vmatpush.msra.mxu0 %v2727
        %2932 = vmatpush.msra.mxu0 %v2723
        %2933 = vmatpush.msra.mxu0 %v2719
        %2934 = vmatpush.msra.mxu0 %v2715
        %2935 = vmatpush.msra.mxu0 %v2711
        %2936 = vmatpush.msra.mxu0 %v2707
        %2937 = vmatpush.msra.mxu0 %v2703
        %2938 = vmatpush.msra.mxu0 %v2699
        %2939 = vmatpush.msra.mxu0 %v2695
        %2940 = vmatmul.f32.gmra.mxu0 %v2822
        %v2941 = vpop.f32.mrf.mxu0
        %v2942 = vadd.f32 %v2922, %v2941
        %2943 = vdwg.mxu0
        %2944 = vmatpush.msra.mxu0 %v2692
        %2945 = vmatpush.msra.mxu0 %v2688
        %2946 = vmatpush.msra.mxu0 %v2684
        %2947 = vmatpush.msra.mxu0 %v2680
        %2948 = vmatpush.msra.mxu0 %v2676
        %2949 = vmatpush.msra.mxu0 %v2672
        %2950 = vmatpush.msra.mxu0 %v2668
        %2951 = vmatpush.msra.mxu0 %v2664
        %2952 = vmatpush.msra.mxu0 %v2660
        %2953 = vmatpush.msra.mxu0 %v2656
        %2954 = vmatpush.msra.mxu0 %v2652
        %2955 = vmatpush.msra.mxu0 %v2648
        %2956 = vmatpush.msra.mxu0 %v2644
        %2957 = vmatpush.msra.mxu0 %v2640
        %2958 = vmatpush.msra.mxu0 %v2636
        %2959 = vmatpush.msra.mxu0 %v2632
        %2960 = vmatmul.f32.gmra.mxu0 %v2627
        %v2961 = vpop.f32.mrf.mxu0
        %v2962 = vadd.f32 %v2819, %v2961
        %2963 = vdwg.mxu0
        %2964 = vmatpush.msra.mxu0 0.0
        %2965 = vmatpush.msra.mxu0 0.0
        %2966 = vmatpush.msra.mxu0 0.0
        %2967 = vmatpush.msra.mxu0 0.0
        %2968 = vmatpush.msra.mxu0 0.0
        %2969 = vmatpush.msra.mxu0 %v2736
        %2970 = vmatpush.msra.mxu0 %v2732
        %2971 = vmatpush.msra.mxu0 %v2728
        %2972 = vmatpush.msra.mxu0 %v2724
        %2973 = vmatpush.msra.mxu0 %v2720
        %2974 = vmatpush.msra.mxu0 %v2716
        %2975 = vmatpush.msra.mxu0 %v2712
        %2976 = vmatpush.msra.mxu0 %v2708
        %2977 = vmatpush.msra.mxu0 %v2704
        %2978 = vmatpush.msra.mxu0 %v2700
        %2979 = vmatpush.msra.mxu0 %v2696
        %2980 = vmatmul.f32.gmra.mxu0 %v2822
        %v2981 = vpop.f32.mrf.mxu0
        %v2982 = vadd.f32 %v2962, %v2981
        %2983 = vdwg.mxu0
        %v2984 = vld [vmem:[%s5] sm:$0xff]
        %2986 = vset.pattern.permute.xlu0 0
        %2987 = vperm.xlu0 %2986, %v2984
        %v2988 = vpop.permute.xlu0 %2987
        %v2990 = vadd.f32 %v2862, %v2988
        %v2991 = vadd.f32 %v2902, %v2988
        %v2992 = vadd.f32 %v2942, %v2988
        %v2993 = vadd.f32 %v2982, %v2988
        %v2994 = vmax.f32 %v2990, 0.0
        %v2995 = vmax.f32 %v2991, 0.0
        %v2996 = vmax.f32 %v2992, 0.0
        %v2997 = vmax.f32 %v2993, 0.0
        %2998 = vst [vmem:[%s298] sm:$0xff] %v2994
        %2999 = vst [vmem:[%s298 + $0x8] sm:$0xff] %v2995
        %3000 = vst [vmem:[%s298 + $0x10] sm:$0xff] %v2996
        %3001 = vst [vmem:[%s298 + $0x18] sm:$0xff] %v2997
        %s3002 = sand.u32 %s163, 1
        %s3003 = scalar_lea.sflag [#allocation6], %s3002
        %s3004 = sand.u32 %s163, 1
        %s3005 = smul.addr %s3004, 32
        %s3006 = scalar_lea.vmem [#allocation10], %s3005
        // Predicated region
        $region57: #{tpu_custom_call.1} parent=43 // pred_check
          %p3007 = pneg %p173
        $region58: #{tpu_custom_call.1} parent=43 // pred_check_branch
          %3009 = sbr.rel (%p3007) target = $region60
        $region59: #{tpu_custom_call.1} parent=43 // pred_region
          %3011 = vsyncadd %s3003, 0
          %s3012 = smul.addr %s24, 4
          %s3013 = smul.addr %s3012, 8
          %s3014 = scalar_lea.hbm %s6, %s3013
          %s3016 = sshll.u32 %s3006, 4
          %s3017 = int_to_ptr.vmem [resolvable:$true] %s3016
          %s3018 = sshll.u32 %s3014, 4
          %s3019 = int_to_ptr.hbm [resolvable:$true] %s3018
          %3021 = dma.vmem_to_hbm [thread:$0]  %s3017, 512, %s3019, %s3003
        $region60: #{tpu_custom_call.1} parent=43 // pred_fallthru
          _
      $region44: #{tpu_custom_call.1} parent=5 // pred_fallthru
        _
      %p3022 = scmp.le.s32.totalorder 2, %s19
      // Predicated region
      $region61: #{tpu_custom_call.1} parent=5 // pred_check
        %p3023 = pneg %p3022
      $region62: #{tpu_custom_call.1} parent=5 // pred_check_branch
        %3025 = sbr.rel (%p3023) target = $region64
      $region63: #{tpu_custom_call.1} parent=5 // pred_region
        %s3026 = ssub.s32 %s19, 2
        // Predicated region
        $region65: #{tpu_custom_call.1} parent=63 // pred_check
          %p3027 = pneg %p179
        $region66: #{tpu_custom_call.1} parent=63 // pred_check_branch
          %3029 = sbr.rel (%p3027) target = $region68
        $region67: #{tpu_custom_call.1} parent=63 // pred_region
          %s3030 = sand.u32 %s164, 1
          %s3031 = scalar_lea.sflag [#allocation6], %s3030
          %s3032 = sand.u32 %s164, 1
          %s3033 = smul.addr %s3032, 32
          %s3034 = scalar_lea.vmem [#allocation10], %s3033
          %3036 = dma.done %s3031, 512
        $region68: #{tpu_custom_call.1} parent=63 // pred_fallthru
          _
      $region64: #{tpu_custom_call.1} parent=5 // pred_fallthru
        _
    $region6: #{tpu_custom_call.1} parent=1 // loop_footer
      %s23 = sadd.s32 1, %s19
    $region7: #{tpu_custom_call.1} parent=1 // loop_footer_branch
      %18 = sbr.rel target = $region3
    $region8: #{tpu_custom_call.1} parent=1 // loop_exit
      _
    %3037 = vsyncpa [#allocation5], 1
    %s3038 = scalar_lea.sflag [#allocation5], 1
    %3039 = vsyncpa %s3038, 1
    %3040 = vsyncpa [#allocation8], 1
    %3041 = vsyncpa [#allocation6], 1
    %s3042 = scalar_lea.sflag [#allocation6], 1
    %3043 = vsyncpa %s3042, 1

</llo_original>
